<compile_context>
chip_gen: v7x
topology: tpu7x:2x2x1
jax: 0.10.0
libtpu: 0.0.40
codegen_flags: <defaults>
</compile_context>

<pallas_src>
import functools

import jax
import jax.numpy as jnp
from jax.experimental import pallas as pl
from jax.experimental.pallas import tpu as pltpu


_VMEM_LIMIT = 48 * 1024 * 1024  # fits v7x (64 MiB phys) with headroom; > default on v5e/v6e


def _pick_tile(n, pref=128):
    """Largest convenient tile: `pref` if it divides n, else the full extent."""
    return pref if n % pref == 0 else n


# ----------------------------------------------------------------------------
# Feature-transform kernels:  HW_cat = [H_pos @ W | H_neg @ W]
# ----------------------------------------------------------------------------

def _hw_first_kernel(x_ref, w_ref, out_ref):
    # x_ref: (N, F) one branch of the stacked inputs; w_ref: (F, Hp)
    out_ref[...] = jnp.dot(
        x_ref[...], w_ref[...], preferred_element_type=jnp.float32
    ).astype(out_ref.dtype)


def feature_transform_first(x_stacked, w0):
    """x_stacked: (2, N, F) [clean; corrupted].  Returns (N, 2*Hp) bf16."""
    _, n, f = x_stacked.shape
    hp = w0.shape[1]
    return pl.pallas_call(
        _hw_first_kernel,
        out_shape=jax.ShapeDtypeStruct((n, 2 * hp), jnp.bfloat16),
        grid_spec=pltpu.PrefetchScalarGridSpec(
            num_scalar_prefetch=0,
            grid=(2,),
            in_specs=[
                pl.BlockSpec((None, n, f), lambda b: (b, 0, 0)),
                pl.BlockSpec((f, hp), lambda b: (0, 0)),
            ],
            out_specs=pl.BlockSpec((n, hp), lambda b: (0, b)),
        ),
        compiler_params=pltpu.CompilerParams(
            dimension_semantics=("parallel",),
            vmem_limit_bytes=_VMEM_LIMIT,
        ),
    )(x_stacked, w0)


def _hw_second_kernel(h_ref, w_ref, out_ref):
    out_ref[...] = jnp.dot(
        h_ref[...], w_ref[...], preferred_element_type=jnp.float32
    ).astype(out_ref.dtype)


def feature_transform_second(h_cat, w1):
    """h_cat: (N, 2*Hp) f32 = [H_pos | H_neg].  Returns (N, 2*Hp) bf16."""
    n, _ = h_cat.shape
    hp = w1.shape[0]
    return pl.pallas_call(
        _hw_second_kernel,
        out_shape=jax.ShapeDtypeStruct((n, 2 * hp), jnp.bfloat16),
        grid_spec=pltpu.PrefetchScalarGridSpec(
            num_scalar_prefetch=0,
            grid=(2,),
            in_specs=[
                pl.BlockSpec((n, hp), lambda b: (0, b)),
                pl.BlockSpec((hp, hp), lambda b: (0, 0)),
            ],
            out_specs=pl.BlockSpec((n, hp), lambda b: (0, b)),
        ),
        compiler_params=pltpu.CompilerParams(
            dimension_semantics=("parallel",),
            vmem_limit_bytes=_VMEM_LIMIT,
        ),
    )(h_cat, w1)


# ----------------------------------------------------------------------------
# Tiled aggregation kernel:  out = act(A_hat @ HW_cat + b_cat)
# ----------------------------------------------------------------------------

def _agg_kernel(adj_ref, hw_ref, b_ref, out_ref, acc_ref, *, apply_relu):
    k = pl.program_id(1)

    @pl.when(k == 0)
    def _():
        acc_ref[...] = jnp.zeros_like(acc_ref)

    acc_ref[...] += jnp.dot(
        adj_ref[...], hw_ref[...], preferred_element_type=jnp.float32
    )

    @pl.when(k == pl.num_programs(1) - 1)
    def _():
        out = acc_ref[...] + b_ref[...]
        if apply_relu:
            out = jnp.maximum(out, 0.0)
        out_ref[...] = out


def gcn_aggregate(adj_bf16, hw_cat, b_cat, *, apply_relu, tm, tk):
    n = adj_bf16.shape[0]
    w = hw_cat.shape[1]
    return pl.pallas_call(
        functools.partial(_agg_kernel, apply_relu=apply_relu),
        out_shape=jax.ShapeDtypeStruct((n, w), jnp.float32),
        grid_spec=pltpu.PrefetchScalarGridSpec(
            num_scalar_prefetch=0,
            grid=(n // tm, n // tk),          # reduction axis last
            in_specs=[
                pl.BlockSpec((tm, tk), lambda i, k: (i, k)),   # adjacency tile
                pl.BlockSpec((tk, w), lambda i, k: (k, 0)),    # hoisted H@W slab
                pl.BlockSpec((1, w), lambda i, k: (0, 0)),     # bias
            ],
            out_specs=pl.BlockSpec((tm, w), lambda i, k: (i, 0)),
            scratch_shapes=[pltpu.VMEM((tm, w), jnp.float32)],
        ),
        compiler_params=pltpu.CompilerParams(
            dimension_semantics=("parallel", "arbitrary"),
            vmem_limit_bytes=_VMEM_LIMIT,
        ),
    )(adj_bf16, hw_cat, b_cat)


# ----------------------------------------------------------------------------
# Discriminator + BCEWithLogits loss (two-pass, row-tiled)
# ----------------------------------------------------------------------------

def _softplus(x):
    # numerically stable softplus = log(1 + exp(x))
    return jnp.maximum(x, 0.0) + jnp.log1p(jnp.exp(-jnp.abs(x)))


def _summary_v_kernel(pos_ref, wdt_ref, v_ref, colsum_ref, *, inv_n):
    """Pass 1: column sum of positive embeddings -> summary -> v = W_d @ summary."""
    i = pl.program_id(0)

    @pl.when(i == 0)
    def _():
        colsum_ref[...] = jnp.zeros_like(colsum_ref)

    colsum_ref[...] += jnp.sum(pos_ref[...], axis=0, keepdims=True)

    @pl.when(i == pl.num_programs(0) - 1)
    def _():
        summary = jax.nn.sigmoid(colsum_ref[...] * inv_n)        # (1, Hp)
        # v[j] = sum_k W_d[j, k] * summary[k]  ==  summary @ W_d^T
        v_ref[...] = jnp.dot(
            summary, wdt_ref[...], preferred_element_type=jnp.float32
        )


def discriminator_projection(h2_cat, wd_t, *, tm):
    n = h2_cat.shape[0]
    hp = wd_t.shape[0]
    return pl.pallas_call(
        functools.partial(_summary_v_kernel, inv_n=1.0 / n),
        out_shape=jax.ShapeDtypeStruct((1, hp), jnp.float32),
        grid_spec=pltpu.PrefetchScalarGridSpec(
            num_scalar_prefetch=0,
            grid=(n // tm,),
            in_specs=[
                pl.BlockSpec((tm, hp), lambda i: (i, 0)),   # positive half only
                pl.BlockSpec((hp, hp), lambda i: (0, 0)),
            ],
            out_specs=pl.BlockSpec((1, hp), lambda i: (0, 0)),
            scratch_shapes=[pltpu.VMEM((1, hp), jnp.float32)],
        ),
        compiler_params=pltpu.CompilerParams(
            dimension_semantics=("arbitrary",),
            vmem_limit_bytes=_VMEM_LIMIT,
        ),
    )(h2_cat, wd_t)


def _loss_kernel(h_ref, v_ref, out_ref, l1_ref, l2_ref, *, hp, inv_n):
    """Pass 2: scores via row reduce against v, accumulate both softplus sums."""
    i = pl.program_id(0)

    @pl.when(i == 0)
    def _():
        l1_ref[...] = jnp.zeros_like(l1_ref)
        l2_ref[...] = jnp.zeros_like(l2_ref)

    h = h_ref[...]                                   # (tm, 2*Hp) = [pos | neg]
    v = v_ref[...]                                   # (1, Hp)
    pos_score = jnp.sum(h[:, :hp] * v, axis=-1, keepdims=True)   # (tm, 1)
    neg_score = jnp.sum(h[:, hp:] * v, axis=-1, keepdims=True)   # (tm, 1)

    # BCEWithLogits(x, 1) = softplus(-x);  BCEWithLogits(x, 0) = softplus(x)
    l1_ref[...] += jnp.sum(_softplus(-pos_score), keepdims=True)
    l2_ref[...] += jnp.sum(_softplus(neg_score), keepdims=True)

    @pl.when(i == pl.num_programs(0) - 1)
    def _():
        out_ref[...] = (l1_ref[...] + l2_ref[...]) * inv_n


def dgi_loss(h2_cat, v, *, tm):
    n = h2_cat.shape[0]
    hp = v.shape[1]
    out = pl.pallas_call(
        functools.partial(_loss_kernel, hp=hp, inv_n=1.0 / n),
        out_shape=jax.ShapeDtypeStruct((1, 1), jnp.float32),
        grid_spec=pltpu.PrefetchScalarGridSpec(
            num_scalar_prefetch=0,
            grid=(n // tm,),
            in_specs=[
                pl.BlockSpec((tm, 2 * hp), lambda i: (i, 0)),
                pl.BlockSpec((1, hp), lambda i: (0, 0)),
            ],
            out_specs=pl.BlockSpec((1, 1), lambda i: (0, 0)),
            scratch_shapes=[
                pltpu.VMEM((1, 1), jnp.float32),
                pltpu.VMEM((1, 1), jnp.float32),
            ],
        ),
        compiler_params=pltpu.CompilerParams(
            dimension_semantics=("arbitrary",),
            vmem_limit_bytes=_VMEM_LIMIT,
        ),
    )(h2_cat, v)
    return out[0, 0]


# ----------------------------------------------------------------------------
# Model glue (parameter init, graph normalization, forward orchestration)
# ----------------------------------------------------------------------------

def init_params(key, in_feats, n_hidden, h_pad):
    """Weights padded to a lane-dense hidden width h_pad (multiple of 128).

    Padded rows/columns are zero, so the forward value is identical to the
    unpadded n_hidden-wide module.
    """
    assert h_pad >= n_hidden and h_pad % 128 == 0
    k0, k1, k2 = jax.random.split(key, 3)

    def glorot(k, fan_in, fan_out):
        bound = (6.0 / (fan_in + fan_out)) ** 0.5
        return jax.random.uniform(k, (fan_in, fan_out), jnp.float32, -bound, bound)

    w0 = jnp.zeros((in_feats, h_pad), jnp.float32)
    w0 = w0.at[:, :n_hidden].set(glorot(k0, in_feats, n_hidden))

    w1 = jnp.zeros((h_pad, h_pad), jnp.float32)
    w1 = w1.at[:n_hidden, :n_hidden].set(glorot(k1, n_hidden, n_hidden))

    bound = 1.0 / (n_hidden ** 0.5)
    wd = jnp.zeros((h_pad, h_pad), jnp.float32)
    wd = wd.at[:n_hidden, :n_hidden].set(
        jax.random.uniform(k2, (n_hidden, n_hidden), jnp.float32, -bound, bound))

    return {
        "w0": w0, "b0": jnp.zeros((1, h_pad), jnp.float32),
        "w1": w1, "b1": jnp.zeros((1, h_pad), jnp.float32),
        "w_disc": wd,
    }


def normalized_adjacency(n_nodes):
    """Deterministic small graph: ring + self loops, symmetric normalization."""
    a = jnp.eye(n_nodes, dtype=jnp.float32)
    idx = jnp.arange(n_nodes)
    nxt = (idx + 1) % n_nodes
    a = a.at[idx, nxt].set(1.0)
    a = a.at[nxt, idx].set(1.0)
    deg = jnp.sum(a, axis=1)
    d_inv_sqrt = 1.0 / jnp.sqrt(deg)
    return a * d_inv_sqrt[:, None] * d_inv_sqrt[None, :]


def dgi1_forward(features, adj_hat, params, perm):
    n = features.shape[0]
    tm = _pick_tile(n)
    tk = _pick_tile(n)

    # MXU inputs for the dominant A_hat @ HW stream go in bf16 (f32 accumulate);
    # all elementwise work (bias, relu, sigmoid, softplus) stays f32.
    adj_bf16 = adj_hat.astype(jnp.bfloat16)

    # Corruption = row permutation of the inputs (torch.randperm equivalent).
    # TODO(synk): could be folded into the first HW kernel via a scalar-prefetch
    # row gather; it is only N x F so it stays a plain XLA gather here.
    x_stacked = jnp.stack([features, features[perm]], axis=0)     # (2, N, F)

    b0_cat = jnp.concatenate([params["b0"], params["b0"]], axis=1)
    b1_cat = jnp.concatenate([params["b1"], params["b1"]], axis=1)

    # Layer 1: relu(A @ (X @ W0) + b0), positive & negative fused on columns.
    # TODO(synk): inter-layer dropout omitted (eval-mode / p=0 semantics).
    hw1 = feature_transform_first(x_stacked, params["w0"])        # (N, 2Hp) bf16
    h1 = gcn_aggregate(adj_bf16, hw1, b0_cat, apply_relu=True, tm=tm, tk=tk)

    # Layer 2: A @ (H1 @ W1) + b1 (no activation).
    hw2 = feature_transform_second(h1, params["w1"])              # (N, 2Hp) bf16
    h2 = gcn_aggregate(adj_bf16, hw2, b1_cat, apply_relu=False, tm=tm, tk=tk)

    # Discriminator + BCE losses.
    v = discriminator_projection(h2, jnp.transpose(params["w_disc"]), tm=tm)
    return dgi_loss(h2, v, tm=tm)


# ----------------------------------------------------------------------------
# Demo
# ----------------------------------------------------------------------------

if __name__ == "__main__":
    N_NODES = 256        # 2 row tiles x 2 reduction tiles of 128
    IN_FEATS = 16
    N_HIDDEN = 32        # logical hidden size of the module
    H_PAD = 128          # lane-dense padded hidden width

    root = jax.random.PRNGKey(0)
    k_feat, k_param, k_perm = jax.random.split(root, 3)

    features = jax.random.normal(k_feat, (N_NODES, IN_FEATS), jnp.float32)
    params = init_params(k_param, IN_FEATS, N_HIDDEN, H_PAD)
    adj_hat = normalized_adjacency(N_NODES)
    perm = jax.random.permutation(k_perm, N_NODES)   # torch.randperm equivalent

    loss = jax.jit(dgi1_forward)(features, adj_hat, params, perm)
    loss = jax.block_until_ready(loss)

    assert loss.shape == () and bool(jnp.isfinite(loss)), loss
    print("KERNEL_OK")
</pallas_src>

<mosaic_0001>
module attributes {stable_mosaic.version = 11 : i64} {
  func.func @_hw_first_kernel(%arg0: i32, %arg1: memref<1x256x16xf32, #tpu.memory_space<vmem>>, %arg2: memref<16x128xf32, #tpu.memory_space<vmem>>, %arg3: memref<256x128xbf16, #tpu.memory_space<vmem>>) attributes {dimension_semantics = [#tpu.dimension_semantics<parallel>], iteration_bounds = array<i64: 2>, scalar_prefetch = 0 : i64, scratch_operands = 0 : i64, tpu.core_type = #tpu.core_type<tc>, window_params = [{transform_indices = @transform_0, window_bounds = array<i64: 1, 256, 16>}, {pipeline_mode = #tpu.pipeline_mode<synchronous>, transform_indices = @transform_1, window_bounds = array<i64: 16, 128>}, {transform_indices = @transform_2, window_bounds = array<i64: 256, 128>}]} {
    %c0 = arith.constant 0 : index
    %c0_0 = arith.constant 0 : index
    %c0_1 = arith.constant 0 : index
    %0 = vector.load %arg1[%c0, %c0_0, %c0_1] : memref<1x256x16xf32, #tpu.memory_space<vmem>>, vector<1x256x16xf32>
    %1 = vector.shape_cast %0 : vector<1x256x16xf32> to vector<256x16xf32>
    %c0_2 = arith.constant 0 : index
    %c0_3 = arith.constant 0 : index
    %2 = vector.load %arg2[%c0_2, %c0_3] : memref<16x128xf32, #tpu.memory_space<vmem>>, vector<16x128xf32>
    %cst = arith.constant dense<0.000000e+00> : vector<256x128xf32>
    %3 = tpu.matmul %1, %2, %cst {dimension_numbers = #tpu.dot_dimension_numbers<[1], [0], [0], [1], [0, 0, 1, 1], [], []>} : vector<256x16xf32>, vector<16x128xf32>, vector<256x128xf32> -> vector<256x128xf32>
    %4 = arith.truncf %3 : vector<256x128xf32> to vector<256x128xbf16>
    %c0_4 = arith.constant 0 : index
    %c0_5 = arith.constant 0 : index
    %5 = vector.load %arg3[%c0_4, %c0_5] : memref<256x128xbf16, #tpu.memory_space<vmem>>, vector<256x128xbf16>
    tpu.vector_store %arg3[%c0_4, %c0_5], %4 {strides = array<i32>} : memref<256x128xbf16, #tpu.memory_space<vmem>>, vector<256x128xbf16>,
    return
  }
  func.func @transform_0(%arg0: i32) -> (i32, i32, i32) {
    %c0_i32 = arith.constant 0 : i32
    %c0_i32_0 = arith.constant 0 : i32
    %c0_i32_1 = arith.constant 0 : i32
    return %arg0, %c0_i32, %c0_i32_0 : i32, i32, i32
  }
  func.func @transform_1(%arg0: i32) -> (i32, i32) {
    %c0_i32 = arith.constant 0 : i32
    %c0_i32_0 = arith.constant 0 : i32
    %c0_i32_1 = arith.constant 0 : i32
    return %c0_i32, %c0_i32_0 : i32, i32
  }
  func.func @transform_2(%arg0: i32) -> (i32, i32) {
    %c0_i32 = arith.constant 0 : i32
    %c0_i32_0 = arith.constant 0 : i32
    return %c0_i32, %arg0 : i32, i32
  }
}

module attributes {stable_mosaic.version = 11 : i64} {
  func.func @_hw_second_kernel(%arg0: i32, %arg1: memref<256x128xf32, #tpu.memory_space<vmem>>, %arg2: memref<128x128xf32, #tpu.memory_space<vmem>>, %arg3: memref<256x128xbf16, #tpu.memory_space<vmem>>) attributes {dimension_semantics = [#tpu.dimension_semantics<parallel>], iteration_bounds = array<i64: 2>, scalar_prefetch = 0 : i64, scratch_operands = 0 : i64, tpu.core_type = #tpu.core_type<tc>, window_params = [{transform_indices = @transform_0, window_bounds = array<i64: 256, 128>}, {pipeline_mode = #tpu.pipeline_mode<synchronous>, transform_indices = @transform_1, window_bounds = array<i64: 128, 128>}, {transform_indices = @transform_2, window_bounds = array<i64: 256, 128>}]} {
    %c0 = arith.constant 0 : index
    %c0_0 = arith.constant 0 : index
    %0 = vector.load %arg1[%c0, %c0_0] : memref<256x128xf32, #tpu.memory_space<vmem>>, vector<256x128xf32>
    %c0_1 = arith.constant 0 : index
    %c0_2 = arith.constant 0 : index
    %1 = vector.load %arg2[%c0_1, %c0_2] : memref<128x128xf32, #tpu.memory_space<vmem>>, vector<128x128xf32>
    %cst = arith.constant dense<0.000000e+00> : vector<256x128xf32>
    %2 = tpu.matmul %0, %1, %cst {dimension_numbers = #tpu.dot_dimension_numbers<[1], [0], [0], [1], [0, 0, 1, 1], [], []>} : vector<256x128xf32>, vector<128x128xf32>, vector<256x128xf32> -> vector<256x128xf32>
    %3 = arith.truncf %2 : vector<256x128xf32> to vector<256x128xbf16>
    %c0_3 = arith.constant 0 : index
    %c0_4 = arith.constant 0 : index
    %4 = vector.load %arg3[%c0_3, %c0_4] : memref<256x128xbf16, #tpu.memory_space<vmem>>, vector<256x128xbf16>
    tpu.vector_store %arg3[%c0_3, %c0_4], %3 {strides = array<i32>} : memref<256x128xbf16, #tpu.memory_space<vmem>>, vector<256x128xbf16>,
    return
  }
  func.func @transform_0(%arg0: i32) -> (i32, i32) {
    %c0_i32 = arith.constant 0 : i32
    %c0_i32_0 = arith.constant 0 : i32
    return %c0_i32, %arg0 : i32, i32
  }
  func.func @transform_1(%arg0: i32) -> (i32, i32) {
    %c0_i32 = arith.constant 0 : i32
    %c0_i32_0 = arith.constant 0 : i32
    %c0_i32_1 = arith.constant 0 : i32
    return %c0_i32, %c0_i32_0 : i32, i32
  }
  func.func @transform_2(%arg0: i32) -> (i32, i32) {
    %c0_i32 = arith.constant 0 : i32
    %c0_i32_0 = arith.constant 0 : i32
    return %c0_i32, %arg0 : i32, i32
  }
}

module attributes {stable_mosaic.version = 11 : i64} {
  func.func @_agg_kernel(%arg0: i32, %arg1: i32, %arg2: memref<128x128xbf16, #tpu.memory_space<vmem>>, %arg3: memref<128x256xbf16, #tpu.memory_space<vmem>>, %arg4: memref<1x256xf32, #tpu.memory_space<vmem>>, %arg5: memref<128x256xf32, #tpu.memory_space<vmem>>, %arg6: memref<128x256xf32, #tpu.memory_space<vmem>>) attributes {dimension_semantics = [#tpu.dimension_semantics<parallel>, #tpu.dimension_semantics<arbitrary>], iteration_bounds = array<i64: 2, 2>, scalar_prefetch = 0 : i64, scratch_operands = 1 : i64, tpu.core_type = #tpu.core_type<tc>, window_params = [{transform_indices = @transform_0, window_bounds = array<i64: 128, 128>}, {transform_indices = @transform_1, window_bounds = array<i64: 128, 256>}, {pipeline_mode = #tpu.pipeline_mode<synchronous>, transform_indices = @transform_2, window_bounds = array<i64: 1, 256>}, {transform_indices = @transform_3, window_bounds = array<i64: 128, 256>}]} {
    %c0_i32 = arith.constant 0 : i32
    %0 = arith.cmpi eq, %arg1, %c0_i32 : i32
    %1 = arith.extui %0 : i1 to i32
    %c0_i32_0 = arith.constant 0 : i32
    %2 = arith.cmpi ne, %1, %c0_i32_0 : i32
    scf.if %2 {
      %cst_9 = arith.constant 0.000000e+00 : f32
      %12 = vector.broadcast %cst_9 : f32 to vector<128x256xf32>
      %c0_10 = arith.constant 0 : index
      %c0_11 = arith.constant 0 : index
      %13 = vector.load %arg6[%c0_10, %c0_11] : memref<128x256xf32, #tpu.memory_space<vmem>>, vector<128x256xf32>
      tpu.vector_store %arg6[%c0_10, %c0_11], %12 {strides = array<i32>} : memref<128x256xf32, #tpu.memory_space<vmem>>, vector<128x256xf32>,
    } else {
    }
    %c0 = arith.constant 0 : index
    %c0_1 = arith.constant 0 : index
    %3 = vector.load %arg6[%c0, %c0_1] : memref<128x256xf32, #tpu.memory_space<vmem>>, vector<128x256xf32>
    %c0_2 = arith.constant 0 : index
    %c0_3 = arith.constant 0 : index
    %4 = vector.load %arg2[%c0_2, %c0_3] : memref<128x128xbf16, #tpu.memory_space<vmem>>, vector<128x128xbf16>
    %c0_4 = arith.constant 0 : index
    %c0_5 = arith.constant 0 : index
    %5 = vector.load %arg3[%c0_4, %c0_5] : memref<128x256xbf16, #tpu.memory_space<vmem>>, vector<128x256xbf16>
    %cst = arith.constant dense<0.000000e+00> : vector<128x256xf32>
    %6 = tpu.matmul %4, %5, %cst {dimension_numbers = #tpu.dot_dimension_numbers<[1], [0], [0], [1], [0, 0, 1, 1], [], []>} : vector<128x128xbf16>, vector<128x256xbf16>, vector<128x256xf32> -> vector<128x256xf32>
    %7 = arith.addf %3, %6 : vector<128x256xf32>
    %c0_6 = arith.constant 0 : index
    %c0_7 = arith.constant 0 : index
    %8 = vector.load %arg6[%c0_6, %c0_7] : memref<128x256xf32, #tpu.memory_space<vmem>>, vector<128x256xf32>
    tpu.vector_store %arg6[%c0_6, %c0_7], %7 {strides = array<i32>} : memref<128x256xf32, #tpu.memory_space<vmem>>, vector<128x256xf32>,
    %c1_i32 = arith.constant 1 : i32
    %9 = arith.cmpi eq, %arg1, %c1_i32 : i32
    %10 = arith.extui %9 : i1 to i32
    %c0_i32_8 = arith.constant 0 : i32
    %11 = arith.cmpi ne, %10, %c0_i32_8 : i32
    scf.if %11 {
      %c0_9 = arith.constant 0 : index
      %c0_10 = arith.constant 0 : index
      %12 = vector.load %arg6[%c0_9, %c0_10] : memref<128x256xf32, #tpu.memory_space<vmem>>, vector<128x256xf32>
      %c0_11 = arith.constant 0 : index
      %c0_12 = arith.constant 0 : index
      %13 = vector.load %arg4[%c0_11, %c0_12] : memref<1x256xf32, #tpu.memory_space<vmem>>, vector<1x256xf32>
      %14 = vector.broadcast %13 : vector<1x256xf32> to vector<128x256xf32>
      %15 = arith.addf %12, %14 : vector<128x256xf32>
      %cst_13 = arith.constant 0.000000e+00 : f32
      %16 = vector.broadcast %cst_13 : f32 to vector<128x256xf32>
      %17 = arith.maximumf %15, %16 : vector<128x256xf32>
      %c0_14 = arith.constant 0 : index
      %c0_15 = arith.constant 0 : index
      %18 = vector.load %arg5[%c0_14, %c0_15] : memref<128x256xf32, #tpu.memory_space<vmem>>, vector<128x256xf32>
      tpu.vector_store %arg5[%c0_14, %c0_15], %17 {strides = array<i32>} : memref<128x256xf32, #tpu.memory_space<vmem>>, vector<128x256xf32>,
    } else {
    }
    return
  }
  func.func @transform_0(%arg0: i32, %arg1: i32) -> (i32, i32) {
    %c0_i32 = arith.constant 0 : i32
    return %arg0, %arg1 : i32, i32
  }
  func.func @transform_1(%arg0: i32, %arg1: i32) -> (i32, i32) {
    %c0_i32 = arith.constant 0 : i32
    %c0_i32_0 = arith.constant 0 : i32
    return %arg1, %c0_i32 : i32, i32
  }
  func.func @transform_2(%arg0: i32, %arg1: i32) -> (i32, i32) {
    %c0_i32 = arith.constant 0 : i32
    %c0_i32_0 = arith.constant 0 : i32
    %c0_i32_1 = arith.constant 0 : i32
    return %c0_i32, %c0_i32_0 : i32, i32
  }
  func.func @transform_3(%arg0: i32, %arg1: i32) -> (i32, i32) {
    %c0_i32 = arith.constant 0 : i32
    %c0_i32_0 = arith.constant 0 : i32
    return %arg0, %c0_i32 : i32, i32
  }
}

module attributes {stable_mosaic.version = 11 : i64} {
  func.func @_agg_kernel(%arg0: i32, %arg1: i32, %arg2: memref<128x128xbf16, #tpu.memory_space<vmem>>, %arg3: memref<128x256xbf16, #tpu.memory_space<vmem>>, %arg4: memref<1x256xf32, #tpu.memory_space<vmem>>, %arg5: memref<128x256xf32, #tpu.memory_space<vmem>>, %arg6: memref<128x256xf32, #tpu.memory_space<vmem>>) attributes {dimension_semantics = [#tpu.dimension_semantics<parallel>, #tpu.dimension_semantics<arbitrary>], iteration_bounds = array<i64: 2, 2>, scalar_prefetch = 0 : i64, scratch_operands = 1 : i64, tpu.core_type = #tpu.core_type<tc>, window_params = [{transform_indices = @transform_0, window_bounds = array<i64: 128, 128>}, {transform_indices = @transform_1, window_bounds = array<i64: 128, 256>}, {pipeline_mode = #tpu.pipeline_mode<synchronous>, transform_indices = @transform_2, window_bounds = array<i64: 1, 256>}, {transform_indices = @transform_3, window_bounds = array<i64: 128, 256>}]} {
    %c0_i32 = arith.constant 0 : i32
    %0 = arith.cmpi eq, %arg1, %c0_i32 : i32
    %1 = arith.extui %0 : i1 to i32
    %c0_i32_0 = arith.constant 0 : i32
    %2 = arith.cmpi ne, %1, %c0_i32_0 : i32
    scf.if %2 {
      %cst_9 = arith.constant 0.000000e+00 : f32
      %12 = vector.broadcast %cst_9 : f32 to vector<128x256xf32>
      %c0_10 = arith.constant 0 : index
      %c0_11 = arith.constant 0 : index
      %13 = vector.load %arg6[%c0_10, %c0_11] : memref<128x256xf32, #tpu.memory_space<vmem>>, vector<128x256xf32>
      tpu.vector_store %arg6[%c0_10, %c0_11], %12 {strides = array<i32>} : memref<128x256xf32, #tpu.memory_space<vmem>>, vector<128x256xf32>,
    } else {
    }
    %c0 = arith.constant 0 : index
    %c0_1 = arith.constant 0 : index
    %3 = vector.load %arg6[%c0, %c0_1] : memref<128x256xf32, #tpu.memory_space<vmem>>, vector<128x256xf32>
    %c0_2 = arith.constant 0 : index
    %c0_3 = arith.constant 0 : index
    %4 = vector.load %arg2[%c0_2, %c0_3] : memref<128x128xbf16, #tpu.memory_space<vmem>>, vector<128x128xbf16>
    %c0_4 = arith.constant 0 : index
    %c0_5 = arith.constant 0 : index
    %5 = vector.load %arg3[%c0_4, %c0_5] : memref<128x256xbf16, #tpu.memory_space<vmem>>, vector<128x256xbf16>
    %cst = arith.constant dense<0.000000e+00> : vector<128x256xf32>
    %6 = tpu.matmul %4, %5, %cst {dimension_numbers = #tpu.dot_dimension_numbers<[1], [0], [0], [1], [0, 0, 1, 1], [], []>} : vector<128x128xbf16>, vector<128x256xbf16>, vector<128x256xf32> -> vector<128x256xf32>
    %7 = arith.addf %3, %6 : vector<128x256xf32>
    %c0_6 = arith.constant 0 : index
    %c0_7 = arith.constant 0 : index
    %8 = vector.load %arg6[%c0_6, %c0_7] : memref<128x256xf32, #tpu.memory_space<vmem>>, vector<128x256xf32>
    tpu.vector_store %arg6[%c0_6, %c0_7], %7 {strides = array<i32>} : memref<128x256xf32, #tpu.memory_space<vmem>>, vector<128x256xf32>,
    %c1_i32 = arith.constant 1 : i32
    %9 = arith.cmpi eq, %arg1, %c1_i32 : i32
    %10 = arith.extui %9 : i1 to i32
    %c0_i32_8 = arith.constant 0 : i32
    %11 = arith.cmpi ne, %10, %c0_i32_8 : i32
    scf.if %11 {
      %c0_9 = arith.constant 0 : index
      %c0_10 = arith.constant 0 : index
      %12 = vector.load %arg6[%c0_9, %c0_10] : memref<128x256xf32, #tpu.memory_space<vmem>>, vector<128x256xf32>
      %c0_11 = arith.constant 0 : index
      %c0_12 = arith.constant 0 : index
      %13 = vector.load %arg4[%c0_11, %c0_12] : memref<1x256xf32, #tpu.memory_space<vmem>>, vector<1x256xf32>
      %14 = vector.broadcast %13 : vector<1x256xf32> to vector<128x256xf32>
      %15 = arith.addf %12, %14 : vector<128x256xf32>
      %c0_13 = arith.constant 0 : index
      %c0_14 = arith.constant 0 : index
      %16 = vector.load %arg5[%c0_13, %c0_14] : memref<128x256xf32, #tpu.memory_space<vmem>>, vector<128x256xf32>
      tpu.vector_store %arg5[%c0_13, %c0_14], %15 {strides = array<i32>} : memref<128x256xf32, #tpu.memory_space<vmem>>, vector<128x256xf32>,
    } else {
    }
    return
  }
  func.func @transform_0(%arg0: i32, %arg1: i32) -> (i32, i32) {
    %c0_i32 = arith.constant 0 : i32
    return %arg0, %arg1 : i32, i32
  }
  func.func @transform_1(%arg0: i32, %arg1: i32) -> (i32, i32) {
    %c0_i32 = arith.constant 0 : i32
    %c0_i32_0 = arith.constant 0 : i32
    return %arg1, %c0_i32 : i32, i32
  }
  func.func @transform_2(%arg0: i32, %arg1: i32) -> (i32, i32) {
    %c0_i32 = arith.constant 0 : i32
    %c0_i32_0 = arith.constant 0 : i32
    %c0_i32_1 = arith.constant 0 : i32
    return %c0_i32, %c0_i32_0 : i32, i32
  }
  func.func @transform_3(%arg0: i32, %arg1: i32) -> (i32, i32) {
    %c0_i32 = arith.constant 0 : i32
    %c0_i32_0 = arith.constant 0 : i32
    return %arg0, %c0_i32 : i32, i32
  }
}

module attributes {stable_mosaic.version = 11 : i64} {
  func.func @_summary_v_kernel(%arg0: i32, %arg1: memref<128x128xf32, #tpu.memory_space<vmem>>, %arg2: memref<128x128xf32, #tpu.memory_space<vmem>>, %arg3: memref<1x128xf32, #tpu.memory_space<vmem>>, %arg4: memref<1x128xf32, #tpu.memory_space<vmem>>) attributes {dimension_semantics = [#tpu.dimension_semantics<arbitrary>], iteration_bounds = array<i64: 2>, scalar_prefetch = 0 : i64, scratch_operands = 1 : i64, tpu.core_type = #tpu.core_type<tc>, window_params = [{transform_indices = @transform_0, window_bounds = array<i64: 128, 128>}, {pipeline_mode = #tpu.pipeline_mode<synchronous>, transform_indices = @transform_1, window_bounds = array<i64: 128, 128>}, {pipeline_mode = #tpu.pipeline_mode<synchronous>, transform_indices = @transform_2, window_bounds = array<i64: 1, 128>}]} {
    %c0_i32 = arith.constant 0 : i32
    %0 = arith.cmpi eq, %arg0, %c0_i32 : i32
    %1 = arith.extui %0 : i1 to i32
    %c0_i32_0 = arith.constant 0 : i32
    %2 = arith.cmpi ne, %1, %c0_i32_0 : i32
    scf.if %2 {
      %cst_7 = arith.constant 0.000000e+00 : f32
      %12 = vector.broadcast %cst_7 : f32 to vector<1x128xf32>
      %c0_8 = arith.constant 0 : index
      %c0_9 = arith.constant 0 : index
      %13 = vector.load %arg4[%c0_8, %c0_9] : memref<1x128xf32, #tpu.memory_space<vmem>>, vector<1x128xf32>
      tpu.vector_store %arg4[%c0_8, %c0_9], %12 {strides = array<i32>} : memref<1x128xf32, #tpu.memory_space<vmem>>, vector<1x128xf32>,
    } else {
    }
    %c0 = arith.constant 0 : index
    %c0_1 = arith.constant 0 : index
    %3 = vector.load %arg4[%c0, %c0_1] : memref<1x128xf32, #tpu.memory_space<vmem>>, vector<1x128xf32>
    %c0_2 = arith.constant 0 : index
    %c0_3 = arith.constant 0 : index
    %4 = vector.load %arg1[%c0_2, %c0_3] : memref<128x128xf32, #tpu.memory_space<vmem>>, vector<128x128xf32>
    %cst = arith.constant dense<0.000000e+00> : vector<128xf32>
    %5 = vector.multi_reduction <add>, %4, %cst [0] : vector<128x128xf32> to vector<128xf32>
    %6 = vector.shape_cast %5 : vector<128xf32> to vector<1x128xf32>
    %7 = arith.addf %3, %6 : vector<1x128xf32>
    %c0_4 = arith.constant 0 : index
    %c0_5 = arith.constant 0 : index
    %8 = vector.load %arg4[%c0_4, %c0_5] : memref<1x128xf32, #tpu.memory_space<vmem>>, vector<1x128xf32>
    tpu.vector_store %arg4[%c0_4, %c0_5], %7 {strides = array<i32>} : memref<1x128xf32, #tpu.memory_space<vmem>>, vector<1x128xf32>,
    %c1_i32 = arith.constant 1 : i32
    %9 = arith.cmpi eq, %arg0, %c1_i32 : i32
    %10 = arith.extui %9 : i1 to i32
    %c0_i32_6 = arith.constant 0 : i32
    %11 = arith.cmpi ne, %10, %c0_i32_6 : i32
    scf.if %11 {
      %c0_7 = arith.constant 0 : index
      %c0_8 = arith.constant 0 : index
      %12 = vector.load %arg4[%c0_7, %c0_8] : memref<1x128xf32, #tpu.memory_space<vmem>>, vector<1x128xf32>
      %cst_9 = arith.constant 3.906250e-03 : f32
      %13 = vector.broadcast %cst_9 : f32 to vector<1x128xf32>
      %14 = arith.mulf %12, %13 : vector<1x128xf32>
      %15 = arith.negf %14 : vector<1x128xf32>
      %16 = math.exp %15 : vector<1x128xf32>
      %cst_10 = arith.constant 1.000000e+00 : f32
      %17 = vector.broadcast %cst_10 : f32 to vector<1x128xf32>
      %18 = arith.addf %17, %16 : vector<1x128xf32>
      %19 = arith.divf %17, %18 : vector<1x128xf32>
      %c0_11 = arith.constant 0 : index
      %c0_12 = arith.constant 0 : index
      %20 = vector.load %arg2[%c0_11, %c0_12] : memref<128x128xf32, #tpu.memory_space<vmem>>, vector<128x128xf32>
      %cst_13 = arith.constant dense<0.000000e+00> : vector<1x128xf32>
      %21 = tpu.matmul %19, %20, %cst_13 {dimension_numbers = #tpu.dot_dimension_numbers<[1], [0], [0], [1], [0, 0, 1, 1], [], []>} : vector<1x128xf32>, vector<128x128xf32>, vector<1x128xf32> -> vector<1x128xf32>
      %c0_14 = arith.constant 0 : index
      %c0_15 = arith.constant 0 : index
      %22 = vector.load %arg3[%c0_14, %c0_15] : memref<1x128xf32, #tpu.memory_space<vmem>>, vector<1x128xf32>
      tpu.vector_store %arg3[%c0_14, %c0_15], %21 {strides = array<i32>} : memref<1x128xf32, #tpu.memory_space<vmem>>, vector<1x128xf32>,
    } else {
    }
    return
  }
  func.func @transform_0(%arg0: i32) -> (i32, i32) {
    %c0_i32 = arith.constant 0 : i32
    %c0_i32_0 = arith.constant 0 : i32
    return %arg0, %c0_i32 : i32, i32
  }
  func.func @transform_1(%arg0: i32) -> (i32, i32) {
    %c0_i32 = arith.constant 0 : i32
    %c0_i32_0 = arith.constant 0 : i32
    %c0_i32_1 = arith.constant 0 : i32
    return %c0_i32, %c0_i32_0 : i32, i32
  }
  func.func @transform_2(%arg0: i32) -> (i32, i32) {
    %c0_i32 = arith.constant 0 : i32
    %c0_i32_0 = arith.constant 0 : i32
    %c0_i32_1 = arith.constant 0 : i32
    return %c0_i32, %c0_i32_0 : i32, i32
  }
}

module attributes {stable_mosaic.version = 11 : i64} {
  func.func @_loss_kernel(%arg0: i32, %arg1: memref<128x256xf32, #tpu.memory_space<vmem>>, %arg2: memref<1x128xf32, #tpu.memory_space<vmem>>, %arg3: memref<1x1xf32, #tpu.memory_space<vmem>>, %arg4: memref<1x1xf32, #tpu.memory_space<vmem>>, %arg5: memref<1x1xf32, #tpu.memory_space<vmem>>) attributes {dimension_semantics = [#tpu.dimension_semantics<arbitrary>], iteration_bounds = array<i64: 2>, scalar_prefetch = 0 : i64, scratch_operands = 2 : i64, tpu.core_type = #tpu.core_type<tc>, window_params = [{transform_indices = @transform_0, window_bounds = array<i64: 128, 256>}, {pipeline_mode = #tpu.pipeline_mode<synchronous>, transform_indices = @transform_1, window_bounds = array<i64: 1, 128>}, {pipeline_mode = #tpu.pipeline_mode<synchronous>, transform_indices = @transform_2, window_bounds = array<i64: 1, 1>}]} {
    %c0_i32 = arith.constant 0 : i32
    %0 = arith.cmpi eq, %arg0, %c0_i32 : i32
    %1 = arith.extui %0 : i1 to i32
    %c0_i32_0 = arith.constant 0 : i32
    %2 = arith.cmpi ne, %1, %c0_i32_0 : i32
    scf.if %2 {
      %cst_21 = arith.constant 0.000000e+00 : f32
      %52 = vector.broadcast %cst_21 : f32 to vector<1x1xf32>
      %c0_22 = arith.constant 0 : index
      %c0_23 = arith.constant 0 : index
      %53 = vector.load %arg4[%c0_22, %c0_23] : memref<1x1xf32, #tpu.memory_space<vmem>>, vector<1x1xf32>
      tpu.vector_store %arg4[%c0_22, %c0_23], %52 {strides = array<i32>} : memref<1x1xf32, #tpu.memory_space<vmem>>, vector<1x1xf32>,
      %cst_24 = arith.constant 0.000000e+00 : f32
      %54 = vector.broadcast %cst_24 : f32 to vector<1x1xf32>
      %c0_25 = arith.constant 0 : index
      %c0_26 = arith.constant 0 : index
      %55 = vector.load %arg5[%c0_25, %c0_26] : memref<1x1xf32, #tpu.memory_space<vmem>>, vector<1x1xf32>
      tpu.vector_store %arg5[%c0_25, %c0_26], %54 {strides = array<i32>} : memref<1x1xf32, #tpu.memory_space<vmem>>, vector<1x1xf32>,
    } else {
    }
    %c0 = arith.constant 0 : index
    %c0_1 = arith.constant 0 : index
    %3 = vector.load %arg1[%c0, %c0_1] : memref<128x256xf32, #tpu.memory_space<vmem>>, vector<128x256xf32>
    %c0_2 = arith.constant 0 : index
    %c0_3 = arith.constant 0 : index
    %4 = vector.load %arg2[%c0_2, %c0_3] : memref<1x128xf32, #tpu.memory_space<vmem>>, vector<1x128xf32>
    %5 = vector.extract_strided_slice %3 {offsets = [0, 0], sizes = [128, 128], strides = [1, 1]} : vector<128x256xf32> to vector<128x128xf32>
    %6 = vector.broadcast %4 : vector<1x128xf32> to vector<128x128xf32>
    %7 = arith.mulf %5, %6 : vector<128x128xf32>
    %cst = arith.constant dense<0.000000e+00> : vector<128xf32>
    %8 = vector.multi_reduction <add>, %7, %cst [1] : vector<128x128xf32> to vector<128xf32>
    %9 = vector.shape_cast %8 : vector<128xf32> to vector<128x1xf32>
    %10 = vector.extract_strided_slice %3 {offsets = [0, 128], sizes = [128, 128], strides = [1, 1]} : vector<128x256xf32> to vector<128x128xf32>
    %11 = vector.broadcast %4 : vector<1x128xf32> to vector<128x128xf32>
    %12 = arith.mulf %10, %11 : vector<128x128xf32>
    %cst_4 = arith.constant dense<0.000000e+00> : vector<128xf32>
    %13 = vector.multi_reduction <add>, %12, %cst_4 [1] : vector<128x128xf32> to vector<128xf32>
    %14 = vector.shape_cast %13 : vector<128xf32> to vector<128x1xf32>
    %c0_5 = arith.constant 0 : index
    %c0_6 = arith.constant 0 : index
    %15 = vector.load %arg4[%c0_5, %c0_6] : memref<1x1xf32, #tpu.memory_space<vmem>>, vector<1x1xf32>
    %cst_7 = arith.constant 0.000000e+00 : f32
    %16 = vector.broadcast %cst_7 : f32 to vector<128x1xf32>
    %17 = arith.subf %16, %9 : vector<128x1xf32>
    %cst_8 = arith.constant 0.000000e+00 : f32
    %18 = vector.broadcast %cst_8 : f32 to vector<128x1xf32>
    %19 = arith.maximumf %17, %18 : vector<128x1xf32>
    %20 = math.absf %17 : vector<128x1xf32>
    %cst_9 = arith.constant 0.000000e+00 : f32
    %21 = vector.broadcast %cst_9 : f32 to vector<128x1xf32>
    %22 = arith.subf %21, %20 : vector<128x1xf32>
    %23 = math.exp %22 : vector<128x1xf32>
    %24 = math.log1p %23 : vector<128x1xf32>
    %25 = arith.addf %19, %24 : vector<128x1xf32>
    %26 = vector.shape_cast %25 : vector<128x1xf32> to vector<1x128x1xf32>
    %cst_10 = arith.constant dense<0.000000e+00> : vector<1xf32>
    %27 = vector.multi_reduction <add>, %26, %cst_10 [1, 2] : vector<1x128x1xf32> to vector<1xf32>
    %28 = vector.shape_cast %27 : vector<1xf32> to vector<1x1x1xf32>
    %29 = vector.extract %28[0, 0, 0] : f32 from vector<1x1x1xf32>
    %30 = vector.broadcast %29 : f32 to vector<1x1xf32>
    %31 = arith.addf %15, %30 : vector<1x1xf32>
    %c0_11 = arith.constant 0 : index
    %c0_12 = arith.constant 0 : index
    %32 = vector.load %arg4[%c0_11, %c0_12] : memref<1x1xf32, #tpu.memory_space<vmem>>, vector<1x1xf32>
    tpu.vector_store %arg4[%c0_11, %c0_12], %31 {strides = array<i32>} : memref<1x1xf32, #tpu.memory_space<vmem>>, vector<1x1xf32>,
    %c0_13 = arith.constant 0 : index
    %c0_14 = arith.constant 0 : index
    %33 = vector.load %arg5[%c0_13, %c0_14] : memref<1x1xf32, #tpu.memory_space<vmem>>, vector<1x1xf32>
    %cst_15 = arith.constant 0.000000e+00 : f32
    %34 = vector.broadcast %cst_15 : f32 to vector<128x1xf32>
    %35 = arith.maximumf %14, %34 : vector<128x1xf32>
    %36 = math.absf %14 : vector<128x1xf32>
    %cst_16 = arith.constant 0.000000e+00 : f32
    %37 = vector.broadcast %cst_16 : f32 to vector<128x1xf32>
    %38 = arith.subf %37, %36 : vector<128x1xf32>
    %39 = math.exp %38 : vector<128x1xf32>
    %40 = math.log1p %39 : vector<128x1xf32>
    %41 = arith.addf %35, %40 : vector<128x1xf32>
    %42 = vector.shape_cast %41 : vector<128x1xf32> to vector<1x128x1xf32>
    %cst_17 = arith.constant dense<0.000000e+00> : vector<1xf32>
    %43 = vector.multi_reduction <add>, %42, %cst_17 [1, 2] : vector<1x128x1xf32> to vector<1xf32>
    %44 = vector.shape_cast %43 : vector<1xf32> to vector<1x1x1xf32>
    %45 = vector.extract %44[0, 0, 0] : f32 from vector<1x1x1xf32>
    %46 = vector.broadcast %45 : f32 to vector<1x1xf32>
    %47 = arith.addf %33, %46 : vector<1x1xf32>
    %c0_18 = arith.constant 0 : index
    %c0_19 = arith.constant 0 : index
    %48 = vector.load %arg5[%c0_18, %c0_19] : memref<1x1xf32, #tpu.memory_space<vmem>>, vector<1x1xf32>
    tpu.vector_store %arg5[%c0_18, %c0_19], %47 {strides = array<i32>} : memref<1x1xf32, #tpu.memory_space<vmem>>, vector<1x1xf32>,
    %c1_i32 = arith.constant 1 : i32
    %49 = arith.cmpi eq, %arg0, %c1_i32 : i32
    %50 = arith.extui %49 : i1 to i32
    %c0_i32_20 = arith.constant 0 : i32
    %51 = arith.cmpi ne, %50, %c0_i32_20 : i32
    scf.if %51 {
      %c0_21 = arith.constant 0 : index
      %c0_22 = arith.constant 0 : index
      %52 = vector.load %arg4[%c0_21, %c0_22] : memref<1x1xf32, #tpu.memory_space<vmem>>, vector<1x1xf32>
      %c0_23 = arith.constant 0 : index
      %c0_24 = arith.constant 0 : index
      %53 = vector.load %arg5[%c0_23, %c0_24] : memref<1x1xf32, #tpu.memory_space<vmem>>, vector<1x1xf32>
      %54 = arith.addf %52, %53 : vector<1x1xf32>
      %cst_25 = arith.constant 3.906250e-03 : f32
      %55 = vector.broadcast %cst_25 : f32 to vector<1x1xf32>
      %56 = arith.mulf %54, %55 : vector<1x1xf32>
      %c0_26 = arith.constant 0 : index
      %c0_27 = arith.constant 0 : index
      %57 = vector.load %arg3[%c0_26, %c0_27] : memref<1x1xf32, #tpu.memory_space<vmem>>, vector<1x1xf32>
      tpu.vector_store %arg3[%c0_26, %c0_27], %56 {strides = array<i32>} : memref<1x1xf32, #tpu.memory_space<vmem>>, vector<1x1xf32>,
    } else {
    }
    return
  }
  func.func @transform_0(%arg0: i32) -> (i32, i32) {
    %c0_i32 = arith.constant 0 : i32
    %c0_i32_0 = arith.constant 0 : i32
    return %arg0, %c0_i32 : i32, i32
  }
  func.func @transform_1(%arg0: i32) -> (i32, i32) {
    %c0_i32 = arith.constant 0 : i32
    %c0_i32_0 = arith.constant 0 : i32
    %c0_i32_1 = arith.constant 0 : i32
    return %c0_i32, %c0_i32_0 : i32, i32
  }
  func.func @transform_2(%arg0: i32) -> (i32, i32) {
    %c0_i32 = arith.constant 0 : i32
    %c0_i32_0 = arith.constant 0 : i32
    %c0_i32_1 = arith.constant 0 : i32
    return %c0_i32, %c0_i32_0 : i32, i32
  }
}

</mosaic_0001>

<llo_original>
// kernel: dgi1_forward.8
$region0: #{dgi1_forward.8}
  #allocation0 [shape = 'u32[]', space=smem, size = 0x4, offset = 0x4, fixed_abs, tag = 'smem constant byte address 0x4 - core index']
  #allocation1 [shape = 'u32[144,128]{1,0:T(1,128)}', space=vmem, size = 0x12000, scoped, tag = 'internal scratch']
  %s0 = inlined_call_operand.vmem [shape: f32[256,256], index: 0, kind: input, shape index: {}]
  %s1 = inlined_call_operand.vmem [shape: f32[128,128], index: 1, kind: input, shape index: {}]
  %s2 = inlined_call_operand.vmem [shape: bf16[256,256], index: 2, kind: output, shape index: {}]
  %s3 = sld [smem:[#allocation0]]
  $region116: #{dgi1_forward.8} parent=0
    _
  %s5 = ssub.s32 1, %s3
  %s6 = scalar_select 0, %s5, %s3
  $region1: #{dgi1_forward.8} parent=0
    #allocation2 [shape = 'u8[262144]{0}', space=vmem, size = 0x40000, scoped, tag = 'input window, operand 0']
    #allocation3 [shape = 'u8[131072]{0}', space=vmem, size = 0x20000, scoped, tag = 'output window, operand 0']
    loop: start=0, step=1, limit=4
    $region2: #{dgi1_forward.8} parent=1 // loop_pre_header
      _
    $region3: #{dgi1_forward.8} parent=1 // loop_header
      %s8 = sphi 0, %s12
      %p9 = scmp.ge.s32.totalorder %s8, 4
      %s18 = sphi 0, %s20
      %s21 = sphi 0, %s18
      %s22 = sphi 0, %s21
      %s38 = sphi 0, %s22
      %s42 = sphi 0, %s42
      %s44 = sphi 0, %s42
      %s45 = sphi 0, %s44
      %s59 = sphi 0, %s45
      %s65 = sphi 0, %s67
      %s68 = sphi 0, %s65
      %s69 = sphi 0, %s68
      %s85 = sphi 0, %s69
    $region4: #{dgi1_forward.8} parent=1 // loop_header_branch
      %11 = sbr.rel (%p9) target = $region8
    $region5: #{dgi1_forward.8} parent=1 // loop_body
      %s13 = ssub.s32 %s8, 1
      %s14 = ssub.s32 %s8, 2
      %s15 = sadd.s32 %s8, 1
      %s16 = ssub.s32 %s8, %s15
      %p17 = scmp.eq.s32.totalorder %s16, 0
      %s19 = sadd.s32 %s18, 1
      %s20 = scalar_select %p17, %s18, %s19
      %p23 = pneg %p17
      %p24 = scmp.eq.s32.totalorder %s8, 1
      %p25 = por %p23, %p24
      %p26 = scmp.ne.s32.totalorder %s18, %s21
      %p27 = scmp.eq.s32.totalorder %s8, 0
      %p28 = por %p26, %p27
      %p29 = scmp.ne.s32.totalorder %s18, %s21
      %p30 = scmp.eq.s32.totalorder %s13, 1
      %p31 = por %p29, %p30
      %p32 = scmp.ne.s32.totalorder %s21, %s22
      %p33 = scmp.eq.s32.totalorder %s13, 0
      %p34 = por %p32, %p33
      %p35 = scmp.ne.s32.totalorder %s21, %s22
      %p36 = scmp.eq.s32.totalorder %s14, 1
      %p37 = por %p35, %p36
      %p39 = scmp.ne.s32.totalorder %s22, %s38
      %p40 = scmp.eq.s32.totalorder %s14, 0
      %p41 = por %p39, %p40
      %s43 = sadd.s32 %s42, 1
      %p46 = scmp.eq.s32.totalorder %s8, 1
      %p47 = scmp.ne.s32.totalorder %s42, %s44
      %p48 = scmp.eq.s32.totalorder %s8, 0
      %p49 = por %p47, %p48
      %p50 = scmp.ne.s32.totalorder %s42, %s44
      %p51 = scmp.eq.s32.totalorder %s13, 1
      %p52 = por %p50, %p51
      %p53 = scmp.ne.s32.totalorder %s44, %s45
      %p54 = scmp.eq.s32.totalorder %s13, 0
      %p55 = por %p53, %p54
      %p56 = scmp.ne.s32.totalorder %s44, %s45
      %p57 = scmp.eq.s32.totalorder %s14, 1
      %p58 = por %p56, %p57
      %p60 = scmp.ne.s32.totalorder %s45, %s59
      %p61 = scmp.eq.s32.totalorder %s14, 0
      %p62 = por %p60, %p61
      %s63 = ssub.s32 %s8, %s15
      %p64 = scmp.eq.s32.totalorder %s63, 0
      %s66 = sadd.s32 %s65, 1
      %s67 = scalar_select %p64, %s65, %s66
      %p70 = pneg %p64
      %p71 = scmp.eq.s32.totalorder %s8, 1
      %p72 = por %p70, %p71
      %p73 = scmp.ne.s32.totalorder %s65, %s68
      %p74 = scmp.eq.s32.totalorder %s8, 0
      %p75 = por %p73, %p74
      %p76 = scmp.ne.s32.totalorder %s65, %s68
      %p77 = scmp.eq.s32.totalorder %s13, 1
      %p78 = por %p76, %p77
      %p79 = scmp.ne.s32.totalorder %s68, %s69
      %p80 = scmp.eq.s32.totalorder %s13, 0
      %p81 = por %p79, %p80
      %p82 = scmp.ne.s32.totalorder %s68, %s69
      %p83 = scmp.eq.s32.totalorder %s14, 1
      %p84 = por %p82, %p83
      %p86 = scmp.ne.s32.totalorder %s69, %s85
      %p87 = scmp.eq.s32.totalorder %s14, 0
      %p88 = por %p86, %p87
      %p89 = scmp.le.s32.totalorder 1, %s8
      %p90 = scmp.lt.s32.totalorder %s8, 3
      %p91 = pnand %p89, %p90
      %p92 = pneg %p91
      // Predicated region
      $region9: #{dgi1_forward.8} parent=5 // pred_check
        _
      $region10: #{dgi1_forward.8} parent=5 // pred_check_branch
        %94 = sbr.rel (%p91) target = $region12
      $region11: #{dgi1_forward.8} parent=5 // pred_region
        %s95 = ssub.s32 %s8, 1
        // Predicated region
        $region13: #{dgi1_forward.8} parent=11 // pred_check
          %p96 = pneg %p55
        $region14: #{dgi1_forward.8} parent=11 // pred_check_branch
          %98 = sbr.rel (%p96) target = $region16
        $region15: #{dgi1_forward.8} parent=11 // pred_region
          _
        $region16: #{dgi1_forward.8} parent=11 // pred_fallthru
          _
      $region12: #{dgi1_forward.8} parent=5 // pred_fallthru
        _
      %p99 = scmp.lt.s32.totalorder %s8, 2
      // Predicated region
      $region17: #{dgi1_forward.8} parent=5 // pred_check
        %p100 = pneg %p99
      $region18: #{dgi1_forward.8} parent=5 // pred_check_branch
        %102 = sbr.rel (%p100) target = $region20
      $region19: #{dgi1_forward.8} parent=5 // pred_region
        // Predicated region
        $region21: #{dgi1_forward.8} parent=19 // pred_check
          %p103 = pneg %p28
        $region22: #{dgi1_forward.8} parent=19 // pred_check_branch
          %105 = sbr.rel (%p103) target = $region24
        $region23: #{dgi1_forward.8} parent=19 // pred_region
          %s106 = sand.u32 %s18, 1
          %s107 = sand.u32 %s18, 1
          %s108 = smul.addr %s107, 256
          %s109 = scalar_lea.vmem [#allocation2], %s108
          %s110 = smul.addr %s8, 8
          %s111 = scalar_lea.vmem %s0, %s110
          // Predicated region
          $region25: #{dgi1_forward.8} parent=23 // pred_check
            _
          $region26: #{dgi1_forward.8} parent=23 // pred_check_branch
            %113 = sbr.rel (0) target = $region28
          $region27: #{dgi1_forward.8} parent=23 // pred_region
            // Predicated region
            $region29: #{dgi1_forward.8} parent=27 // pred_check
              _
            $region30: #{dgi1_forward.8} parent=27 // pred_check_branch
              %115 = sbr.rel (0) target = $region32
            $region31: #{dgi1_forward.8} parent=27 // pred_region
              // Predicated region
              $region44: #{dgi1_forward.8} parent=31 // pred_check
                _
              $region45: #{dgi1_forward.8} parent=31 // pred_check_branch
                %192 = sbr.rel (0) target = $region47
              $region46: #{dgi1_forward.8} parent=31 // pred_region
                loop: start=0, step=1, limit=1
                $region48: #{dgi1_forward.8} parent=46 // loop_pre_header
                  _
                $region49: #{dgi1_forward.8} parent=46 // loop_header
                  %s194 = sphi 0, %s198
                  %p195 = scmp.ge.s32.totalorder %s194, 1
                  %s199 = sphi %s111, %s111
                  %s200 = sphi %s109, %s109
                $region50: #{dgi1_forward.8} parent=46 // loop_header_branch
                  %197 = sbr.rel (%p195) target = $region54
                $region51: #{dgi1_forward.8} parent=46 // loop_body
                  %v201 = vld [vmem:[%s199] sm:$0xff]
                  %202 = vst [vmem:[%s200] sm:$0xff] %v201
                  %v203 = vld [vmem:[%s199 + $0x10] sm:$0xff]
                  %204 = vst [vmem:[%s200 + $0x8] sm:$0xff] %v203
                  %v205 = vld [vmem:[%s199 + $0x20] sm:$0xff]
                  %206 = vst [vmem:[%s200 + $0x10] sm:$0xff] %v205
                  %v207 = vld [vmem:[%s199 + $0x30] sm:$0xff]
                  %208 = vst [vmem:[%s200 + $0x18] sm:$0xff] %v207
                  %v209 = vld [vmem:[%s199 + $0x40] sm:$0xff]
                  %210 = vst [vmem:[%s200 + $0x20] sm:$0xff] %v209
                  %v211 = vld [vmem:[%s199 + $0x50] sm:$0xff]
                  %212 = vst [vmem:[%s200 + $0x28] sm:$0xff] %v211
                  %v213 = vld [vmem:[%s199 + $0x60] sm:$0xff]
                  %214 = vst [vmem:[%s200 + $0x30] sm:$0xff] %v213
                  %v215 = vld [vmem:[%s199 + $0x70] sm:$0xff]
                  %216 = vst [vmem:[%s200 + $0x38] sm:$0xff] %v215
                  %v217 = vld [vmem:[%s199 + $0x80] sm:$0xff]
                  %218 = vst [vmem:[%s200 + $0x40] sm:$0xff] %v217
                  %v219 = vld [vmem:[%s199 + $0x90] sm:$0xff]
                  %220 = vst [vmem:[%s200 + $0x48] sm:$0xff] %v219
                  %v221 = vld [vmem:[%s199 + $0xa0] sm:$0xff]
                  %222 = vst [vmem:[%s200 + $0x50] sm:$0xff] %v221
                  %v223 = vld [vmem:[%s199 + $0xb0] sm:$0xff]
                  %224 = vst [vmem:[%s200 + $0x58] sm:$0xff] %v223
                  %v225 = vld [vmem:[%s199 + $0xc0] sm:$0xff]
                  %226 = vst [vmem:[%s200 + $0x60] sm:$0xff] %v225
                  %v227 = vld [vmem:[%s199 + $0xd0] sm:$0xff]
                  %228 = vst [vmem:[%s200 + $0x68] sm:$0xff] %v227
                  %v229 = vld [vmem:[%s199 + $0xe0] sm:$0xff]
                  %230 = vst [vmem:[%s200 + $0x70] sm:$0xff] %v229
                  %v231 = vld [vmem:[%s199 + $0xf0] sm:$0xff]
                  %232 = vst [vmem:[%s200 + $0x78] sm:$0xff] %v231
                  %v233 = vld [vmem:[%s199 + $0x100] sm:$0xff]
                  %234 = vst [vmem:[%s200 + $0x80] sm:$0xff] %v233
                  %v235 = vld [vmem:[%s199 + $0x110] sm:$0xff]
                  %236 = vst [vmem:[%s200 + $0x88] sm:$0xff] %v235
                  %v237 = vld [vmem:[%s199 + $0x120] sm:$0xff]
                  %238 = vst [vmem:[%s200 + $0x90] sm:$0xff] %v237
                  %v239 = vld [vmem:[%s199 + $0x130] sm:$0xff]
                  %240 = vst [vmem:[%s200 + $0x98] sm:$0xff] %v239
                  %v241 = vld [vmem:[%s199 + $0x140] sm:$0xff]
                  %242 = vst [vmem:[%s200 + $0xa0] sm:$0xff] %v241
                  %v243 = vld [vmem:[%s199 + $0x150] sm:$0xff]
                  %244 = vst [vmem:[%s200 + $0xa8] sm:$0xff] %v243
                  %v245 = vld [vmem:[%s199 + $0x160] sm:$0xff]
                  %246 = vst [vmem:[%s200 + $0xb0] sm:$0xff] %v245
                  %v247 = vld [vmem:[%s199 + $0x170] sm:$0xff]
                  %248 = vst [vmem:[%s200 + $0xb8] sm:$0xff] %v247
                  %v249 = vld [vmem:[%s199 + $0x180] sm:$0xff]
                  %250 = vst [vmem:[%s200 + $0xc0] sm:$0xff] %v249
                  %v251 = vld [vmem:[%s199 + $0x190] sm:$0xff]
                  %252 = vst [vmem:[%s200 + $0xc8] sm:$0xff] %v251
                  %v253 = vld [vmem:[%s199 + $0x1a0] sm:$0xff]
                  %254 = vst [vmem:[%s200 + $0xd0] sm:$0xff] %v253
                  %v255 = vld [vmem:[%s199 + $0x1b0] sm:$0xff]
                  %256 = vst [vmem:[%s200 + $0xd8] sm:$0xff] %v255
                  %v257 = vld [vmem:[%s199 + $0x1c0] sm:$0xff]
                  %258 = vst [vmem:[%s200 + $0xe0] sm:$0xff] %v257
                  %v259 = vld [vmem:[%s199 + $0x1d0] sm:$0xff]
                  %260 = vst [vmem:[%s200 + $0xe8] sm:$0xff] %v259
                  %v261 = vld [vmem:[%s199 + $0x1e0] sm:$0xff]
                  %262 = vst [vmem:[%s200 + $0xf0] sm:$0xff] %v261
                  %v263 = vld [vmem:[%s199 + $0x1f0] sm:$0xff]
                  %264 = vst [vmem:[%s200 + $0xf8] sm:$0xff] %v263
                $region52: #{dgi1_forward.8} parent=46 // loop_footer
                  %s198 = sadd.s32 1, %s194
                $region53: #{dgi1_forward.8} parent=46 // loop_footer_branch
                  %193 = sbr.rel target = $region49
                $region54: #{dgi1_forward.8} parent=46 // loop_exit
                  _
              $region47: #{dgi1_forward.8} parent=31 // pred_fallthru
                _
              // Predicated region
              $region55: #{dgi1_forward.8} parent=31 // pred_check
                _
              $region56: #{dgi1_forward.8} parent=31 // pred_check_branch
                %266 = sbr.rel target = $region58
              $region57: #{dgi1_forward.8} parent=31 // pred_region
                _
              $region58: #{dgi1_forward.8} parent=31 // pred_fallthru
                _
            $region32: #{dgi1_forward.8} parent=27 // pred_fallthru
              _
            // Predicated region
            $region33: #{dgi1_forward.8} parent=27 // pred_check
              _
            $region34: #{dgi1_forward.8} parent=27 // pred_check_branch
              %117 = sbr.rel target = $region36
            $region35: #{dgi1_forward.8} parent=27 // pred_region
              loop: start=0, step=1, limit=1
              $region37: #{dgi1_forward.8} parent=35 // loop_pre_header
                _
              $region38: #{dgi1_forward.8} parent=35 // loop_header
                %s120 = sphi 0, %s124
                %p121 = scmp.ge.s32.totalorder %s120, 1
                %s125 = sphi %s111, %s111
                %s126 = sphi %s109, %s109
              $region39: #{dgi1_forward.8} parent=35 // loop_header_branch
                %123 = sbr.rel (%p121) target = $region43
              $region40: #{dgi1_forward.8} parent=35 // loop_body
                %v127 = vld [vmem:[%s125] sm:$0xff]
                %128 = vst [vmem:[%s126] sm:$0xff] %v127
                %v129 = vld [vmem:[%s125 + $0x10] sm:$0xff]
                %130 = vst [vmem:[%s126 + $0x8] sm:$0xff] %v129
                %v131 = vld [vmem:[%s125 + $0x20] sm:$0xff]
                %132 = vst [vmem:[%s126 + $0x10] sm:$0xff] %v131
                %v133 = vld [vmem:[%s125 + $0x30] sm:$0xff]
                %134 = vst [vmem:[%s126 + $0x18] sm:$0xff] %v133
                %v135 = vld [vmem:[%s125 + $0x40] sm:$0xff]
                %136 = vst [vmem:[%s126 + $0x20] sm:$0xff] %v135
                %v137 = vld [vmem:[%s125 + $0x50] sm:$0xff]
                %138 = vst [vmem:[%s126 + $0x28] sm:$0xff] %v137
                %v139 = vld [vmem:[%s125 + $0x60] sm:$0xff]
                %140 = vst [vmem:[%s126 + $0x30] sm:$0xff] %v139
                %v141 = vld [vmem:[%s125 + $0x70] sm:$0xff]
                %142 = vst [vmem:[%s126 + $0x38] sm:$0xff] %v141
                %v143 = vld [vmem:[%s125 + $0x80] sm:$0xff]
                %144 = vst [vmem:[%s126 + $0x40] sm:$0xff] %v143
                %v145 = vld [vmem:[%s125 + $0x90] sm:$0xff]
                %146 = vst [vmem:[%s126 + $0x48] sm:$0xff] %v145
                %v147 = vld [vmem:[%s125 + $0xa0] sm:$0xff]
                %148 = vst [vmem:[%s126 + $0x50] sm:$0xff] %v147
                %v149 = vld [vmem:[%s125 + $0xb0] sm:$0xff]
                %150 = vst [vmem:[%s126 + $0x58] sm:$0xff] %v149
                %v151 = vld [vmem:[%s125 + $0xc0] sm:$0xff]
                %152 = vst [vmem:[%s126 + $0x60] sm:$0xff] %v151
                %v153 = vld [vmem:[%s125 + $0xd0] sm:$0xff]
                %154 = vst [vmem:[%s126 + $0x68] sm:$0xff] %v153
                %v155 = vld [vmem:[%s125 + $0xe0] sm:$0xff]
                %156 = vst [vmem:[%s126 + $0x70] sm:$0xff] %v155
                %v157 = vld [vmem:[%s125 + $0xf0] sm:$0xff]
                %158 = vst [vmem:[%s126 + $0x78] sm:$0xff] %v157
                %v159 = vld [vmem:[%s125 + $0x100] sm:$0xff]
                %160 = vst [vmem:[%s126 + $0x80] sm:$0xff] %v159
                %v161 = vld [vmem:[%s125 + $0x110] sm:$0xff]
                %162 = vst [vmem:[%s126 + $0x88] sm:$0xff] %v161
                %v163 = vld [vmem:[%s125 + $0x120] sm:$0xff]
                %164 = vst [vmem:[%s126 + $0x90] sm:$0xff] %v163
                %v165 = vld [vmem:[%s125 + $0x130] sm:$0xff]
                %166 = vst [vmem:[%s126 + $0x98] sm:$0xff] %v165
                %v167 = vld [vmem:[%s125 + $0x140] sm:$0xff]
                %168 = vst [vmem:[%s126 + $0xa0] sm:$0xff] %v167
                %v169 = vld [vmem:[%s125 + $0x150] sm:$0xff]
                %170 = vst [vmem:[%s126 + $0xa8] sm:$0xff] %v169
                %v171 = vld [vmem:[%s125 + $0x160] sm:$0xff]
                %172 = vst [vmem:[%s126 + $0xb0] sm:$0xff] %v171
                %v173 = vld [vmem:[%s125 + $0x170] sm:$0xff]
                %174 = vst [vmem:[%s126 + $0xb8] sm:$0xff] %v173
                %v175 = vld [vmem:[%s125 + $0x180] sm:$0xff]
                %176 = vst [vmem:[%s126 + $0xc0] sm:$0xff] %v175
                %v177 = vld [vmem:[%s125 + $0x190] sm:$0xff]
                %178 = vst [vmem:[%s126 + $0xc8] sm:$0xff] %v177
                %v179 = vld [vmem:[%s125 + $0x1a0] sm:$0xff]
                %180 = vst [vmem:[%s126 + $0xd0] sm:$0xff] %v179
                %v181 = vld [vmem:[%s125 + $0x1b0] sm:$0xff]
                %182 = vst [vmem:[%s126 + $0xd8] sm:$0xff] %v181
                %v183 = vld [vmem:[%s125 + $0x1c0] sm:$0xff]
                %184 = vst [vmem:[%s126 + $0xe0] sm:$0xff] %v183
                %v185 = vld [vmem:[%s125 + $0x1d0] sm:$0xff]
                %186 = vst [vmem:[%s126 + $0xe8] sm:$0xff] %v185
                %v187 = vld [vmem:[%s125 + $0x1e0] sm:$0xff]
                %188 = vst [vmem:[%s126 + $0xf0] sm:$0xff] %v187
                %v189 = vld [vmem:[%s125 + $0x1f0] sm:$0xff]
                %190 = vst [vmem:[%s126 + $0xf8] sm:$0xff] %v189
              $region41: #{dgi1_forward.8} parent=35 // loop_footer
                %s124 = sadd.s32 1, %s120
              $region42: #{dgi1_forward.8} parent=35 // loop_footer_branch
                %119 = sbr.rel target = $region38
              $region43: #{dgi1_forward.8} parent=35 // loop_exit
                _
            $region36: #{dgi1_forward.8} parent=27 // pred_fallthru
              _
          $region28: #{dgi1_forward.8} parent=23 // pred_fallthru
            _
          %267 = vnop
        $region24: #{dgi1_forward.8} parent=19 // pred_fallthru
          _
      $region20: #{dgi1_forward.8} parent=5 // pred_fallthru
        _
      %p268 = scmp.le.s32.totalorder 1, %s8
      %p269 = scmp.lt.s32.totalorder %s8, 3
      %p270 = pnand %p268, %p269
      %p271 = pneg %p270
      // Predicated region
      $region59: #{dgi1_forward.8} parent=5 // pred_check
        _
      $region60: #{dgi1_forward.8} parent=5 // pred_check_branch
        %273 = sbr.rel (%p270) target = $region62
      $region61: #{dgi1_forward.8} parent=5 // pred_region
        %s274 = ssub.s32 %s8, 1
        %s275 = sand.u32 %s21, 1
        %s276 = sand.u32 %s21, 1
        %s277 = smul.addr %s276, 256
        %s278 = scalar_lea.vmem [#allocation2], %s277
        // Predicated region
        $region63: #{dgi1_forward.8} parent=61 // pred_check
          %p279 = pneg %p34
        $region64: #{dgi1_forward.8} parent=61 // pred_check_branch
          %281 = sbr.rel (%p279) target = $region66
        $region65: #{dgi1_forward.8} parent=61 // pred_region
          _
        $region66: #{dgi1_forward.8} parent=61 // pred_fallthru
          _
        %s282 = sand.u32 %s21, 1
        %s283 = sand.u32 %s21, 1
        %s284 = smul.addr %s283, 256
        %s285 = scalar_lea.vmem [#allocation2], %s284
        %p286 = pneg %p34
        %p287 = pneg %p31
        %p288 = pneg %p55
        %p289 = pneg %p52
        %p290 = pneg %p81
        %p291 = pneg %p78
        %s292 = sand.u32 %s68, 1
        %s293 = sand.u32 %s68, 1
        %s294 = smul.addr %s293, 128
        %s295 = scalar_lea.vmem [#allocation3], %s294
        %v296 = vld [vmem:[%s278] sm:$0xff]
        %v297 = vld [vmem:[%s278 + $0x8] sm:$0xff]
        %v298 = vld [vmem:[%s278 + $0x10] sm:$0xff]
        %v299 = vld [vmem:[%s278 + $0x18] sm:$0xff]
        %v300 = vld [vmem:[%s278 + $0x20] sm:$0xff]
        %v301 = vld [vmem:[%s278 + $0x28] sm:$0xff]
        %v302 = vld [vmem:[%s278 + $0x30] sm:$0xff]
        %v303 = vld [vmem:[%s278 + $0x38] sm:$0xff]
        %v304 = vld [vmem:[%s278 + $0x40] sm:$0xff]
        %v305 = vld [vmem:[%s278 + $0x48] sm:$0xff]
        %v306 = vld [vmem:[%s278 + $0x50] sm:$0xff]
        %v307 = vld [vmem:[%s278 + $0x58] sm:$0xff]
        %v308 = vld [vmem:[%s278 + $0x60] sm:$0xff]
        %v309 = vld [vmem:[%s278 + $0x68] sm:$0xff]
        %v310 = vld [vmem:[%s278 + $0x70] sm:$0xff]
        %v311 = vld [vmem:[%s278 + $0x78] sm:$0xff]
        %v312 = vld [vmem:[%s278 + $0x80] sm:$0xff]
        %v313 = vld [vmem:[%s278 + $0x88] sm:$0xff]
        %v314 = vld [vmem:[%s278 + $0x90] sm:$0xff]
        %v315 = vld [vmem:[%s278 + $0x98] sm:$0xff]
        %v316 = vld [vmem:[%s278 + $0xa0] sm:$0xff]
        %v317 = vld [vmem:[%s278 + $0xa8] sm:$0xff]
        %v318 = vld [vmem:[%s278 + $0xb0] sm:$0xff]
        %v319 = vld [vmem:[%s278 + $0xb8] sm:$0xff]
        %v320 = vld [vmem:[%s278 + $0xc0] sm:$0xff]
        %v321 = vld [vmem:[%s278 + $0xc8] sm:$0xff]
        %v322 = vld [vmem:[%s278 + $0xd0] sm:$0xff]
        %v323 = vld [vmem:[%s278 + $0xd8] sm:$0xff]
        %v324 = vld [vmem:[%s278 + $0xe0] sm:$0xff]
        %v325 = vld [vmem:[%s278 + $0xe8] sm:$0xff]
        %v326 = vld [vmem:[%s278 + $0xf0] sm:$0xff]
        %v327 = vld [vmem:[%s278 + $0xf8] sm:$0xff]
        %v328 = vld [vmem:[%s1] sm:$0xff]
        %v329 = vld [vmem:[%s1 + $0x8] sm:$0xff]
        %v330 = vld [vmem:[%s1 + $0x10] sm:$0xff]
        %v331 = vld [vmem:[%s1 + $0x18] sm:$0xff]
        %v332 = vld [vmem:[%s1 + $0x20] sm:$0xff]
        %v333 = vld [vmem:[%s1 + $0x28] sm:$0xff]
        %v334 = vld [vmem:[%s1 + $0x30] sm:$0xff]
        %v335 = vld [vmem:[%s1 + $0x38] sm:$0xff]
        %v336 = vld [vmem:[%s1 + $0x40] sm:$0xff]
        %v337 = vld [vmem:[%s1 + $0x48] sm:$0xff]
        %v338 = vld [vmem:[%s1 + $0x50] sm:$0xff]
        %v339 = vld [vmem:[%s1 + $0x58] sm:$0xff]
        %v340 = vld [vmem:[%s1 + $0x60] sm:$0xff]
        %v341 = vld [vmem:[%s1 + $0x68] sm:$0xff]
        %v342 = vld [vmem:[%s1 + $0x70] sm:$0xff]
        %v343 = vld [vmem:[%s1 + $0x78] sm:$0xff]
        %344 = vmatprep.subr.mxu0 0.0
        %345 = vmatpush1.msra.mxu0 %v328
        %346 = vmatprep.subr.mxu0 0.0
        %347 = vmatpush1.msra.mxu0 %v329
        %348 = vmatprep.subr.mxu0 0.0
        %349 = vmatpush1.msra.mxu0 %v330
        %350 = vmatprep.subr.mxu0 0.0
        %351 = vmatpush1.msra.mxu0 %v331
        %352 = vmatprep.subr.mxu0 0.0
        %353 = vmatpush1.msra.mxu0 %v332
        %354 = vmatprep.subr.mxu0 0.0
        %355 = vmatpush1.msra.mxu0 %v333
        %356 = vmatprep.subr.mxu0 0.0
        %357 = vmatpush1.msra.mxu0 %v334
        %358 = vmatprep.subr.mxu0 0.0
        %359 = vmatpush1.msra.mxu0 %v335
        %360 = vmatprep.subr.mxu0 0.0
        %361 = vmatpush1.msra.mxu0 %v336
        %362 = vmatprep.subr.mxu0 0.0
        %363 = vmatpush1.msra.mxu0 %v337
        %364 = vmatprep.subr.mxu0 0.0
        %365 = vmatpush1.msra.mxu0 %v338
        %366 = vmatprep.subr.mxu0 0.0
        %367 = vmatpush1.msra.mxu0 %v339
        %368 = vmatprep.subr.mxu0 0.0
        %369 = vmatpush1.msra.mxu0 %v340
        %370 = vmatprep.subr.mxu0 0.0
        %371 = vmatpush1.msra.mxu0 %v341
        %372 = vmatprep.subr.mxu0 0.0
        %373 = vmatpush1.msra.mxu0 %v342
        %374 = vmatprep.subr.mxu0 0.0
        %375 = vmatpush1.msra.mxu0 %v343
        %376 = vmatprep.subr.mxu0 0.0
        %377 = vmatpush1.msra.mxu0 0.0
        %378 = vmatprep.subr.mxu0 0.0
        %379 = vmatpush1.msra.mxu0 0.0
        %380 = vmatprep.subr.mxu0 0.0
        %381 = vmatpush1.msra.mxu0 0.0
        %382 = vmatprep.subr.mxu0 0.0
        %383 = vmatpush1.msra.mxu0 0.0
        %384 = vmatprep.subr.mxu0 0.0
        %385 = vmatpush1.msra.mxu0 0.0
        %386 = vmatprep.subr.mxu0 0.0
        %387 = vmatpush1.msra.mxu0 0.0
        %388 = vmatprep.subr.mxu0 0.0
        %389 = vmatpush1.msra.mxu0 0.0
        %390 = vmatprep.subr.mxu0 0.0
        %391 = vmatpush1.msra.mxu0 0.0
        %392 = vmatprep.subr.mxu0 0.0
        %393 = vmatpush1.msra.mxu0 0.0
        %394 = vmatprep.subr.mxu0 0.0
        %395 = vmatpush1.msra.mxu0 0.0
        %396 = vmatprep.subr.mxu0 0.0
        %397 = vmatpush1.msra.mxu0 0.0
        %398 = vmatprep.subr.mxu0 0.0
        %399 = vmatpush1.msra.mxu0 0.0
        %400 = vmatprep.subr.mxu0 0.0
        %401 = vmatpush1.msra.mxu0 0.0
        %402 = vmatprep.subr.mxu0 0.0
        %403 = vmatpush1.msra.mxu0 0.0
        %404 = vmatprep.subr.mxu0 0.0
        %405 = vmatpush1.msra.mxu0 0.0
        %406 = vmatprep.subr.mxu0 0.0
        %407 = vmatpush1.msra.mxu0 0.0
        %408 = vmatprep.mubr.f32.mxu0 0.0
        %409 = vmatmul.mubr.f32.gmra.mrb[0].mxu0 %v296
        %v410 = vpop.f32.mrb[0].mxu0
        %v411 = vadd.f32 0.0, %v410
        %v412 = vpop.f32.mrb[0].mxu0
        %413 = vmatprep.mubr.f32.mxu0 0.0
        %414 = vmatmul.mubr.f32.gmra.mrb[0].mxu0 %v297
        %v415 = vpop.f32.mrb[0].mxu0
        %v416 = vadd.f32 0.0, %v415
        %v417 = vpop.f32.mrb[0].mxu0
        %418 = vmatprep.mubr.f32.mxu0 0.0
        %419 = vmatmul.mubr.f32.gmra.mrb[0].mxu0 %v298
        %v420 = vpop.f32.mrb[0].mxu0
        %v421 = vadd.f32 0.0, %v420
        %v422 = vpop.f32.mrb[0].mxu0
        %423 = vmatprep.mubr.f32.mxu0 0.0
        %424 = vmatmul.mubr.f32.gmra.mrb[0].mxu0 %v299
        %v425 = vpop.f32.mrb[0].mxu0
        %v426 = vadd.f32 0.0, %v425
        %v427 = vpop.f32.mrb[0].mxu0
        %428 = vmatprep.mubr.f32.mxu0 0.0
        %429 = vmatmul.mubr.f32.gmra.mrb[0].mxu0 %v300
        %v430 = vpop.f32.mrb[0].mxu0
        %v431 = vadd.f32 0.0, %v430
        %v432 = vpop.f32.mrb[0].mxu0
        %433 = vmatprep.mubr.f32.mxu0 0.0
        %434 = vmatmul.mubr.f32.gmra.mrb[0].mxu0 %v301
        %v435 = vpop.f32.mrb[0].mxu0
        %v436 = vadd.f32 0.0, %v435
        %v437 = vpop.f32.mrb[0].mxu0
        %438 = vmatprep.mubr.f32.mxu0 0.0
        %439 = vmatmul.mubr.f32.gmra.mrb[0].mxu0 %v302
        %v440 = vpop.f32.mrb[0].mxu0
        %v441 = vadd.f32 0.0, %v440
        %v442 = vpop.f32.mrb[0].mxu0
        %443 = vmatprep.mubr.f32.mxu0 0.0
        %444 = vmatmul.mubr.f32.gmra.mrb[0].mxu0 %v303
        %v445 = vpop.f32.mrb[0].mxu0
        %v446 = vadd.f32 0.0, %v445
        %v447 = vpop.f32.mrb[0].mxu0
        %448 = vmatprep.mubr.f32.mxu0 0.0
        %449 = vmatmul.mubr.f32.gmra.mrb[0].mxu0 %v304
        %v450 = vpop.f32.mrb[0].mxu0
        %v451 = vadd.f32 0.0, %v450
        %v452 = vpop.f32.mrb[0].mxu0
        %453 = vmatprep.mubr.f32.mxu0 0.0
        %454 = vmatmul.mubr.f32.gmra.mrb[0].mxu0 %v305
        %v455 = vpop.f32.mrb[0].mxu0
        %v456 = vadd.f32 0.0, %v455
        %v457 = vpop.f32.mrb[0].mxu0
        %458 = vmatprep.mubr.f32.mxu0 0.0
        %459 = vmatmul.mubr.f32.gmra.mrb[0].mxu0 %v306
        %v460 = vpop.f32.mrb[0].mxu0
        %v461 = vadd.f32 0.0, %v460
        %v462 = vpop.f32.mrb[0].mxu0
        %463 = vmatprep.mubr.f32.mxu0 0.0
        %464 = vmatmul.mubr.f32.gmra.mrb[0].mxu0 %v307
        %v465 = vpop.f32.mrb[0].mxu0
        %v466 = vadd.f32 0.0, %v465
        %v467 = vpop.f32.mrb[0].mxu0
        %468 = vmatprep.mubr.f32.mxu0 0.0
        %469 = vmatmul.mubr.f32.gmra.mrb[0].mxu0 %v308
        %v470 = vpop.f32.mrb[0].mxu0
        %v471 = vadd.f32 0.0, %v470
        %v472 = vpop.f32.mrb[0].mxu0
        %473 = vmatprep.mubr.f32.mxu0 0.0
        %474 = vmatmul.mubr.f32.gmra.mrb[0].mxu0 %v309
        %v475 = vpop.f32.mrb[0].mxu0
        %v476 = vadd.f32 0.0, %v475
        %v477 = vpop.f32.mrb[0].mxu0
        %478 = vmatprep.mubr.f32.mxu0 0.0
        %479 = vmatmul.mubr.f32.gmra.mrb[0].mxu0 %v310
        %v480 = vpop.f32.mrb[0].mxu0
        %v481 = vadd.f32 0.0, %v480
        %v482 = vpop.f32.mrb[0].mxu0
        %483 = vmatprep.mubr.f32.mxu0 0.0
        %484 = vmatmul.mubr.f32.gmra.mrb[0].mxu0 %v311
        %v485 = vpop.f32.mrb[0].mxu0
        %v486 = vadd.f32 0.0, %v485
        %v487 = vpop.f32.mrb[0].mxu0
        %488 = vmatprep.mubr.f32.mxu0 0.0
        %489 = vmatmul.mubr.f32.gmra.mrb[0].mxu0 %v312
        %v490 = vpop.f32.mrb[0].mxu0
        %v491 = vadd.f32 0.0, %v490
        %v492 = vpop.f32.mrb[0].mxu0
        %493 = vmatprep.mubr.f32.mxu0 0.0
        %494 = vmatmul.mubr.f32.gmra.mrb[0].mxu0 %v313
        %v495 = vpop.f32.mrb[0].mxu0
        %v496 = vadd.f32 0.0, %v495
        %v497 = vpop.f32.mrb[0].mxu0
        %498 = vmatprep.mubr.f32.mxu0 0.0
        %499 = vmatmul.mubr.f32.gmra.mrb[0].mxu0 %v314
        %v500 = vpop.f32.mrb[0].mxu0
        %v501 = vadd.f32 0.0, %v500
        %v502 = vpop.f32.mrb[0].mxu0
        %503 = vmatprep.mubr.f32.mxu0 0.0
        %504 = vmatmul.mubr.f32.gmra.mrb[0].mxu0 %v315
        %v505 = vpop.f32.mrb[0].mxu0
        %v506 = vadd.f32 0.0, %v505
        %v507 = vpop.f32.mrb[0].mxu0
        %508 = vmatprep.mubr.f32.mxu0 0.0
        %509 = vmatmul.mubr.f32.gmra.mrb[0].mxu0 %v316
        %v510 = vpop.f32.mrb[0].mxu0
        %v511 = vadd.f32 0.0, %v510
        %v512 = vpop.f32.mrb[0].mxu0
        %513 = vmatprep.mubr.f32.mxu0 0.0
        %514 = vmatmul.mubr.f32.gmra.mrb[0].mxu0 %v317
        %v515 = vpop.f32.mrb[0].mxu0
        %v516 = vadd.f32 0.0, %v515
        %v517 = vpop.f32.mrb[0].mxu0
        %518 = vmatprep.mubr.f32.mxu0 0.0
        %519 = vmatmul.mubr.f32.gmra.mrb[0].mxu0 %v318
        %v520 = vpop.f32.mrb[0].mxu0
        %v521 = vadd.f32 0.0, %v520
        %v522 = vpop.f32.mrb[0].mxu0
        %523 = vmatprep.mubr.f32.mxu0 0.0
        %524 = vmatmul.mubr.f32.gmra.mrb[0].mxu0 %v319
        %v525 = vpop.f32.mrb[0].mxu0
        %v526 = vadd.f32 0.0, %v525
        %v527 = vpop.f32.mrb[0].mxu0
        %528 = vmatprep.mubr.f32.mxu0 0.0
        %529 = vmatmul.mubr.f32.gmra.mrb[0].mxu0 %v320
        %v530 = vpop.f32.mrb[0].mxu0
        %v531 = vadd.f32 0.0, %v530
        %v532 = vpop.f32.mrb[0].mxu0
        %533 = vmatprep.mubr.f32.mxu0 0.0
        %534 = vmatmul.mubr.f32.gmra.mrb[0].mxu0 %v321
        %v535 = vpop.f32.mrb[0].mxu0
        %v536 = vadd.f32 0.0, %v535
        %v537 = vpop.f32.mrb[0].mxu0
        %538 = vmatprep.mubr.f32.mxu0 0.0
        %539 = vmatmul.mubr.f32.gmra.mrb[0].mxu0 %v322
        %v540 = vpop.f32.mrb[0].mxu0
        %v541 = vadd.f32 0.0, %v540
        %v542 = vpop.f32.mrb[0].mxu0
        %543 = vmatprep.mubr.f32.mxu0 0.0
        %544 = vmatmul.mubr.f32.gmra.mrb[0].mxu0 %v323
        %v545 = vpop.f32.mrb[0].mxu0
        %v546 = vadd.f32 0.0, %v545
        %v547 = vpop.f32.mrb[0].mxu0
        %548 = vmatprep.mubr.f32.mxu0 0.0
        %549 = vmatmul.mubr.f32.gmra.mrb[0].mxu0 %v324
        %v550 = vpop.f32.mrb[0].mxu0
        %v551 = vadd.f32 0.0, %v550
        %v552 = vpop.f32.mrb[0].mxu0
        %553 = vmatprep.mubr.f32.mxu0 0.0
        %554 = vmatmul.mubr.f32.gmra.mrb[0].mxu0 %v325
        %v555 = vpop.f32.mrb[0].mxu0
        %v556 = vadd.f32 0.0, %v555
        %v557 = vpop.f32.mrb[0].mxu0
        %558 = vmatprep.mubr.f32.mxu0 0.0
        %559 = vmatmul.mubr.f32.gmra.mrb[0].mxu0 %v326
        %v560 = vpop.f32.mrb[0].mxu0
        %v561 = vadd.f32 0.0, %v560
        %v562 = vpop.f32.mrb[0].mxu0
        %563 = vmatprep.mubr.f32.mxu0 0.0
        %564 = vmatmul.mubr.f32.gmra.mrb[0].mxu0 %v327
        %v565 = vpop.f32.mrb[0].mxu0
        %v566 = vadd.f32 0.0, %v565
        %v567 = vpop.f32.mrb[0].mxu0
        %568 = vdwg.mxu0
        %v569 = vpack.c.bf16 %v416, %v411
        %v570 = vpack.c.bf16 %v426, %v421
        %v571 = vpack.c.bf16 %v436, %v431
        %v572 = vpack.c.bf16 %v446, %v441
        %v573 = vpack.c.bf16 %v456, %v451
        %v574 = vpack.c.bf16 %v466, %v461
        %v575 = vpack.c.bf16 %v476, %v471
        %v576 = vpack.c.bf16 %v486, %v481
        %v577 = vpack.c.bf16 %v496, %v491
        %v578 = vpack.c.bf16 %v506, %v501
        %v579 = vpack.c.bf16 %v516, %v511
        %v580 = vpack.c.bf16 %v526, %v521
        %v581 = vpack.c.bf16 %v536, %v531
        %v582 = vpack.c.bf16 %v546, %v541
        %v583 = vpack.c.bf16 %v556, %v551
        %v584 = vpack.c.bf16 %v566, %v561
        %v601 = vunpack.c.l.b16 %v569
        %v602 = vunpack.c.h.b16 %v569
        %v603 = vunpack.c.l.b16 %v570
        %v604 = vunpack.c.h.b16 %v570
        %v605 = vunpack.c.l.b16 %v571
        %v606 = vunpack.c.h.b16 %v571
        %v607 = vunpack.c.l.b16 %v572
        %v608 = vunpack.c.h.b16 %v572
        %v609 = vunpack.c.l.b16 %v573
        %v610 = vunpack.c.h.b16 %v573
        %v611 = vunpack.c.l.b16 %v574
        %v612 = vunpack.c.h.b16 %v574
        %v613 = vunpack.c.l.b16 %v575
        %v614 = vunpack.c.h.b16 %v575
        %v615 = vunpack.c.l.b16 %v576
        %v616 = vunpack.c.h.b16 %v576
        %v617 = vunpack.c.l.b16 %v577
        %v618 = vunpack.c.h.b16 %v577
        %v619 = vunpack.c.l.b16 %v578
        %v620 = vunpack.c.h.b16 %v578
        %v621 = vunpack.c.l.b16 %v579
        %v622 = vunpack.c.h.b16 %v579
        %v623 = vunpack.c.l.b16 %v580
        %v624 = vunpack.c.h.b16 %v580
        %v625 = vunpack.c.l.b16 %v581
        %v626 = vunpack.c.h.b16 %v581
        %v627 = vunpack.c.l.b16 %v582
        %v628 = vunpack.c.h.b16 %v582
        %v629 = vunpack.c.l.b16 %v583
        %v630 = vunpack.c.h.b16 %v583
        %v631 = vunpack.c.l.b16 %v584
        %v632 = vunpack.c.h.b16 %v584
        %v633 = vpack.c.b16 %v601, %v601
        %v634 = vpack.c.b16 %v602, %v602
        %v635 = vpack.c.b16 %v603, %v603
        %v636 = vpack.c.b16 %v604, %v604
        %v637 = vpack.c.b16 %v605, %v605
        %v638 = vpack.c.b16 %v606, %v606
        %v639 = vpack.c.b16 %v607, %v607
        %v640 = vpack.c.b16 %v608, %v608
        %v641 = vpack.c.b16 %v609, %v609
        %v642 = vpack.c.b16 %v610, %v610
        %v643 = vpack.c.b16 %v611, %v611
        %v644 = vpack.c.b16 %v612, %v612
        %v645 = vpack.c.b16 %v613, %v613
        %v646 = vpack.c.b16 %v614, %v614
        %v647 = vpack.c.b16 %v615, %v615
        %v648 = vpack.c.b16 %v616, %v616
        %v649 = vpack.c.b16 %v617, %v617
        %v650 = vpack.c.b16 %v618, %v618
        %v651 = vpack.c.b16 %v619, %v619
        %v652 = vpack.c.b16 %v620, %v620
        %v653 = vpack.c.b16 %v621, %v621
        %v654 = vpack.c.b16 %v622, %v622
        %v655 = vpack.c.b16 %v623, %v623
        %v656 = vpack.c.b16 %v624, %v624
        %v657 = vpack.c.b16 %v625, %v625
        %v658 = vpack.c.b16 %v626, %v626
        %v659 = vpack.c.b16 %v627, %v627
        %v660 = vpack.c.b16 %v628, %v628
        %v661 = vpack.c.b16 %v629, %v629
        %v662 = vpack.c.b16 %v630, %v630
        %v663 = vpack.c.b16 %v631, %v631
        %v664 = vpack.c.b16 %v632, %v632
        %697 = vst [vmem:[%s295] sm:$0xf] %v633
        %698 = vst [vmem:[%s295 + $0x4] sm:$0xf] %v634
        %699 = vst [vmem:[%s295 + $0x8] sm:$0xf] %v635
        %700 = vst [vmem:[%s295 + $0xc] sm:$0xf] %v636
        %701 = vst [vmem:[%s295 + $0x10] sm:$0xf] %v637
        %702 = vst [vmem:[%s295 + $0x14] sm:$0xf] %v638
        %703 = vst [vmem:[%s295 + $0x18] sm:$0xf] %v639
        %704 = vst [vmem:[%s295 + $0x1c] sm:$0xf] %v640
        %705 = vst [vmem:[%s295 + $0x20] sm:$0xf] %v641
        %706 = vst [vmem:[%s295 + $0x24] sm:$0xf] %v642
        %707 = vst [vmem:[%s295 + $0x28] sm:$0xf] %v643
        %708 = vst [vmem:[%s295 + $0x2c] sm:$0xf] %v644
        %709 = vst [vmem:[%s295 + $0x30] sm:$0xf] %v645
        %710 = vst [vmem:[%s295 + $0x34] sm:$0xf] %v646
        %711 = vst [vmem:[%s295 + $0x38] sm:$0xf] %v647
        %712 = vst [vmem:[%s295 + $0x3c] sm:$0xf] %v648
        %713 = vst [vmem:[%s295 + $0x40] sm:$0xf] %v649
        %714 = vst [vmem:[%s295 + $0x44] sm:$0xf] %v650
        %715 = vst [vmem:[%s295 + $0x48] sm:$0xf] %v651
        %716 = vst [vmem:[%s295 + $0x4c] sm:$0xf] %v652
        %717 = vst [vmem:[%s295 + $0x50] sm:$0xf] %v653
        %718 = vst [vmem:[%s295 + $0x54] sm:$0xf] %v654
        %719 = vst [vmem:[%s295 + $0x58] sm:$0xf] %v655
        %720 = vst [vmem:[%s295 + $0x5c] sm:$0xf] %v656
        %721 = vst [vmem:[%s295 + $0x60] sm:$0xf] %v657
        %722 = vst [vmem:[%s295 + $0x64] sm:$0xf] %v658
        %723 = vst [vmem:[%s295 + $0x68] sm:$0xf] %v659
        %724 = vst [vmem:[%s295 + $0x6c] sm:$0xf] %v660
        %725 = vst [vmem:[%s295 + $0x70] sm:$0xf] %v661
        %726 = vst [vmem:[%s295 + $0x74] sm:$0xf] %v662
        %727 = vst [vmem:[%s295 + $0x78] sm:$0xf] %v663
        %728 = vst [vmem:[%s295 + $0x7c] sm:$0xf] %v664
        %s729 = sand.u32 %s68, 1
        %s730 = sand.u32 %s68, 1
        %s731 = smul.addr %s730, 128
        %s732 = scalar_lea.vmem [#allocation3], %s731
        // Predicated region
        $region67: #{dgi1_forward.8} parent=61 // pred_check
          %p733 = pneg %p78
        $region68: #{dgi1_forward.8} parent=61 // pred_check_branch
          %735 = sbr.rel (%p733) target = $region70
        $region69: #{dgi1_forward.8} parent=61 // pred_region
          %s736 = smul.addr %s13, 4
          %s737 = scalar_lea.vmem %s2, %s736
          // Predicated region
          $region71: #{dgi1_forward.8} parent=69 // pred_check
            _
          $region72: #{dgi1_forward.8} parent=69 // pred_check_branch
            %739 = sbr.rel (0) target = $region74
          $region73: #{dgi1_forward.8} parent=69 // pred_region
            // Predicated region
            $region75: #{dgi1_forward.8} parent=73 // pred_check
              _
            $region76: #{dgi1_forward.8} parent=73 // pred_check_branch
              %741 = sbr.rel target = $region78
            $region77: #{dgi1_forward.8} parent=73 // pred_region
              // Predicated region
              $region90: #{dgi1_forward.8} parent=77 // pred_check
                _
              $region91: #{dgi1_forward.8} parent=77 // pred_check_branch
                %818 = sbr.rel (0) target = $region93
              $region92: #{dgi1_forward.8} parent=77 // pred_region
                loop: start=0, step=1, limit=1
                $region94: #{dgi1_forward.8} parent=92 // loop_pre_header
                  _
                $region95: #{dgi1_forward.8} parent=92 // loop_header
                  %s820 = sphi 0, %s824
                  %p821 = scmp.ge.s32.totalorder %s820, 1
                  %s825 = sphi %s732, %s732
                  %s826 = sphi %s737, %s737
                $region96: #{dgi1_forward.8} parent=92 // loop_header_branch
                  %823 = sbr.rel (%p821) target = $region100
                $region97: #{dgi1_forward.8} parent=92 // loop_body
                  _
                $region98: #{dgi1_forward.8} parent=92 // loop_footer
                  %s824 = sadd.s32 1, %s820
                $region99: #{dgi1_forward.8} parent=92 // loop_footer_branch
                  %819 = sbr.rel target = $region95
                $region100: #{dgi1_forward.8} parent=92 // loop_exit
                  _
                loop: start=0, step=1, limit=1
                $region101: #{dgi1_forward.8} parent=92 // loop_pre_header
                  _
                $region102: #{dgi1_forward.8} parent=92 // loop_header
                  %s829 = sphi 0, %s833
                  %p830 = scmp.ge.s32.totalorder %s829, 1
                  %s834 = sphi %s732, %s732
                  %s835 = sphi %s737, %s737
                $region103: #{dgi1_forward.8} parent=92 // loop_header_branch
                  %832 = sbr.rel (%p830) target = $region107
                $region104: #{dgi1_forward.8} parent=92 // loop_body
                  %v836 = vld [vmem:[%s834] sm:$0xf]
                  %837 = vst [vmem:[%s835] sm:$0xf] %v836
                  %v838 = vld [vmem:[%s834 + $0x4] sm:$0xf]
                  %839 = vst [vmem:[%s835 + $0x8] sm:$0xf] %v838
                  %v840 = vld [vmem:[%s834 + $0x8] sm:$0xf]
                  %841 = vst [vmem:[%s835 + $0x10] sm:$0xf] %v840
                  %v842 = vld [vmem:[%s834 + $0xc] sm:$0xf]
                  %843 = vst [vmem:[%s835 + $0x18] sm:$0xf] %v842
                  %v844 = vld [vmem:[%s834 + $0x10] sm:$0xf]
                  %845 = vst [vmem:[%s835 + $0x20] sm:$0xf] %v844
                  %v846 = vld [vmem:[%s834 + $0x14] sm:$0xf]
                  %847 = vst [vmem:[%s835 + $0x28] sm:$0xf] %v846
                  %v848 = vld [vmem:[%s834 + $0x18] sm:$0xf]
                  %849 = vst [vmem:[%s835 + $0x30] sm:$0xf] %v848
                  %v850 = vld [vmem:[%s834 + $0x1c] sm:$0xf]
                  %851 = vst [vmem:[%s835 + $0x38] sm:$0xf] %v850
                  %v852 = vld [vmem:[%s834 + $0x20] sm:$0xf]
                  %853 = vst [vmem:[%s835 + $0x40] sm:$0xf] %v852
                  %v854 = vld [vmem:[%s834 + $0x24] sm:$0xf]
                  %855 = vst [vmem:[%s835 + $0x48] sm:$0xf] %v854
                  %v856 = vld [vmem:[%s834 + $0x28] sm:$0xf]
                  %857 = vst [vmem:[%s835 + $0x50] sm:$0xf] %v856
                  %v858 = vld [vmem:[%s834 + $0x2c] sm:$0xf]
                  %859 = vst [vmem:[%s835 + $0x58] sm:$0xf] %v858
                  %v860 = vld [vmem:[%s834 + $0x30] sm:$0xf]
                  %861 = vst [vmem:[%s835 + $0x60] sm:$0xf] %v860
                  %v862 = vld [vmem:[%s834 + $0x34] sm:$0xf]
                  %863 = vst [vmem:[%s835 + $0x68] sm:$0xf] %v862
                  %v864 = vld [vmem:[%s834 + $0x38] sm:$0xf]
                  %865 = vst [vmem:[%s835 + $0x70] sm:$0xf] %v864
                  %v866 = vld [vmem:[%s834 + $0x3c] sm:$0xf]
                  %867 = vst [vmem:[%s835 + $0x78] sm:$0xf] %v866
                  %v868 = vld [vmem:[%s834 + $0x40] sm:$0xf]
                  %869 = vst [vmem:[%s835 + $0x80] sm:$0xf] %v868
                  %v870 = vld [vmem:[%s834 + $0x44] sm:$0xf]
                  %871 = vst [vmem:[%s835 + $0x88] sm:$0xf] %v870
                  %v872 = vld [vmem:[%s834 + $0x48] sm:$0xf]
                  %873 = vst [vmem:[%s835 + $0x90] sm:$0xf] %v872
                  %v874 = vld [vmem:[%s834 + $0x4c] sm:$0xf]
                  %875 = vst [vmem:[%s835 + $0x98] sm:$0xf] %v874
                  %v876 = vld [vmem:[%s834 + $0x50] sm:$0xf]
                  %877 = vst [vmem:[%s835 + $0xa0] sm:$0xf] %v876
                  %v878 = vld [vmem:[%s834 + $0x54] sm:$0xf]
                  %879 = vst [vmem:[%s835 + $0xa8] sm:$0xf] %v878
                  %v880 = vld [vmem:[%s834 + $0x58] sm:$0xf]
                  %881 = vst [vmem:[%s835 + $0xb0] sm:$0xf] %v880
                  %v882 = vld [vmem:[%s834 + $0x5c] sm:$0xf]
                  %883 = vst [vmem:[%s835 + $0xb8] sm:$0xf] %v882
                  %v884 = vld [vmem:[%s834 + $0x60] sm:$0xf]
                  %885 = vst [vmem:[%s835 + $0xc0] sm:$0xf] %v884
                  %v886 = vld [vmem:[%s834 + $0x64] sm:$0xf]
                  %887 = vst [vmem:[%s835 + $0xc8] sm:$0xf] %v886
                  %v888 = vld [vmem:[%s834 + $0x68] sm:$0xf]
                  %889 = vst [vmem:[%s835 + $0xd0] sm:$0xf] %v888
                  %v890 = vld [vmem:[%s834 + $0x6c] sm:$0xf]
                  %891 = vst [vmem:[%s835 + $0xd8] sm:$0xf] %v890
                  %v892 = vld [vmem:[%s834 + $0x70] sm:$0xf]
                  %893 = vst [vmem:[%s835 + $0xe0] sm:$0xf] %v892
                  %v894 = vld [vmem:[%s834 + $0x74] sm:$0xf]
                  %895 = vst [vmem:[%s835 + $0xe8] sm:$0xf] %v894
                  %v896 = vld [vmem:[%s834 + $0x78] sm:$0xf]
                  %897 = vst [vmem:[%s835 + $0xf0] sm:$0xf] %v896
                  %v898 = vld [vmem:[%s834 + $0x7c] sm:$0xf]
                  %899 = vst [vmem:[%s835 + $0xf8] sm:$0xf] %v898
                $region105: #{dgi1_forward.8} parent=92 // loop_footer
                  %s833 = sadd.s32 1, %s829
                $region106: #{dgi1_forward.8} parent=92 // loop_footer_branch
                  %828 = sbr.rel target = $region102
                $region107: #{dgi1_forward.8} parent=92 // loop_exit
                  _
              $region93: #{dgi1_forward.8} parent=77 // pred_fallthru
                _
            $region78: #{dgi1_forward.8} parent=73 // pred_fallthru
              _
            // Predicated region
            $region79: #{dgi1_forward.8} parent=73 // pred_check
              _
            $region80: #{dgi1_forward.8} parent=73 // pred_check_branch
              %743 = sbr.rel (0) target = $region82
            $region81: #{dgi1_forward.8} parent=73 // pred_region
              loop: start=0, step=1, limit=1
              $region83: #{dgi1_forward.8} parent=81 // loop_pre_header
                _
              $region84: #{dgi1_forward.8} parent=81 // loop_header
                %s746 = sphi 0, %s750
                %p747 = scmp.ge.s32.totalorder %s746, 1
                %s751 = sphi %s732, %s732
                %s752 = sphi %s737, %s737
              $region85: #{dgi1_forward.8} parent=81 // loop_header_branch
                %749 = sbr.rel (%p747) target = $region89
              $region86: #{dgi1_forward.8} parent=81 // loop_body
                %v753 = vld [vmem:[%s751] sm:$0xf]
                %754 = vst [vmem:[%s752] sm:$0xf] %v753
                %v755 = vld [vmem:[%s751 + $0x4] sm:$0xf]
                %756 = vst [vmem:[%s752 + $0x8] sm:$0xf] %v755
                %v757 = vld [vmem:[%s751 + $0x8] sm:$0xf]
                %758 = vst [vmem:[%s752 + $0x10] sm:$0xf] %v757
                %v759 = vld [vmem:[%s751 + $0xc] sm:$0xf]
                %760 = vst [vmem:[%s752 + $0x18] sm:$0xf] %v759
                %v761 = vld [vmem:[%s751 + $0x10] sm:$0xf]
                %762 = vst [vmem:[%s752 + $0x20] sm:$0xf] %v761
                %v763 = vld [vmem:[%s751 + $0x14] sm:$0xf]
                %764 = vst [vmem:[%s752 + $0x28] sm:$0xf] %v763
                %v765 = vld [vmem:[%s751 + $0x18] sm:$0xf]
                %766 = vst [vmem:[%s752 + $0x30] sm:$0xf] %v765
                %v767 = vld [vmem:[%s751 + $0x1c] sm:$0xf]
                %768 = vst [vmem:[%s752 + $0x38] sm:$0xf] %v767
                %v769 = vld [vmem:[%s751 + $0x20] sm:$0xf]
                %770 = vst [vmem:[%s752 + $0x40] sm:$0xf] %v769
                %v771 = vld [vmem:[%s751 + $0x24] sm:$0xf]
                %772 = vst [vmem:[%s752 + $0x48] sm:$0xf] %v771
                %v773 = vld [vmem:[%s751 + $0x28] sm:$0xf]
                %774 = vst [vmem:[%s752 + $0x50] sm:$0xf] %v773
                %v775 = vld [vmem:[%s751 + $0x2c] sm:$0xf]
                %776 = vst [vmem:[%s752 + $0x58] sm:$0xf] %v775
                %v777 = vld [vmem:[%s751 + $0x30] sm:$0xf]
                %778 = vst [vmem:[%s752 + $0x60] sm:$0xf] %v777
                %v779 = vld [vmem:[%s751 + $0x34] sm:$0xf]
                %780 = vst [vmem:[%s752 + $0x68] sm:$0xf] %v779
                %v781 = vld [vmem:[%s751 + $0x38] sm:$0xf]
                %782 = vst [vmem:[%s752 + $0x70] sm:$0xf] %v781
                %v783 = vld [vmem:[%s751 + $0x3c] sm:$0xf]
                %784 = vst [vmem:[%s752 + $0x78] sm:$0xf] %v783
                %v785 = vld [vmem:[%s751 + $0x40] sm:$0xf]
                %786 = vst [vmem:[%s752 + $0x80] sm:$0xf] %v785
                %v787 = vld [vmem:[%s751 + $0x44] sm:$0xf]
                %788 = vst [vmem:[%s752 + $0x88] sm:$0xf] %v787
                %v789 = vld [vmem:[%s751 + $0x48] sm:$0xf]
                %790 = vst [vmem:[%s752 + $0x90] sm:$0xf] %v789
                %v791 = vld [vmem:[%s751 + $0x4c] sm:$0xf]
                %792 = vst [vmem:[%s752 + $0x98] sm:$0xf] %v791
                %v793 = vld [vmem:[%s751 + $0x50] sm:$0xf]
                %794 = vst [vmem:[%s752 + $0xa0] sm:$0xf] %v793
                %v795 = vld [vmem:[%s751 + $0x54] sm:$0xf]
                %796 = vst [vmem:[%s752 + $0xa8] sm:$0xf] %v795
                %v797 = vld [vmem:[%s751 + $0x58] sm:$0xf]
                %798 = vst [vmem:[%s752 + $0xb0] sm:$0xf] %v797
                %v799 = vld [vmem:[%s751 + $0x5c] sm:$0xf]
                %800 = vst [vmem:[%s752 + $0xb8] sm:$0xf] %v799
                %v801 = vld [vmem:[%s751 + $0x60] sm:$0xf]
                %802 = vst [vmem:[%s752 + $0xc0] sm:$0xf] %v801
                %v803 = vld [vmem:[%s751 + $0x64] sm:$0xf]
                %804 = vst [vmem:[%s752 + $0xc8] sm:$0xf] %v803
                %v805 = vld [vmem:[%s751 + $0x68] sm:$0xf]
                %806 = vst [vmem:[%s752 + $0xd0] sm:$0xf] %v805
                %v807 = vld [vmem:[%s751 + $0x6c] sm:$0xf]
                %808 = vst [vmem:[%s752 + $0xd8] sm:$0xf] %v807
                %v809 = vld [vmem:[%s751 + $0x70] sm:$0xf]
                %810 = vst [vmem:[%s752 + $0xe0] sm:$0xf] %v809
                %v811 = vld [vmem:[%s751 + $0x74] sm:$0xf]
                %812 = vst [vmem:[%s752 + $0xe8] sm:$0xf] %v811
                %v813 = vld [vmem:[%s751 + $0x78] sm:$0xf]
                %814 = vst [vmem:[%s752 + $0xf0] sm:$0xf] %v813
                %v815 = vld [vmem:[%s751 + $0x7c] sm:$0xf]
                %816 = vst [vmem:[%s752 + $0xf8] sm:$0xf] %v815
              $region87: #{dgi1_forward.8} parent=81 // loop_footer
                %s750 = sadd.s32 1, %s746
              $region88: #{dgi1_forward.8} parent=81 // loop_footer_branch
                %745 = sbr.rel target = $region84
              $region89: #{dgi1_forward.8} parent=81 // loop_exit
                _
            $region82: #{dgi1_forward.8} parent=73 // pred_fallthru
              _
          $region74: #{dgi1_forward.8} parent=69 // pred_fallthru
            _
          %900 = vnop
        $region70: #{dgi1_forward.8} parent=61 // pred_fallthru
          _
      $region62: #{dgi1_forward.8} parent=5 // pred_fallthru
        _
      %p901 = scmp.le.s32.totalorder 2, %s8
      // Predicated region
      $region108: #{dgi1_forward.8} parent=5 // pred_check
        %p902 = pneg %p901
      $region109: #{dgi1_forward.8} parent=5 // pred_check_branch
        %904 = sbr.rel (%p902) target = $region111
      $region110: #{dgi1_forward.8} parent=5 // pred_region
        %s905 = ssub.s32 %s8, 2
        // Predicated region
        $region112: #{dgi1_forward.8} parent=110 // pred_check
          %p906 = pneg %p84
        $region113: #{dgi1_forward.8} parent=110 // pred_check_branch
          %908 = sbr.rel (%p906) target = $region115
        $region114: #{dgi1_forward.8} parent=110 // pred_region
          %s909 = sand.u32 %s69, 1
          %s910 = sand.u32 %s69, 1
          %s911 = smul.addr %s910, 128
          %s912 = scalar_lea.vmem [#allocation3], %s911
        $region115: #{dgi1_forward.8} parent=110 // pred_fallthru
          _
      $region111: #{dgi1_forward.8} parent=5 // pred_fallthru
        _
    $region6: #{dgi1_forward.8} parent=1 // loop_footer
      %s12 = sadd.s32 1, %s8
    $region7: #{dgi1_forward.8} parent=1 // loop_footer_branch
      %7 = sbr.rel target = $region3
    $region8: #{dgi1_forward.8} parent=1 // loop_exit
      _

// kernel: dgi1_forward.6
$region0: #{dgi1_forward.6}
  #allocation0 [shape = 'u32[]', space=smem, size = 0x4, offset = 0x4, fixed_abs, tag = 'smem constant byte address 0x4 - core index']
  #allocation1 [shape = 'u32[144,128]{1,0:T(1,128)}', space=vmem, size = 0x12000, scoped, tag = 'internal scratch']
  %s0 = inlined_call_operand.vmem [shape: f32[2,256,16], index: 0, kind: input, shape index: {}]
  %s1 = inlined_call_operand.vmem [shape: f32[16,128], index: 1, kind: input, shape index: {}]
  %s2 = inlined_call_operand.vmem [shape: bf16[256,256], index: 2, kind: output, shape index: {}]
  %s3 = sld [smem:[#allocation0]]
  $region78: #{dgi1_forward.6} parent=0
    _
  %s5 = ssub.s32 1, %s3
  %s6 = scalar_select 0, %s5, %s3
  $region1: #{dgi1_forward.6} parent=0
    #allocation2 [shape = 'u8[131072]{0}', space=vmem, size = 0x20000, scoped, tag = 'output window, operand 0']
    loop: start=0, step=1, limit=4
    $region2: #{dgi1_forward.6} parent=1 // loop_pre_header
      _
    $region3: #{dgi1_forward.6} parent=1 // loop_header
      %s8 = sphi 0, %s12
      %p9 = scmp.ge.s32.totalorder %s8, 4
      %s18 = sphi 0, %s20
      %s21 = sphi 0, %s18
      %s22 = sphi 0, %s21
      %s38 = sphi 0, %s22
      %s42 = sphi 0, %s42
      %s44 = sphi 0, %s42
      %s45 = sphi 0, %s44
      %s59 = sphi 0, %s45
      %s65 = sphi 0, %s67
      %s68 = sphi 0, %s65
      %s69 = sphi 0, %s68
      %s85 = sphi 0, %s69
    $region4: #{dgi1_forward.6} parent=1 // loop_header_branch
      %11 = sbr.rel (%p9) target = $region8
    $region5: #{dgi1_forward.6} parent=1 // loop_body
      %s13 = ssub.s32 %s8, 1
      %s14 = ssub.s32 %s8, 2
      %s15 = sadd.s32 %s8, 1
      %s16 = ssub.s32 %s8, %s15
      %p17 = scmp.eq.s32.totalorder %s16, 0
      %s19 = sadd.s32 %s18, 1
      %s20 = scalar_select %p17, %s18, %s19
      %p23 = pneg %p17
      %p24 = scmp.eq.s32.totalorder %s8, 1
      %p25 = por %p23, %p24
      %p26 = scmp.ne.s32.totalorder %s18, %s21
      %p27 = scmp.eq.s32.totalorder %s8, 0
      %p28 = por %p26, %p27
      %p29 = scmp.ne.s32.totalorder %s18, %s21
      %p30 = scmp.eq.s32.totalorder %s13, 1
      %p31 = por %p29, %p30
      %p32 = scmp.ne.s32.totalorder %s21, %s22
      %p33 = scmp.eq.s32.totalorder %s13, 0
      %p34 = por %p32, %p33
      %p35 = scmp.ne.s32.totalorder %s21, %s22
      %p36 = scmp.eq.s32.totalorder %s14, 1
      %p37 = por %p35, %p36
      %p39 = scmp.ne.s32.totalorder %s22, %s38
      %p40 = scmp.eq.s32.totalorder %s14, 0
      %p41 = por %p39, %p40
      %s43 = sadd.s32 %s42, 1
      %p46 = scmp.eq.s32.totalorder %s8, 1
      %p47 = scmp.ne.s32.totalorder %s42, %s44
      %p48 = scmp.eq.s32.totalorder %s8, 0
      %p49 = por %p47, %p48
      %p50 = scmp.ne.s32.totalorder %s42, %s44
      %p51 = scmp.eq.s32.totalorder %s13, 1
      %p52 = por %p50, %p51
      %p53 = scmp.ne.s32.totalorder %s44, %s45
      %p54 = scmp.eq.s32.totalorder %s13, 0
      %p55 = por %p53, %p54
      %p56 = scmp.ne.s32.totalorder %s44, %s45
      %p57 = scmp.eq.s32.totalorder %s14, 1
      %p58 = por %p56, %p57
      %p60 = scmp.ne.s32.totalorder %s45, %s59
      %p61 = scmp.eq.s32.totalorder %s14, 0
      %p62 = por %p60, %p61
      %s63 = ssub.s32 %s8, %s15
      %p64 = scmp.eq.s32.totalorder %s63, 0
      %s66 = sadd.s32 %s65, 1
      %s67 = scalar_select %p64, %s65, %s66
      %p70 = pneg %p64
      %p71 = scmp.eq.s32.totalorder %s8, 1
      %p72 = por %p70, %p71
      %p73 = scmp.ne.s32.totalorder %s65, %s68
      %p74 = scmp.eq.s32.totalorder %s8, 0
      %p75 = por %p73, %p74
      %p76 = scmp.ne.s32.totalorder %s65, %s68
      %p77 = scmp.eq.s32.totalorder %s13, 1
      %p78 = por %p76, %p77
      %p79 = scmp.ne.s32.totalorder %s68, %s69
      %p80 = scmp.eq.s32.totalorder %s13, 0
      %p81 = por %p79, %p80
      %p82 = scmp.ne.s32.totalorder %s68, %s69
      %p83 = scmp.eq.s32.totalorder %s14, 1
      %p84 = por %p82, %p83
      %p86 = scmp.ne.s32.totalorder %s69, %s85
      %p87 = scmp.eq.s32.totalorder %s14, 0
      %p88 = por %p86, %p87
      %p89 = scmp.le.s32.totalorder 1, %s8
      %p90 = scmp.lt.s32.totalorder %s8, 3
      %p91 = pnand %p89, %p90
      %p92 = pneg %p91
      // Predicated region
      $region9: #{dgi1_forward.6} parent=5 // pred_check
        _
      $region10: #{dgi1_forward.6} parent=5 // pred_check_branch
        %94 = sbr.rel (%p91) target = $region12
      $region11: #{dgi1_forward.6} parent=5 // pred_region
        %s95 = ssub.s32 %s8, 1
        // Predicated region
        $region13: #{dgi1_forward.6} parent=11 // pred_check
          %p96 = pneg %p55
        $region14: #{dgi1_forward.6} parent=11 // pred_check_branch
          %98 = sbr.rel (%p96) target = $region16
        $region15: #{dgi1_forward.6} parent=11 // pred_region
          _
        $region16: #{dgi1_forward.6} parent=11 // pred_fallthru
          _
      $region12: #{dgi1_forward.6} parent=5 // pred_fallthru
        _
      %p99 = scmp.lt.s32.totalorder %s8, 2
      // Predicated region
      $region17: #{dgi1_forward.6} parent=5 // pred_check
        %p100 = pneg %p99
      $region18: #{dgi1_forward.6} parent=5 // pred_check_branch
        %102 = sbr.rel (%p100) target = $region20
      $region19: #{dgi1_forward.6} parent=5 // pred_region
        // Predicated region
        $region21: #{dgi1_forward.6} parent=19 // pred_check
          %p103 = pneg %p28
        $region22: #{dgi1_forward.6} parent=19 // pred_check_branch
          %105 = sbr.rel (%p103) target = $region24
        $region23: #{dgi1_forward.6} parent=19 // pred_region
          %p106 = scmp.lt.s32.totalorder %s8, 1
          %s107 = scalar_select %p106, %s8, 1
          %s108 = smul.addr %s107, 32
          %s109 = smul.addr %s108, 8
          %s110 = scalar_lea.vmem %s0, %s109
        $region24: #{dgi1_forward.6} parent=19 // pred_fallthru
          _
      $region20: #{dgi1_forward.6} parent=5 // pred_fallthru
        _
      %p111 = scmp.le.s32.totalorder 1, %s8
      %p112 = scmp.lt.s32.totalorder %s8, 3
      %p113 = pnand %p111, %p112
      %p114 = pneg %p113
      // Predicated region
      $region25: #{dgi1_forward.6} parent=5 // pred_check
        _
      $region26: #{dgi1_forward.6} parent=5 // pred_check_branch
        %116 = sbr.rel (%p113) target = $region28
      $region27: #{dgi1_forward.6} parent=5 // pred_region
        %s117 = ssub.s32 %s8, 1
        %p118 = scmp.lt.s32.totalorder %s13, 1
        %s119 = scalar_select %p118, %s13, 1
        %s120 = smul.addr %s119, 32
        %s121 = smul.addr %s120, 8
        %s122 = scalar_lea.vmem %s0, %s121
        %p123 = pneg %p34
        %p124 = pneg %p31
        %p125 = pneg %p55
        %p126 = pneg %p52
        %p127 = pneg %p81
        %p128 = pneg %p78
        %s129 = sand.u32 %s68, 1
        %s130 = sand.u32 %s68, 1
        %s131 = smul.addr %s130, 128
        %s132 = scalar_lea.vmem [#allocation2], %s131
        %p133 = scmp.lt.s32.totalorder %s13, 1
        %s134 = scalar_select %p133, %s13, 1
        %s135 = smul.addr %s134, 32
        %s136 = smul.addr %s135, 8
        %s137 = scalar_lea.vmem %s0, %s136
        %v138 = vld [vmem:[%s137] sm:$0xff]
        %v139 = vld [vmem:[%s137 + $0x8] sm:$0xff]
        %v140 = vld [vmem:[%s137 + $0x10] sm:$0xff]
        %v141 = vld [vmem:[%s137 + $0x18] sm:$0xff]
        %v142 = vld [vmem:[%s137 + $0x20] sm:$0xff]
        %v143 = vld [vmem:[%s137 + $0x28] sm:$0xff]
        %v144 = vld [vmem:[%s137 + $0x30] sm:$0xff]
        %v145 = vld [vmem:[%s137 + $0x38] sm:$0xff]
        %v146 = vld [vmem:[%s137 + $0x40] sm:$0xff]
        %v147 = vld [vmem:[%s137 + $0x48] sm:$0xff]
        %v148 = vld [vmem:[%s137 + $0x50] sm:$0xff]
        %v149 = vld [vmem:[%s137 + $0x58] sm:$0xff]
        %v150 = vld [vmem:[%s137 + $0x60] sm:$0xff]
        %v151 = vld [vmem:[%s137 + $0x68] sm:$0xff]
        %v152 = vld [vmem:[%s137 + $0x70] sm:$0xff]
        %v153 = vld [vmem:[%s137 + $0x78] sm:$0xff]
        %v154 = vld [vmem:[%s137 + $0x80] sm:$0xff]
        %v155 = vld [vmem:[%s137 + $0x88] sm:$0xff]
        %v156 = vld [vmem:[%s137 + $0x90] sm:$0xff]
        %v157 = vld [vmem:[%s137 + $0x98] sm:$0xff]
        %v158 = vld [vmem:[%s137 + $0xa0] sm:$0xff]
        %v159 = vld [vmem:[%s137 + $0xa8] sm:$0xff]
        %v160 = vld [vmem:[%s137 + $0xb0] sm:$0xff]
        %v161 = vld [vmem:[%s137 + $0xb8] sm:$0xff]
        %v162 = vld [vmem:[%s137 + $0xc0] sm:$0xff]
        %v163 = vld [vmem:[%s137 + $0xc8] sm:$0xff]
        %v164 = vld [vmem:[%s137 + $0xd0] sm:$0xff]
        %v165 = vld [vmem:[%s137 + $0xd8] sm:$0xff]
        %v166 = vld [vmem:[%s137 + $0xe0] sm:$0xff]
        %v167 = vld [vmem:[%s137 + $0xe8] sm:$0xff]
        %v168 = vld [vmem:[%s137 + $0xf0] sm:$0xff]
        %v169 = vld [vmem:[%s137 + $0xf8] sm:$0xff]
        %v170 = vld [vmem:[%s1] sm:$0xff]
        %v171 = vld [vmem:[%s1 + $0x8] sm:$0xff]
        %vm172 = vcmask 130048
        %v174 = vsel %vm172, %v138, 0
        %v177 = vsel %vm172, %v139, 0
        %v180 = vsel %vm172, %v140, 0
        %v183 = vsel %vm172, %v141, 0
        %v186 = vsel %vm172, %v142, 0
        %v189 = vsel %vm172, %v143, 0
        %v192 = vsel %vm172, %v144, 0
        %v195 = vsel %vm172, %v145, 0
        %v198 = vsel %vm172, %v146, 0
        %v201 = vsel %vm172, %v147, 0
        %v204 = vsel %vm172, %v148, 0
        %v207 = vsel %vm172, %v149, 0
        %v210 = vsel %vm172, %v150, 0
        %v213 = vsel %vm172, %v151, 0
        %v216 = vsel %vm172, %v152, 0
        %v219 = vsel %vm172, %v153, 0
        %v222 = vsel %vm172, %v154, 0
        %v225 = vsel %vm172, %v155, 0
        %v228 = vsel %vm172, %v156, 0
        %v231 = vsel %vm172, %v157, 0
        %v234 = vsel %vm172, %v158, 0
        %v237 = vsel %vm172, %v159, 0
        %v240 = vsel %vm172, %v160, 0
        %v243 = vsel %vm172, %v161, 0
        %v246 = vsel %vm172, %v162, 0
        %v249 = vsel %vm172, %v163, 0
        %v252 = vsel %vm172, %v164, 0
        %v255 = vsel %vm172, %v165, 0
        %v258 = vsel %vm172, %v166, 0
        %v261 = vsel %vm172, %v167, 0
        %v264 = vsel %vm172, %v168, 0
        %v267 = vsel %vm172, %v169, 0
        %269 = vmatprep.subr.mxu0 0.0
        %270 = vmatpush1.msra.mxu0 %v170
        %271 = vmatprep.subr.mxu0 0.0
        %272 = vmatpush1.msra.mxu0 %v171
        %273 = vmatprep.subr.mxu0 0.0
        %274 = vmatpush1.msra.mxu0 0.0
        %275 = vmatprep.subr.mxu0 0.0
        %276 = vmatpush1.msra.mxu0 0.0
        %277 = vmatprep.subr.mxu0 0.0
        %278 = vmatpush1.msra.mxu0 0.0
        %279 = vmatprep.subr.mxu0 0.0
        %280 = vmatpush1.msra.mxu0 0.0
        %281 = vmatprep.subr.mxu0 0.0
        %282 = vmatpush1.msra.mxu0 0.0
        %283 = vmatprep.subr.mxu0 0.0
        %284 = vmatpush1.msra.mxu0 0.0
        %285 = vmatprep.subr.mxu0 0.0
        %286 = vmatpush1.msra.mxu0 0.0
        %287 = vmatprep.subr.mxu0 0.0
        %288 = vmatpush1.msra.mxu0 0.0
        %289 = vmatprep.subr.mxu0 0.0
        %290 = vmatpush1.msra.mxu0 0.0
        %291 = vmatprep.subr.mxu0 0.0
        %292 = vmatpush1.msra.mxu0 0.0
        %293 = vmatprep.subr.mxu0 0.0
        %294 = vmatpush1.msra.mxu0 0.0
        %295 = vmatprep.subr.mxu0 0.0
        %296 = vmatpush1.msra.mxu0 0.0
        %297 = vmatprep.subr.mxu0 0.0
        %298 = vmatpush1.msra.mxu0 0.0
        %299 = vmatprep.subr.mxu0 0.0
        %300 = vmatpush1.msra.mxu0 0.0
        %301 = vmatprep.subr.mxu0 0.0
        %302 = vmatpush1.msra.mxu0 0.0
        %303 = vmatprep.subr.mxu0 0.0
        %304 = vmatpush1.msra.mxu0 0.0
        %305 = vmatprep.subr.mxu0 0.0
        %306 = vmatpush1.msra.mxu0 0.0
        %307 = vmatprep.subr.mxu0 0.0
        %308 = vmatpush1.msra.mxu0 0.0
        %309 = vmatprep.subr.mxu0 0.0
        %310 = vmatpush1.msra.mxu0 0.0
        %311 = vmatprep.subr.mxu0 0.0
        %312 = vmatpush1.msra.mxu0 0.0
        %313 = vmatprep.subr.mxu0 0.0
        %314 = vmatpush1.msra.mxu0 0.0
        %315 = vmatprep.subr.mxu0 0.0
        %316 = vmatpush1.msra.mxu0 0.0
        %317 = vmatprep.subr.mxu0 0.0
        %318 = vmatpush1.msra.mxu0 0.0
        %319 = vmatprep.subr.mxu0 0.0
        %320 = vmatpush1.msra.mxu0 0.0
        %321 = vmatprep.subr.mxu0 0.0
        %322 = vmatpush1.msra.mxu0 0.0
        %323 = vmatprep.subr.mxu0 0.0
        %324 = vmatpush1.msra.mxu0 0.0
        %325 = vmatprep.subr.mxu0 0.0
        %326 = vmatpush1.msra.mxu0 0.0
        %327 = vmatprep.subr.mxu0 0.0
        %328 = vmatpush1.msra.mxu0 0.0
        %329 = vmatprep.subr.mxu0 0.0
        %330 = vmatpush1.msra.mxu0 0.0
        %331 = vmatprep.subr.mxu0 0.0
        %332 = vmatpush1.msra.mxu0 0.0
        %333 = vmatprep.mubr.f32.mxu0 0.0
        %334 = vmatmul.mubr.f32.gmra.mrb[0].mxu0 %v174
        %v335 = vpop.f32.mrb[0].mxu0
        %v336 = vadd.f32 0.0, %v335
        %v337 = vpop.f32.mrb[0].mxu0
        %338 = vmatprep.mubr.f32.mxu0 0.0
        %339 = vmatmul.mubr.f32.gmra.mrb[0].mxu0 %v177
        %v340 = vpop.f32.mrb[0].mxu0
        %v341 = vadd.f32 0.0, %v340
        %v342 = vpop.f32.mrb[0].mxu0
        %343 = vmatprep.mubr.f32.mxu0 0.0
        %344 = vmatmul.mubr.f32.gmra.mrb[0].mxu0 %v180
        %v345 = vpop.f32.mrb[0].mxu0
        %v346 = vadd.f32 0.0, %v345
        %v347 = vpop.f32.mrb[0].mxu0
        %348 = vmatprep.mubr.f32.mxu0 0.0
        %349 = vmatmul.mubr.f32.gmra.mrb[0].mxu0 %v183
        %v350 = vpop.f32.mrb[0].mxu0
        %v351 = vadd.f32 0.0, %v350
        %v352 = vpop.f32.mrb[0].mxu0
        %353 = vmatprep.mubr.f32.mxu0 0.0
        %354 = vmatmul.mubr.f32.gmra.mrb[0].mxu0 %v186
        %v355 = vpop.f32.mrb[0].mxu0
        %v356 = vadd.f32 0.0, %v355
        %v357 = vpop.f32.mrb[0].mxu0
        %358 = vmatprep.mubr.f32.mxu0 0.0
        %359 = vmatmul.mubr.f32.gmra.mrb[0].mxu0 %v189
        %v360 = vpop.f32.mrb[0].mxu0
        %v361 = vadd.f32 0.0, %v360
        %v362 = vpop.f32.mrb[0].mxu0
        %363 = vmatprep.mubr.f32.mxu0 0.0
        %364 = vmatmul.mubr.f32.gmra.mrb[0].mxu0 %v192
        %v365 = vpop.f32.mrb[0].mxu0
        %v366 = vadd.f32 0.0, %v365
        %v367 = vpop.f32.mrb[0].mxu0
        %368 = vmatprep.mubr.f32.mxu0 0.0
        %369 = vmatmul.mubr.f32.gmra.mrb[0].mxu0 %v195
        %v370 = vpop.f32.mrb[0].mxu0
        %v371 = vadd.f32 0.0, %v370
        %v372 = vpop.f32.mrb[0].mxu0
        %373 = vmatprep.mubr.f32.mxu0 0.0
        %374 = vmatmul.mubr.f32.gmra.mrb[0].mxu0 %v198
        %v375 = vpop.f32.mrb[0].mxu0
        %v376 = vadd.f32 0.0, %v375
        %v377 = vpop.f32.mrb[0].mxu0
        %378 = vmatprep.mubr.f32.mxu0 0.0
        %379 = vmatmul.mubr.f32.gmra.mrb[0].mxu0 %v201
        %v380 = vpop.f32.mrb[0].mxu0
        %v381 = vadd.f32 0.0, %v380
        %v382 = vpop.f32.mrb[0].mxu0
        %383 = vmatprep.mubr.f32.mxu0 0.0
        %384 = vmatmul.mubr.f32.gmra.mrb[0].mxu0 %v204
        %v385 = vpop.f32.mrb[0].mxu0
        %v386 = vadd.f32 0.0, %v385
        %v387 = vpop.f32.mrb[0].mxu0
        %388 = vmatprep.mubr.f32.mxu0 0.0
        %389 = vmatmul.mubr.f32.gmra.mrb[0].mxu0 %v207
        %v390 = vpop.f32.mrb[0].mxu0
        %v391 = vadd.f32 0.0, %v390
        %v392 = vpop.f32.mrb[0].mxu0
        %393 = vmatprep.mubr.f32.mxu0 0.0
        %394 = vmatmul.mubr.f32.gmra.mrb[0].mxu0 %v210
        %v395 = vpop.f32.mrb[0].mxu0
        %v396 = vadd.f32 0.0, %v395
        %v397 = vpop.f32.mrb[0].mxu0
        %398 = vmatprep.mubr.f32.mxu0 0.0
        %399 = vmatmul.mubr.f32.gmra.mrb[0].mxu0 %v213
        %v400 = vpop.f32.mrb[0].mxu0
        %v401 = vadd.f32 0.0, %v400
        %v402 = vpop.f32.mrb[0].mxu0
        %403 = vmatprep.mubr.f32.mxu0 0.0
        %404 = vmatmul.mubr.f32.gmra.mrb[0].mxu0 %v216
        %v405 = vpop.f32.mrb[0].mxu0
        %v406 = vadd.f32 0.0, %v405
        %v407 = vpop.f32.mrb[0].mxu0
        %408 = vmatprep.mubr.f32.mxu0 0.0
        %409 = vmatmul.mubr.f32.gmra.mrb[0].mxu0 %v219
        %v410 = vpop.f32.mrb[0].mxu0
        %v411 = vadd.f32 0.0, %v410
        %v412 = vpop.f32.mrb[0].mxu0
        %413 = vmatprep.mubr.f32.mxu0 0.0
        %414 = vmatmul.mubr.f32.gmra.mrb[0].mxu0 %v222
        %v415 = vpop.f32.mrb[0].mxu0
        %v416 = vadd.f32 0.0, %v415
        %v417 = vpop.f32.mrb[0].mxu0
        %418 = vmatprep.mubr.f32.mxu0 0.0
        %419 = vmatmul.mubr.f32.gmra.mrb[0].mxu0 %v225
        %v420 = vpop.f32.mrb[0].mxu0
        %v421 = vadd.f32 0.0, %v420
        %v422 = vpop.f32.mrb[0].mxu0
        %423 = vmatprep.mubr.f32.mxu0 0.0
        %424 = vmatmul.mubr.f32.gmra.mrb[0].mxu0 %v228
        %v425 = vpop.f32.mrb[0].mxu0
        %v426 = vadd.f32 0.0, %v425
        %v427 = vpop.f32.mrb[0].mxu0
        %428 = vmatprep.mubr.f32.mxu0 0.0
        %429 = vmatmul.mubr.f32.gmra.mrb[0].mxu0 %v231
        %v430 = vpop.f32.mrb[0].mxu0
        %v431 = vadd.f32 0.0, %v430
        %v432 = vpop.f32.mrb[0].mxu0
        %433 = vmatprep.mubr.f32.mxu0 0.0
        %434 = vmatmul.mubr.f32.gmra.mrb[0].mxu0 %v234
        %v435 = vpop.f32.mrb[0].mxu0
        %v436 = vadd.f32 0.0, %v435
        %v437 = vpop.f32.mrb[0].mxu0
        %438 = vmatprep.mubr.f32.mxu0 0.0
        %439 = vmatmul.mubr.f32.gmra.mrb[0].mxu0 %v237
        %v440 = vpop.f32.mrb[0].mxu0
        %v441 = vadd.f32 0.0, %v440
        %v442 = vpop.f32.mrb[0].mxu0
        %443 = vmatprep.mubr.f32.mxu0 0.0
        %444 = vmatmul.mubr.f32.gmra.mrb[0].mxu0 %v240
        %v445 = vpop.f32.mrb[0].mxu0
        %v446 = vadd.f32 0.0, %v445
        %v447 = vpop.f32.mrb[0].mxu0
        %448 = vmatprep.mubr.f32.mxu0 0.0
        %449 = vmatmul.mubr.f32.gmra.mrb[0].mxu0 %v243
        %v450 = vpop.f32.mrb[0].mxu0
        %v451 = vadd.f32 0.0, %v450
        %v452 = vpop.f32.mrb[0].mxu0
        %453 = vmatprep.mubr.f32.mxu0 0.0
        %454 = vmatmul.mubr.f32.gmra.mrb[0].mxu0 %v246
        %v455 = vpop.f32.mrb[0].mxu0
        %v456 = vadd.f32 0.0, %v455
        %v457 = vpop.f32.mrb[0].mxu0
        %458 = vmatprep.mubr.f32.mxu0 0.0
        %459 = vmatmul.mubr.f32.gmra.mrb[0].mxu0 %v249
        %v460 = vpop.f32.mrb[0].mxu0
        %v461 = vadd.f32 0.0, %v460
        %v462 = vpop.f32.mrb[0].mxu0
        %463 = vmatprep.mubr.f32.mxu0 0.0
        %464 = vmatmul.mubr.f32.gmra.mrb[0].mxu0 %v252
        %v465 = vpop.f32.mrb[0].mxu0
        %v466 = vadd.f32 0.0, %v465
        %v467 = vpop.f32.mrb[0].mxu0
        %468 = vmatprep.mubr.f32.mxu0 0.0
        %469 = vmatmul.mubr.f32.gmra.mrb[0].mxu0 %v255
        %v470 = vpop.f32.mrb[0].mxu0
        %v471 = vadd.f32 0.0, %v470
        %v472 = vpop.f32.mrb[0].mxu0
        %473 = vmatprep.mubr.f32.mxu0 0.0
        %474 = vmatmul.mubr.f32.gmra.mrb[0].mxu0 %v258
        %v475 = vpop.f32.mrb[0].mxu0
        %v476 = vadd.f32 0.0, %v475
        %v477 = vpop.f32.mrb[0].mxu0
        %478 = vmatprep.mubr.f32.mxu0 0.0
        %479 = vmatmul.mubr.f32.gmra.mrb[0].mxu0 %v261
        %v480 = vpop.f32.mrb[0].mxu0
        %v481 = vadd.f32 0.0, %v480
        %v482 = vpop.f32.mrb[0].mxu0
        %483 = vmatprep.mubr.f32.mxu0 0.0
        %484 = vmatmul.mubr.f32.gmra.mrb[0].mxu0 %v264
        %v485 = vpop.f32.mrb[0].mxu0
        %v486 = vadd.f32 0.0, %v485
        %v487 = vpop.f32.mrb[0].mxu0
        %488 = vmatprep.mubr.f32.mxu0 0.0
        %489 = vmatmul.mubr.f32.gmra.mrb[0].mxu0 %v267
        %v490 = vpop.f32.mrb[0].mxu0
        %v491 = vadd.f32 0.0, %v490
        %v492 = vpop.f32.mrb[0].mxu0
        %493 = vdwg.mxu0
        %v494 = vpack.c.bf16 %v341, %v336
        %v495 = vpack.c.bf16 %v351, %v346
        %v496 = vpack.c.bf16 %v361, %v356
        %v497 = vpack.c.bf16 %v371, %v366
        %v498 = vpack.c.bf16 %v381, %v376
        %v499 = vpack.c.bf16 %v391, %v386
        %v500 = vpack.c.bf16 %v401, %v396
        %v501 = vpack.c.bf16 %v411, %v406
        %v502 = vpack.c.bf16 %v421, %v416
        %v503 = vpack.c.bf16 %v431, %v426
        %v504 = vpack.c.bf16 %v441, %v436
        %v505 = vpack.c.bf16 %v451, %v446
        %v506 = vpack.c.bf16 %v461, %v456
        %v507 = vpack.c.bf16 %v471, %v466
        %v508 = vpack.c.bf16 %v481, %v476
        %v509 = vpack.c.bf16 %v491, %v486
        %v526 = vunpack.c.l.b16 %v494
        %v527 = vunpack.c.h.b16 %v494
        %v528 = vunpack.c.l.b16 %v495
        %v529 = vunpack.c.h.b16 %v495
        %v530 = vunpack.c.l.b16 %v496
        %v531 = vunpack.c.h.b16 %v496
        %v532 = vunpack.c.l.b16 %v497
        %v533 = vunpack.c.h.b16 %v497
        %v534 = vunpack.c.l.b16 %v498
        %v535 = vunpack.c.h.b16 %v498
        %v536 = vunpack.c.l.b16 %v499
        %v537 = vunpack.c.h.b16 %v499
        %v538 = vunpack.c.l.b16 %v500
        %v539 = vunpack.c.h.b16 %v500
        %v540 = vunpack.c.l.b16 %v501
        %v541 = vunpack.c.h.b16 %v501
        %v542 = vunpack.c.l.b16 %v502
        %v543 = vunpack.c.h.b16 %v502
        %v544 = vunpack.c.l.b16 %v503
        %v545 = vunpack.c.h.b16 %v503
        %v546 = vunpack.c.l.b16 %v504
        %v547 = vunpack.c.h.b16 %v504
        %v548 = vunpack.c.l.b16 %v505
        %v549 = vunpack.c.h.b16 %v505
        %v550 = vunpack.c.l.b16 %v506
        %v551 = vunpack.c.h.b16 %v506
        %v552 = vunpack.c.l.b16 %v507
        %v553 = vunpack.c.h.b16 %v507
        %v554 = vunpack.c.l.b16 %v508
        %v555 = vunpack.c.h.b16 %v508
        %v556 = vunpack.c.l.b16 %v509
        %v557 = vunpack.c.h.b16 %v509
        %v558 = vpack.c.b16 %v526, %v526
        %v559 = vpack.c.b16 %v527, %v527
        %v560 = vpack.c.b16 %v528, %v528
        %v561 = vpack.c.b16 %v529, %v529
        %v562 = vpack.c.b16 %v530, %v530
        %v563 = vpack.c.b16 %v531, %v531
        %v564 = vpack.c.b16 %v532, %v532
        %v565 = vpack.c.b16 %v533, %v533
        %v566 = vpack.c.b16 %v534, %v534
        %v567 = vpack.c.b16 %v535, %v535
        %v568 = vpack.c.b16 %v536, %v536
        %v569 = vpack.c.b16 %v537, %v537
        %v570 = vpack.c.b16 %v538, %v538
        %v571 = vpack.c.b16 %v539, %v539
        %v572 = vpack.c.b16 %v540, %v540
        %v573 = vpack.c.b16 %v541, %v541
        %v574 = vpack.c.b16 %v542, %v542
        %v575 = vpack.c.b16 %v543, %v543
        %v576 = vpack.c.b16 %v544, %v544
        %v577 = vpack.c.b16 %v545, %v545
        %v578 = vpack.c.b16 %v546, %v546
        %v579 = vpack.c.b16 %v547, %v547
        %v580 = vpack.c.b16 %v548, %v548
        %v581 = vpack.c.b16 %v549, %v549
        %v582 = vpack.c.b16 %v550, %v550
        %v583 = vpack.c.b16 %v551, %v551
        %v584 = vpack.c.b16 %v552, %v552
        %v585 = vpack.c.b16 %v553, %v553
        %v586 = vpack.c.b16 %v554, %v554
        %v587 = vpack.c.b16 %v555, %v555
        %v588 = vpack.c.b16 %v556, %v556
        %v589 = vpack.c.b16 %v557, %v557
        %622 = vst [vmem:[%s132] sm:$0xf] %v558
        %623 = vst [vmem:[%s132 + $0x4] sm:$0xf] %v559
        %624 = vst [vmem:[%s132 + $0x8] sm:$0xf] %v560
        %625 = vst [vmem:[%s132 + $0xc] sm:$0xf] %v561
        %626 = vst [vmem:[%s132 + $0x10] sm:$0xf] %v562
        %627 = vst [vmem:[%s132 + $0x14] sm:$0xf] %v563
        %628 = vst [vmem:[%s132 + $0x18] sm:$0xf] %v564
        %629 = vst [vmem:[%s132 + $0x1c] sm:$0xf] %v565
        %630 = vst [vmem:[%s132 + $0x20] sm:$0xf] %v566
        %631 = vst [vmem:[%s132 + $0x24] sm:$0xf] %v567
        %632 = vst [vmem:[%s132 + $0x28] sm:$0xf] %v568
        %633 = vst [vmem:[%s132 + $0x2c] sm:$0xf] %v569
        %634 = vst [vmem:[%s132 + $0x30] sm:$0xf] %v570
        %635 = vst [vmem:[%s132 + $0x34] sm:$0xf] %v571
        %636 = vst [vmem:[%s132 + $0x38] sm:$0xf] %v572
        %637 = vst [vmem:[%s132 + $0x3c] sm:$0xf] %v573
        %638 = vst [vmem:[%s132 + $0x40] sm:$0xf] %v574
        %639 = vst [vmem:[%s132 + $0x44] sm:$0xf] %v575
        %640 = vst [vmem:[%s132 + $0x48] sm:$0xf] %v576
        %641 = vst [vmem:[%s132 + $0x4c] sm:$0xf] %v577
        %642 = vst [vmem:[%s132 + $0x50] sm:$0xf] %v578
        %643 = vst [vmem:[%s132 + $0x54] sm:$0xf] %v579
        %644 = vst [vmem:[%s132 + $0x58] sm:$0xf] %v580
        %645 = vst [vmem:[%s132 + $0x5c] sm:$0xf] %v581
        %646 = vst [vmem:[%s132 + $0x60] sm:$0xf] %v582
        %647 = vst [vmem:[%s132 + $0x64] sm:$0xf] %v583
        %648 = vst [vmem:[%s132 + $0x68] sm:$0xf] %v584
        %649 = vst [vmem:[%s132 + $0x6c] sm:$0xf] %v585
        %650 = vst [vmem:[%s132 + $0x70] sm:$0xf] %v586
        %651 = vst [vmem:[%s132 + $0x74] sm:$0xf] %v587
        %652 = vst [vmem:[%s132 + $0x78] sm:$0xf] %v588
        %653 = vst [vmem:[%s132 + $0x7c] sm:$0xf] %v589
        %s654 = sand.u32 %s68, 1
        %s655 = sand.u32 %s68, 1
        %s656 = smul.addr %s655, 128
        %s657 = scalar_lea.vmem [#allocation2], %s656
        // Predicated region
        $region29: #{dgi1_forward.6} parent=27 // pred_check
          %p658 = pneg %p78
        $region30: #{dgi1_forward.6} parent=27 // pred_check_branch
          %660 = sbr.rel (%p658) target = $region32
        $region31: #{dgi1_forward.6} parent=27 // pred_region
          %s661 = smul.addr %s13, 4
          %s662 = scalar_lea.vmem %s2, %s661
          // Predicated region
          $region33: #{dgi1_forward.6} parent=31 // pred_check
            _
          $region34: #{dgi1_forward.6} parent=31 // pred_check_branch
            %664 = sbr.rel (0) target = $region36
          $region35: #{dgi1_forward.6} parent=31 // pred_region
            // Predicated region
            $region37: #{dgi1_forward.6} parent=35 // pred_check
              _
            $region38: #{dgi1_forward.6} parent=35 // pred_check_branch
              %666 = sbr.rel target = $region40
            $region39: #{dgi1_forward.6} parent=35 // pred_region
              // Predicated region
              $region52: #{dgi1_forward.6} parent=39 // pred_check
                _
              $region53: #{dgi1_forward.6} parent=39 // pred_check_branch
                %743 = sbr.rel (0) target = $region55
              $region54: #{dgi1_forward.6} parent=39 // pred_region
                loop: start=0, step=1, limit=1
                $region56: #{dgi1_forward.6} parent=54 // loop_pre_header
                  _
                $region57: #{dgi1_forward.6} parent=54 // loop_header
                  %s745 = sphi 0, %s749
                  %p746 = scmp.ge.s32.totalorder %s745, 1
                  %s750 = sphi %s657, %s657
                  %s751 = sphi %s662, %s662
                $region58: #{dgi1_forward.6} parent=54 // loop_header_branch
                  %748 = sbr.rel (%p746) target = $region62
                $region59: #{dgi1_forward.6} parent=54 // loop_body
                  _
                $region60: #{dgi1_forward.6} parent=54 // loop_footer
                  %s749 = sadd.s32 1, %s745
                $region61: #{dgi1_forward.6} parent=54 // loop_footer_branch
                  %744 = sbr.rel target = $region57
                $region62: #{dgi1_forward.6} parent=54 // loop_exit
                  _
                loop: start=0, step=1, limit=1
                $region63: #{dgi1_forward.6} parent=54 // loop_pre_header
                  _
                $region64: #{dgi1_forward.6} parent=54 // loop_header
                  %s754 = sphi 0, %s758
                  %p755 = scmp.ge.s32.totalorder %s754, 1
                  %s759 = sphi %s657, %s657
                  %s760 = sphi %s662, %s662
                $region65: #{dgi1_forward.6} parent=54 // loop_header_branch
                  %757 = sbr.rel (%p755) target = $region69
                $region66: #{dgi1_forward.6} parent=54 // loop_body
                  %v761 = vld [vmem:[%s759] sm:$0xf]
                  %762 = vst [vmem:[%s760] sm:$0xf] %v761
                  %v763 = vld [vmem:[%s759 + $0x4] sm:$0xf]
                  %764 = vst [vmem:[%s760 + $0x8] sm:$0xf] %v763
                  %v765 = vld [vmem:[%s759 + $0x8] sm:$0xf]
                  %766 = vst [vmem:[%s760 + $0x10] sm:$0xf] %v765
                  %v767 = vld [vmem:[%s759 + $0xc] sm:$0xf]
                  %768 = vst [vmem:[%s760 + $0x18] sm:$0xf] %v767
                  %v769 = vld [vmem:[%s759 + $0x10] sm:$0xf]
                  %770 = vst [vmem:[%s760 + $0x20] sm:$0xf] %v769
                  %v771 = vld [vmem:[%s759 + $0x14] sm:$0xf]
                  %772 = vst [vmem:[%s760 + $0x28] sm:$0xf] %v771
                  %v773 = vld [vmem:[%s759 + $0x18] sm:$0xf]
                  %774 = vst [vmem:[%s760 + $0x30] sm:$0xf] %v773
                  %v775 = vld [vmem:[%s759 + $0x1c] sm:$0xf]
                  %776 = vst [vmem:[%s760 + $0x38] sm:$0xf] %v775
                  %v777 = vld [vmem:[%s759 + $0x20] sm:$0xf]
                  %778 = vst [vmem:[%s760 + $0x40] sm:$0xf] %v777
                  %v779 = vld [vmem:[%s759 + $0x24] sm:$0xf]
                  %780 = vst [vmem:[%s760 + $0x48] sm:$0xf] %v779
                  %v781 = vld [vmem:[%s759 + $0x28] sm:$0xf]
                  %782 = vst [vmem:[%s760 + $0x50] sm:$0xf] %v781
                  %v783 = vld [vmem:[%s759 + $0x2c] sm:$0xf]
                  %784 = vst [vmem:[%s760 + $0x58] sm:$0xf] %v783
                  %v785 = vld [vmem:[%s759 + $0x30] sm:$0xf]
                  %786 = vst [vmem:[%s760 + $0x60] sm:$0xf] %v785
                  %v787 = vld [vmem:[%s759 + $0x34] sm:$0xf]
                  %788 = vst [vmem:[%s760 + $0x68] sm:$0xf] %v787
                  %v789 = vld [vmem:[%s759 + $0x38] sm:$0xf]
                  %790 = vst [vmem:[%s760 + $0x70] sm:$0xf] %v789
                  %v791 = vld [vmem:[%s759 + $0x3c] sm:$0xf]
                  %792 = vst [vmem:[%s760 + $0x78] sm:$0xf] %v791
                  %v793 = vld [vmem:[%s759 + $0x40] sm:$0xf]
                  %794 = vst [vmem:[%s760 + $0x80] sm:$0xf] %v793
                  %v795 = vld [vmem:[%s759 + $0x44] sm:$0xf]
                  %796 = vst [vmem:[%s760 + $0x88] sm:$0xf] %v795
                  %v797 = vld [vmem:[%s759 + $0x48] sm:$0xf]
                  %798 = vst [vmem:[%s760 + $0x90] sm:$0xf] %v797
                  %v799 = vld [vmem:[%s759 + $0x4c] sm:$0xf]
                  %800 = vst [vmem:[%s760 + $0x98] sm:$0xf] %v799
                  %v801 = vld [vmem:[%s759 + $0x50] sm:$0xf]
                  %802 = vst [vmem:[%s760 + $0xa0] sm:$0xf] %v801
                  %v803 = vld [vmem:[%s759 + $0x54] sm:$0xf]
                  %804 = vst [vmem:[%s760 + $0xa8] sm:$0xf] %v803
                  %v805 = vld [vmem:[%s759 + $0x58] sm:$0xf]
                  %806 = vst [vmem:[%s760 + $0xb0] sm:$0xf] %v805
                  %v807 = vld [vmem:[%s759 + $0x5c] sm:$0xf]
                  %808 = vst [vmem:[%s760 + $0xb8] sm:$0xf] %v807
                  %v809 = vld [vmem:[%s759 + $0x60] sm:$0xf]
                  %810 = vst [vmem:[%s760 + $0xc0] sm:$0xf] %v809
                  %v811 = vld [vmem:[%s759 + $0x64] sm:$0xf]
                  %812 = vst [vmem:[%s760 + $0xc8] sm:$0xf] %v811
                  %v813 = vld [vmem:[%s759 + $0x68] sm:$0xf]
                  %814 = vst [vmem:[%s760 + $0xd0] sm:$0xf] %v813
                  %v815 = vld [vmem:[%s759 + $0x6c] sm:$0xf]
                  %816 = vst [vmem:[%s760 + $0xd8] sm:$0xf] %v815
                  %v817 = vld [vmem:[%s759 + $0x70] sm:$0xf]
                  %818 = vst [vmem:[%s760 + $0xe0] sm:$0xf] %v817
                  %v819 = vld [vmem:[%s759 + $0x74] sm:$0xf]
                  %820 = vst [vmem:[%s760 + $0xe8] sm:$0xf] %v819
                  %v821 = vld [vmem:[%s759 + $0x78] sm:$0xf]
                  %822 = vst [vmem:[%s760 + $0xf0] sm:$0xf] %v821
                  %v823 = vld [vmem:[%s759 + $0x7c] sm:$0xf]
                  %824 = vst [vmem:[%s760 + $0xf8] sm:$0xf] %v823
                $region67: #{dgi1_forward.6} parent=54 // loop_footer
                  %s758 = sadd.s32 1, %s754
                $region68: #{dgi1_forward.6} parent=54 // loop_footer_branch
                  %753 = sbr.rel target = $region64
                $region69: #{dgi1_forward.6} parent=54 // loop_exit
                  _
              $region55: #{dgi1_forward.6} parent=39 // pred_fallthru
                _
            $region40: #{dgi1_forward.6} parent=35 // pred_fallthru
              _
            // Predicated region
            $region41: #{dgi1_forward.6} parent=35 // pred_check
              _
            $region42: #{dgi1_forward.6} parent=35 // pred_check_branch
              %668 = sbr.rel (0) target = $region44
            $region43: #{dgi1_forward.6} parent=35 // pred_region
              loop: start=0, step=1, limit=1
              $region45: #{dgi1_forward.6} parent=43 // loop_pre_header
                _
              $region46: #{dgi1_forward.6} parent=43 // loop_header
                %s671 = sphi 0, %s675
                %p672 = scmp.ge.s32.totalorder %s671, 1
                %s676 = sphi %s657, %s657
                %s677 = sphi %s662, %s662
              $region47: #{dgi1_forward.6} parent=43 // loop_header_branch
                %674 = sbr.rel (%p672) target = $region51
              $region48: #{dgi1_forward.6} parent=43 // loop_body
                %v678 = vld [vmem:[%s676] sm:$0xf]
                %679 = vst [vmem:[%s677] sm:$0xf] %v678
                %v680 = vld [vmem:[%s676 + $0x4] sm:$0xf]
                %681 = vst [vmem:[%s677 + $0x8] sm:$0xf] %v680
                %v682 = vld [vmem:[%s676 + $0x8] sm:$0xf]
                %683 = vst [vmem:[%s677 + $0x10] sm:$0xf] %v682
                %v684 = vld [vmem:[%s676 + $0xc] sm:$0xf]
                %685 = vst [vmem:[%s677 + $0x18] sm:$0xf] %v684
                %v686 = vld [vmem:[%s676 + $0x10] sm:$0xf]
                %687 = vst [vmem:[%s677 + $0x20] sm:$0xf] %v686
                %v688 = vld [vmem:[%s676 + $0x14] sm:$0xf]
                %689 = vst [vmem:[%s677 + $0x28] sm:$0xf] %v688
                %v690 = vld [vmem:[%s676 + $0x18] sm:$0xf]
                %691 = vst [vmem:[%s677 + $0x30] sm:$0xf] %v690
                %v692 = vld [vmem:[%s676 + $0x1c] sm:$0xf]
                %693 = vst [vmem:[%s677 + $0x38] sm:$0xf] %v692
                %v694 = vld [vmem:[%s676 + $0x20] sm:$0xf]
                %695 = vst [vmem:[%s677 + $0x40] sm:$0xf] %v694
                %v696 = vld [vmem:[%s676 + $0x24] sm:$0xf]
                %697 = vst [vmem:[%s677 + $0x48] sm:$0xf] %v696
                %v698 = vld [vmem:[%s676 + $0x28] sm:$0xf]
                %699 = vst [vmem:[%s677 + $0x50] sm:$0xf] %v698
                %v700 = vld [vmem:[%s676 + $0x2c] sm:$0xf]
                %701 = vst [vmem:[%s677 + $0x58] sm:$0xf] %v700
                %v702 = vld [vmem:[%s676 + $0x30] sm:$0xf]
                %703 = vst [vmem:[%s677 + $0x60] sm:$0xf] %v702
                %v704 = vld [vmem:[%s676 + $0x34] sm:$0xf]
                %705 = vst [vmem:[%s677 + $0x68] sm:$0xf] %v704
                %v706 = vld [vmem:[%s676 + $0x38] sm:$0xf]
                %707 = vst [vmem:[%s677 + $0x70] sm:$0xf] %v706
                %v708 = vld [vmem:[%s676 + $0x3c] sm:$0xf]
                %709 = vst [vmem:[%s677 + $0x78] sm:$0xf] %v708
                %v710 = vld [vmem:[%s676 + $0x40] sm:$0xf]
                %711 = vst [vmem:[%s677 + $0x80] sm:$0xf] %v710
                %v712 = vld [vmem:[%s676 + $0x44] sm:$0xf]
                %713 = vst [vmem:[%s677 + $0x88] sm:$0xf] %v712
                %v714 = vld [vmem:[%s676 + $0x48] sm:$0xf]
                %715 = vst [vmem:[%s677 + $0x90] sm:$0xf] %v714
                %v716 = vld [vmem:[%s676 + $0x4c] sm:$0xf]
                %717 = vst [vmem:[%s677 + $0x98] sm:$0xf] %v716
                %v718 = vld [vmem:[%s676 + $0x50] sm:$0xf]
                %719 = vst [vmem:[%s677 + $0xa0] sm:$0xf] %v718
                %v720 = vld [vmem:[%s676 + $0x54] sm:$0xf]
                %721 = vst [vmem:[%s677 + $0xa8] sm:$0xf] %v720
                %v722 = vld [vmem:[%s676 + $0x58] sm:$0xf]
                %723 = vst [vmem:[%s677 + $0xb0] sm:$0xf] %v722
                %v724 = vld [vmem:[%s676 + $0x5c] sm:$0xf]
                %725 = vst [vmem:[%s677 + $0xb8] sm:$0xf] %v724
                %v726 = vld [vmem:[%s676 + $0x60] sm:$0xf]
                %727 = vst [vmem:[%s677 + $0xc0] sm:$0xf] %v726
                %v728 = vld [vmem:[%s676 + $0x64] sm:$0xf]
                %729 = vst [vmem:[%s677 + $0xc8] sm:$0xf] %v728
                %v730 = vld [vmem:[%s676 + $0x68] sm:$0xf]
                %731 = vst [vmem:[%s677 + $0xd0] sm:$0xf] %v730
                %v732 = vld [vmem:[%s676 + $0x6c] sm:$0xf]
                %733 = vst [vmem:[%s677 + $0xd8] sm:$0xf] %v732
                %v734 = vld [vmem:[%s676 + $0x70] sm:$0xf]
                %735 = vst [vmem:[%s677 + $0xe0] sm:$0xf] %v734
                %v736 = vld [vmem:[%s676 + $0x74] sm:$0xf]
                %737 = vst [vmem:[%s677 + $0xe8] sm:$0xf] %v736
                %v738 = vld [vmem:[%s676 + $0x78] sm:$0xf]
                %739 = vst [vmem:[%s677 + $0xf0] sm:$0xf] %v738
                %v740 = vld [vmem:[%s676 + $0x7c] sm:$0xf]
                %741 = vst [vmem:[%s677 + $0xf8] sm:$0xf] %v740
              $region49: #{dgi1_forward.6} parent=43 // loop_footer
                %s675 = sadd.s32 1, %s671
              $region50: #{dgi1_forward.6} parent=43 // loop_footer_branch
                %670 = sbr.rel target = $region46
              $region51: #{dgi1_forward.6} parent=43 // loop_exit
                _
            $region44: #{dgi1_forward.6} parent=35 // pred_fallthru
              _
          $region36: #{dgi1_forward.6} parent=31 // pred_fallthru
            _
          %825 = vnop
        $region32: #{dgi1_forward.6} parent=27 // pred_fallthru
          _
      $region28: #{dgi1_forward.6} parent=5 // pred_fallthru
        _
      %p826 = scmp.le.s32.totalorder 2, %s8
      // Predicated region
      $region70: #{dgi1_forward.6} parent=5 // pred_check
        %p827 = pneg %p826
      $region71: #{dgi1_forward.6} parent=5 // pred_check_branch
        %829 = sbr.rel (%p827) target = $region73
      $region72: #{dgi1_forward.6} parent=5 // pred_region
        %s830 = ssub.s32 %s8, 2
        // Predicated region
        $region74: #{dgi1_forward.6} parent=72 // pred_check
          %p831 = pneg %p84
        $region75: #{dgi1_forward.6} parent=72 // pred_check_branch
          %833 = sbr.rel (%p831) target = $region77
        $region76: #{dgi1_forward.6} parent=72 // pred_region
          %s834 = sand.u32 %s69, 1
          %s835 = sand.u32 %s69, 1
          %s836 = smul.addr %s835, 128
          %s837 = scalar_lea.vmem [#allocation2], %s836
        $region77: #{dgi1_forward.6} parent=72 // pred_fallthru
          _
      $region73: #{dgi1_forward.6} parent=5 // pred_fallthru
        _
    $region6: #{dgi1_forward.6} parent=1 // loop_footer
      %s12 = sadd.s32 1, %s8
    $region7: #{dgi1_forward.6} parent=1 // loop_footer_branch
      %7 = sbr.rel target = $region3
    $region8: #{dgi1_forward.6} parent=1 // loop_exit
      _

// kernel: dgi1_forward.9
$region0: #{dgi1_forward.9}
  #allocation0 [shape = 'u32[]', space=smem, size = 0x4, offset = 0x4, fixed_abs, tag = 'smem constant byte address 0x4 - core index']
  #allocation1 [shape = 'u32[144,128]{1,0:T(1,128)}', space=vmem, size = 0x12000, scoped, tag = 'internal scratch']
  #allocation2 [shape = 'f32[128,256]{1,0:T(8,128)}', space=vmem, size = 0x20000, scoped, tag = 'scratch operand']
  %s0 = inlined_call_operand.vmem [shape: bf16[256,256], index: 0, kind: input, shape index: {}]
  %s1 = inlined_call_operand.vmem [shape: bf16[256,256], index: 1, kind: input, shape index: {}]
  %s2 = inlined_call_operand.vmem [shape: f32[1,256], index: 2, kind: input, shape index: {}]
  %s3 = inlined_call_operand.vmem [shape: f32[256,256], index: 3, kind: output, shape index: {}]
  %s4 = sld [smem:[#allocation0]]
  $region94: #{dgi1_forward.9} parent=0
    _
  %s6 = ssub.s32 1, %s4
  %s7 = scalar_select 0, %s6, %s4
  $region1: #{dgi1_forward.9} parent=0
    #allocation3 [shape = 'u8[65536]{0}', space=vmem, size = 0x10000, scoped, tag = 'input window, operand 0']
    loop: start=0, step=1, limit=6
    $region2: #{dgi1_forward.9} parent=1 // loop_pre_header
      _
    $region3: #{dgi1_forward.9} parent=1 // loop_header
      %s9 = sphi 0, %s13
      %p10 = scmp.ge.s32.totalorder %s9, 6
      %s16 = sphi 0, %s28
      %s17 = sphi 0, %s24
      %s18 = sphi 0, %s16
      %s19 = sphi 0, %s17
      %s20 = sphi 0, %s18
      %s21 = sphi 0, %s19
      %s33 = sphi 0, %s35
      %s36 = sphi 0, %s33
      %s37 = sphi 0, %s36
      %s53 = sphi 0, %s37
      %s59 = sphi 0, %s61
      %s62 = sphi 0, %s59
      %s63 = sphi 0, %s62
      %s79 = sphi 0, %s63
      %s83 = sphi 0, %s83
      %s85 = sphi 0, %s83
      %s86 = sphi 0, %s85
      %s100 = sphi 0, %s86
      %s106 = sphi 0, %s108
      %s109 = sphi 0, %s106
      %s110 = sphi 0, %s109
      %s126 = sphi 0, %s110
    $region4: #{dgi1_forward.9} parent=1 // loop_header_branch
      %12 = sbr.rel (%p10) target = $region8
    $region5: #{dgi1_forward.9} parent=1 // loop_body
      %s14 = ssub.s32 %s9, 1
      %s15 = ssub.s32 %s9, 2
      %s22 = sadd.s32 1, %s17
      %p23 = scmp.ge.s32.totalorder %s22, 2
      %s24 = scalar_select %p23, 0, %s22
      %s25 = sadd.s32 1, %s16
      %s26 = scalar_select %p23, %s25, %s16
      %p27 = scmp.ge.s32.totalorder %s26, 2
      %s28 = scalar_select %p27, 0, %s26
      %s29 = ssub.s32 %s16, %s28
      %s30 = ssub.s32 %s17, %s24
      %s31 = sor.u32 %s29, %s30
      %p32 = scmp.eq.s32.totalorder %s31, 0
      %s34 = sadd.s32 %s33, 1
      %s35 = scalar_select %p32, %s33, %s34
      %p38 = pneg %p32
      %p39 = scmp.eq.s32.totalorder %s9, 3
      %p40 = por %p38, %p39
      %p41 = scmp.ne.s32.totalorder %s33, %s36
      %p42 = scmp.eq.s32.totalorder %s9, 0
      %p43 = por %p41, %p42
      %p44 = scmp.ne.s32.totalorder %s33, %s36
      %p45 = scmp.eq.s32.totalorder %s14, 3
      %p46 = por %p44, %p45
      %p47 = scmp.ne.s32.totalorder %s36, %s37
      %p48 = scmp.eq.s32.totalorder %s14, 0
      %p49 = por %p47, %p48
      %p50 = scmp.ne.s32.totalorder %s36, %s37
      %p51 = scmp.eq.s32.totalorder %s15, 3
      %p52 = por %p50, %p51
      %p54 = scmp.ne.s32.totalorder %s37, %s53
      %p55 = scmp.eq.s32.totalorder %s15, 0
      %p56 = por %p54, %p55
      %s57 = ssub.s32 %s17, %s24
      %p58 = scmp.eq.s32.totalorder %s57, 0
      %s60 = sadd.s32 %s59, 1
      %s61 = scalar_select %p58, %s59, %s60
      %p64 = pneg %p58
      %p65 = scmp.eq.s32.totalorder %s9, 3
      %p66 = por %p64, %p65
      %p67 = scmp.ne.s32.totalorder %s59, %s62
      %p68 = scmp.eq.s32.totalorder %s9, 0
      %p69 = por %p67, %p68
      %p70 = scmp.ne.s32.totalorder %s59, %s62
      %p71 = scmp.eq.s32.totalorder %s14, 3
      %p72 = por %p70, %p71
      %p73 = scmp.ne.s32.totalorder %s62, %s63
      %p74 = scmp.eq.s32.totalorder %s14, 0
      %p75 = por %p73, %p74
      %p76 = scmp.ne.s32.totalorder %s62, %s63
      %p77 = scmp.eq.s32.totalorder %s15, 3
      %p78 = por %p76, %p77
      %p80 = scmp.ne.s32.totalorder %s63, %s79
      %p81 = scmp.eq.s32.totalorder %s15, 0
      %p82 = por %p80, %p81
      %s84 = sadd.s32 %s83, 1
      %p87 = scmp.eq.s32.totalorder %s9, 3
      %p88 = scmp.ne.s32.totalorder %s83, %s85
      %p89 = scmp.eq.s32.totalorder %s9, 0
      %p90 = por %p88, %p89
      %p91 = scmp.ne.s32.totalorder %s83, %s85
      %p92 = scmp.eq.s32.totalorder %s14, 3
      %p93 = por %p91, %p92
      %p94 = scmp.ne.s32.totalorder %s85, %s86
      %p95 = scmp.eq.s32.totalorder %s14, 0
      %p96 = por %p94, %p95
      %p97 = scmp.ne.s32.totalorder %s85, %s86
      %p98 = scmp.eq.s32.totalorder %s15, 3
      %p99 = por %p97, %p98
      %p101 = scmp.ne.s32.totalorder %s86, %s100
      %p102 = scmp.eq.s32.totalorder %s15, 0
      %p103 = por %p101, %p102
      %s104 = ssub.s32 %s16, %s28
      %p105 = scmp.eq.s32.totalorder %s104, 0
      %s107 = sadd.s32 %s106, 1
      %s108 = scalar_select %p105, %s106, %s107
      %p111 = pneg %p105
      %p112 = scmp.eq.s32.totalorder %s9, 3
      %p113 = por %p111, %p112
      %p114 = scmp.ne.s32.totalorder %s106, %s109
      %p115 = scmp.eq.s32.totalorder %s9, 0
      %p116 = por %p114, %p115
      %p117 = scmp.ne.s32.totalorder %s106, %s109
      %p118 = scmp.eq.s32.totalorder %s14, 3
      %p119 = por %p117, %p118
      %p120 = scmp.ne.s32.totalorder %s109, %s110
      %p121 = scmp.eq.s32.totalorder %s14, 0
      %p122 = por %p120, %p121
      %p123 = scmp.ne.s32.totalorder %s109, %s110
      %p124 = scmp.eq.s32.totalorder %s15, 3
      %p125 = por %p123, %p124
      %p127 = scmp.ne.s32.totalorder %s110, %s126
      %p128 = scmp.eq.s32.totalorder %s15, 0
      %p129 = por %p127, %p128
      %p130 = scmp.le.s32.totalorder 1, %s9
      %p131 = scmp.lt.s32.totalorder %s9, 5
      %p132 = pnand %p130, %p131
      %p133 = pneg %p132
      // Predicated region
      $region9: #{dgi1_forward.9} parent=5 // pred_check
        _
      $region10: #{dgi1_forward.9} parent=5 // pred_check_branch
        %135 = sbr.rel (%p132) target = $region12
      $region11: #{dgi1_forward.9} parent=5 // pred_region
        %s136 = ssub.s32 %s9, 1
        // Predicated region
        $region13: #{dgi1_forward.9} parent=11 // pred_check
          %p137 = pneg %p96
        $region14: #{dgi1_forward.9} parent=11 // pred_check_branch
          %139 = sbr.rel (%p137) target = $region16
        $region15: #{dgi1_forward.9} parent=11 // pred_region
          _
        $region16: #{dgi1_forward.9} parent=11 // pred_fallthru
          _
      $region12: #{dgi1_forward.9} parent=5 // pred_fallthru
        _
      %p140 = scmp.lt.s32.totalorder %s9, 4
      // Predicated region
      $region17: #{dgi1_forward.9} parent=5 // pred_check
        %p141 = pneg %p140
      $region18: #{dgi1_forward.9} parent=5 // pred_check_branch
        %143 = sbr.rel (%p141) target = $region20
      $region19: #{dgi1_forward.9} parent=5 // pred_region
        // Predicated region
        $region21: #{dgi1_forward.9} parent=19 // pred_check
          %p144 = pneg %p43
        $region22: #{dgi1_forward.9} parent=19 // pred_check_branch
          %146 = sbr.rel (%p144) target = $region24
        $region23: #{dgi1_forward.9} parent=19 // pred_region
          %s147 = sand.u32 %s33, 1
          %s148 = sand.u32 %s33, 1
          %s149 = smul.addr %s148, 64
          %s150 = scalar_lea.vmem [#allocation3], %s149
          %s151 = smul.u32 16, %s16
          %s152 = smul.addr %s151, 2
          %s153 = sadd.s32 %s17, %s152
          %s154 = smul.addr %s153, 4
          %s155 = scalar_lea.vmem %s0, %s154
          // Predicated region
          $region25: #{dgi1_forward.9} parent=23 // pred_check
            _
          $region26: #{dgi1_forward.9} parent=23 // pred_check_branch
            %157 = sbr.rel (0) target = $region28
          $region27: #{dgi1_forward.9} parent=23 // pred_region
            // Predicated region
            $region29: #{dgi1_forward.9} parent=27 // pred_check
              _
            $region30: #{dgi1_forward.9} parent=27 // pred_check_branch
              %159 = sbr.rel target = $region32
            $region31: #{dgi1_forward.9} parent=27 // pred_region
              // Predicated region
              $region44: #{dgi1_forward.9} parent=31 // pred_check
                _
              $region45: #{dgi1_forward.9} parent=31 // pred_check_branch
                %204 = sbr.rel (0) target = $region47
              $region46: #{dgi1_forward.9} parent=31 // pred_region
                loop: start=0, step=1, limit=1
                $region48: #{dgi1_forward.9} parent=46 // loop_pre_header
                  _
                $region49: #{dgi1_forward.9} parent=46 // loop_header
                  %s206 = sphi 0, %s210
                  %p207 = scmp.ge.s32.totalorder %s206, 1
                  %s211 = sphi %s155, %s155
                  %s212 = sphi %s150, %s150
                $region50: #{dgi1_forward.9} parent=46 // loop_header_branch
                  %209 = sbr.rel (%p207) target = $region54
                $region51: #{dgi1_forward.9} parent=46 // loop_body
                  _
                $region52: #{dgi1_forward.9} parent=46 // loop_footer
                  %s210 = sadd.s32 1, %s206
                $region53: #{dgi1_forward.9} parent=46 // loop_footer_branch
                  %205 = sbr.rel target = $region49
                $region54: #{dgi1_forward.9} parent=46 // loop_exit
                  _
                loop: start=0, step=1, limit=1
                $region55: #{dgi1_forward.9} parent=46 // loop_pre_header
                  _
                $region56: #{dgi1_forward.9} parent=46 // loop_header
                  %s215 = sphi 0, %s219
                  %p216 = scmp.ge.s32.totalorder %s215, 1
                  %s220 = sphi %s155, %s155
                  %s221 = sphi %s150, %s150
                $region57: #{dgi1_forward.9} parent=46 // loop_header_branch
                  %218 = sbr.rel (%p216) target = $region61
                $region58: #{dgi1_forward.9} parent=46 // loop_body
                  %v222 = vld [vmem:[%s220] sm:$0xf]
                  %223 = vst [vmem:[%s221] sm:$0xf] %v222
                  %v224 = vld [vmem:[%s220 + $0x8] sm:$0xf]
                  %225 = vst [vmem:[%s221 + $0x4] sm:$0xf] %v224
                  %v226 = vld [vmem:[%s220 + $0x10] sm:$0xf]
                  %227 = vst [vmem:[%s221 + $0x8] sm:$0xf] %v226
                  %v228 = vld [vmem:[%s220 + $0x18] sm:$0xf]
                  %229 = vst [vmem:[%s221 + $0xc] sm:$0xf] %v228
                  %v230 = vld [vmem:[%s220 + $0x20] sm:$0xf]
                  %231 = vst [vmem:[%s221 + $0x10] sm:$0xf] %v230
                  %v232 = vld [vmem:[%s220 + $0x28] sm:$0xf]
                  %233 = vst [vmem:[%s221 + $0x14] sm:$0xf] %v232
                  %v234 = vld [vmem:[%s220 + $0x30] sm:$0xf]
                  %235 = vst [vmem:[%s221 + $0x18] sm:$0xf] %v234
                  %v236 = vld [vmem:[%s220 + $0x38] sm:$0xf]
                  %237 = vst [vmem:[%s221 + $0x1c] sm:$0xf] %v236
                  %v238 = vld [vmem:[%s220 + $0x40] sm:$0xf]
                  %239 = vst [vmem:[%s221 + $0x20] sm:$0xf] %v238
                  %v240 = vld [vmem:[%s220 + $0x48] sm:$0xf]
                  %241 = vst [vmem:[%s221 + $0x24] sm:$0xf] %v240
                  %v242 = vld [vmem:[%s220 + $0x50] sm:$0xf]
                  %243 = vst [vmem:[%s221 + $0x28] sm:$0xf] %v242
                  %v244 = vld [vmem:[%s220 + $0x58] sm:$0xf]
                  %245 = vst [vmem:[%s221 + $0x2c] sm:$0xf] %v244
                  %v246 = vld [vmem:[%s220 + $0x60] sm:$0xf]
                  %247 = vst [vmem:[%s221 + $0x30] sm:$0xf] %v246
                  %v248 = vld [vmem:[%s220 + $0x68] sm:$0xf]
                  %249 = vst [vmem:[%s221 + $0x34] sm:$0xf] %v248
                  %v250 = vld [vmem:[%s220 + $0x70] sm:$0xf]
                  %251 = vst [vmem:[%s221 + $0x38] sm:$0xf] %v250
                  %v252 = vld [vmem:[%s220 + $0x78] sm:$0xf]
                  %253 = vst [vmem:[%s221 + $0x3c] sm:$0xf] %v252
                $region59: #{dgi1_forward.9} parent=46 // loop_footer
                  %s219 = sadd.s32 1, %s215
                $region60: #{dgi1_forward.9} parent=46 // loop_footer_branch
                  %214 = sbr.rel target = $region56
                $region61: #{dgi1_forward.9} parent=46 // loop_exit
                  _
              $region47: #{dgi1_forward.9} parent=31 // pred_fallthru
                _
            $region32: #{dgi1_forward.9} parent=27 // pred_fallthru
              _
            // Predicated region
            $region33: #{dgi1_forward.9} parent=27 // pred_check
              _
            $region34: #{dgi1_forward.9} parent=27 // pred_check_branch
              %161 = sbr.rel (0) target = $region36
            $region35: #{dgi1_forward.9} parent=27 // pred_region
              loop: start=0, step=1, limit=1
              $region37: #{dgi1_forward.9} parent=35 // loop_pre_header
                _
              $region38: #{dgi1_forward.9} parent=35 // loop_header
                %s164 = sphi 0, %s168
                %p165 = scmp.ge.s32.totalorder %s164, 1
                %s169 = sphi %s155, %s155
                %s170 = sphi %s150, %s150
              $region39: #{dgi1_forward.9} parent=35 // loop_header_branch
                %167 = sbr.rel (%p165) target = $region43
              $region40: #{dgi1_forward.9} parent=35 // loop_body
                %v171 = vld [vmem:[%s169] sm:$0xf]
                %172 = vst [vmem:[%s170] sm:$0xf] %v171
                %v173 = vld [vmem:[%s169 + $0x8] sm:$0xf]
                %174 = vst [vmem:[%s170 + $0x4] sm:$0xf] %v173
                %v175 = vld [vmem:[%s169 + $0x10] sm:$0xf]
                %176 = vst [vmem:[%s170 + $0x8] sm:$0xf] %v175
                %v177 = vld [vmem:[%s169 + $0x18] sm:$0xf]
                %178 = vst [vmem:[%s170 + $0xc] sm:$0xf] %v177
                %v179 = vld [vmem:[%s169 + $0x20] sm:$0xf]
                %180 = vst [vmem:[%s170 + $0x10] sm:$0xf] %v179
                %v181 = vld [vmem:[%s169 + $0x28] sm:$0xf]
                %182 = vst [vmem:[%s170 + $0x14] sm:$0xf] %v181
                %v183 = vld [vmem:[%s169 + $0x30] sm:$0xf]
                %184 = vst [vmem:[%s170 + $0x18] sm:$0xf] %v183
                %v185 = vld [vmem:[%s169 + $0x38] sm:$0xf]
                %186 = vst [vmem:[%s170 + $0x1c] sm:$0xf] %v185
                %v187 = vld [vmem:[%s169 + $0x40] sm:$0xf]
                %188 = vst [vmem:[%s170 + $0x20] sm:$0xf] %v187
                %v189 = vld [vmem:[%s169 + $0x48] sm:$0xf]
                %190 = vst [vmem:[%s170 + $0x24] sm:$0xf] %v189
                %v191 = vld [vmem:[%s169 + $0x50] sm:$0xf]
                %192 = vst [vmem:[%s170 + $0x28] sm:$0xf] %v191
                %v193 = vld [vmem:[%s169 + $0x58] sm:$0xf]
                %194 = vst [vmem:[%s170 + $0x2c] sm:$0xf] %v193
                %v195 = vld [vmem:[%s169 + $0x60] sm:$0xf]
                %196 = vst [vmem:[%s170 + $0x30] sm:$0xf] %v195
                %v197 = vld [vmem:[%s169 + $0x68] sm:$0xf]
                %198 = vst [vmem:[%s170 + $0x34] sm:$0xf] %v197
                %v199 = vld [vmem:[%s169 + $0x70] sm:$0xf]
                %200 = vst [vmem:[%s170 + $0x38] sm:$0xf] %v199
                %v201 = vld [vmem:[%s169 + $0x78] sm:$0xf]
                %202 = vst [vmem:[%s170 + $0x3c] sm:$0xf] %v201
              $region41: #{dgi1_forward.9} parent=35 // loop_footer
                %s168 = sadd.s32 1, %s164
              $region42: #{dgi1_forward.9} parent=35 // loop_footer_branch
                %163 = sbr.rel target = $region38
              $region43: #{dgi1_forward.9} parent=35 // loop_exit
                _
            $region36: #{dgi1_forward.9} parent=27 // pred_fallthru
              _
          $region28: #{dgi1_forward.9} parent=23 // pred_fallthru
            _
          %254 = vnop
        $region24: #{dgi1_forward.9} parent=19 // pred_fallthru
          _
        // Predicated region
        $region62: #{dgi1_forward.9} parent=19 // pred_check
          %p255 = pneg %p69
        $region63: #{dgi1_forward.9} parent=19 // pred_check_branch
          %257 = sbr.rel (%p255) target = $region65
        $region64: #{dgi1_forward.9} parent=19 // pred_region
          %s258 = smul.u32 16, %s17
          %p259 = scmp.lt.s32.totalorder %s258, 31
          %s260 = scalar_select %p259, %s258, 31
          %s261 = smul.addr %s260, 2
          %s262 = smul.addr %s261, 4
          %s263 = scalar_lea.vmem %s1, %s262
          %s264 = smul.u32 16, %s17
        $region65: #{dgi1_forward.9} parent=19 // pred_fallthru
          _
      $region20: #{dgi1_forward.9} parent=5 // pred_fallthru
        _
      %p265 = scmp.le.s32.totalorder 1, %s9
      %p266 = scmp.lt.s32.totalorder %s9, 5
      %p267 = pnand %p265, %p266
      %p268 = pneg %p267
      // Predicated region
      $region66: #{dgi1_forward.9} parent=5 // pred_check
        _
      $region67: #{dgi1_forward.9} parent=5 // pred_check_branch
        %270 = sbr.rel (%p267) target = $region69
      $region68: #{dgi1_forward.9} parent=5 // pred_region
        %s271 = ssub.s32 %s9, 1
        %s272 = sand.u32 %s36, 1
        %s273 = sand.u32 %s36, 1
        %s274 = smul.addr %s273, 64
        %s275 = scalar_lea.vmem [#allocation3], %s274
        // Predicated region
        $region70: #{dgi1_forward.9} parent=68 // pred_check
          %p276 = pneg %p49
        $region71: #{dgi1_forward.9} parent=68 // pred_check_branch
          %278 = sbr.rel (%p276) target = $region73
        $region72: #{dgi1_forward.9} parent=68 // pred_region
          _
        $region73: #{dgi1_forward.9} parent=68 // pred_fallthru
          _
        %s279 = sand.u32 %s36, 1
        %s280 = sand.u32 %s36, 1
        %s281 = smul.addr %s280, 64
        %s282 = scalar_lea.vmem [#allocation3], %s281
        %p283 = pneg %p49
        %p284 = pneg %p46
        %s285 = smul.u32 16, %s19
        %p286 = scmp.lt.s32.totalorder %s285, 31
        %s287 = scalar_select %p286, %s285, 31
        %s288 = smul.addr %s287, 2
        %s289 = smul.addr %s288, 4
        %s290 = scalar_lea.vmem %s1, %s289
        %p291 = pneg %p75
        %p292 = pneg %p72
        %p293 = pneg %p96
        %p294 = pneg %p93
        %p295 = pneg %p122
        %p296 = pneg %p119
        %s297 = smul.u32 16, %s18
        %p298 = scmp.lt.s32.totalorder %s297, 31
        %s299 = scalar_select %p298, %s297, 31
        %s300 = smul.addr %s299, 2
        %s301 = smul.addr %s300, 8
        %s302 = scalar_lea.vmem %s3, %s301
        %s303 = smul.u32 16, %s18
        %s304 = smul.u32 16, %s19
        %p305 = scmp.lt.s32.totalorder %s304, 31
        %s306 = scalar_select %p305, %s304, 31
        %s307 = smul.addr %s306, 2
        %s308 = smul.addr %s307, 4
        %s309 = scalar_lea.vmem %s1, %s308
        %s310 = smul.u32 16, %s19
        %s311 = smul.u32 16, %s18
        %p312 = scmp.lt.s32.totalorder %s311, 31
        %s313 = scalar_select %p312, %s311, 31
        %s314 = smul.addr %s313, 2
        %s315 = smul.addr %s314, 8
        %s316 = scalar_lea.vmem %s3, %s315
        %s317 = smul.u32 16, %s18
        %p319 = scmp.eq.s32.totalorder %s19, 0
        // Predicated region
        $region74: #{dgi1_forward.9} parent=68 // pred_check
          %p320 = pneg %p319
        $region75: #{dgi1_forward.9} parent=68 // pred_check_branch
          %322 = sbr.rel (%p320) target = $region77
        $region76: #{dgi1_forward.9} parent=68 // pred_region
          %323 = vst [vmem:[#allocation2] sm:$0xff] 0.0
          %324 = vst [vmem:[#allocation2 + $0x8] sm:$0xff] 0.0
          %325 = vst [vmem:[#allocation2 + $0x10] sm:$0xff] 0.0
          %326 = vst [vmem:[#allocation2 + $0x18] sm:$0xff] 0.0
          %327 = vst [vmem:[#allocation2 + $0x20] sm:$0xff] 0.0
          %328 = vst [vmem:[#allocation2 + $0x28] sm:$0xff] 0.0
          %329 = vst [vmem:[#allocation2 + $0x30] sm:$0xff] 0.0
          %330 = vst [vmem:[#allocation2 + $0x38] sm:$0xff] 0.0
          %331 = vst [vmem:[#allocation2 + $0x40] sm:$0xff] 0.0
          %332 = vst [vmem:[#allocation2 + $0x48] sm:$0xff] 0.0
          %333 = vst [vmem:[#allocation2 + $0x50] sm:$0xff] 0.0
          %334 = vst [vmem:[#allocation2 + $0x58] sm:$0xff] 0.0
          %335 = vst [vmem:[#allocation2 + $0x60] sm:$0xff] 0.0
          %336 = vst [vmem:[#allocation2 + $0x68] sm:$0xff] 0.0
          %337 = vst [vmem:[#allocation2 + $0x70] sm:$0xff] 0.0
          %338 = vst [vmem:[#allocation2 + $0x78] sm:$0xff] 0.0
          %339 = vst [vmem:[#allocation2 + $0x80] sm:$0xff] 0.0
          %340 = vst [vmem:[#allocation2 + $0x88] sm:$0xff] 0.0
          %341 = vst [vmem:[#allocation2 + $0x90] sm:$0xff] 0.0
          %342 = vst [vmem:[#allocation2 + $0x98] sm:$0xff] 0.0
          %343 = vst [vmem:[#allocation2 + $0xa0] sm:$0xff] 0.0
          %344 = vst [vmem:[#allocation2 + $0xa8] sm:$0xff] 0.0
          %345 = vst [vmem:[#allocation2 + $0xb0] sm:$0xff] 0.0
          %346 = vst [vmem:[#allocation2 + $0xb8] sm:$0xff] 0.0
          %347 = vst [vmem:[#allocation2 + $0xc0] sm:$0xff] 0.0
          %348 = vst [vmem:[#allocation2 + $0xc8] sm:$0xff] 0.0
          %349 = vst [vmem:[#allocation2 + $0xd0] sm:$0xff] 0.0
          %350 = vst [vmem:[#allocation2 + $0xd8] sm:$0xff] 0.0
          %351 = vst [vmem:[#allocation2 + $0xe0] sm:$0xff] 0.0
          %352 = vst [vmem:[#allocation2 + $0xe8] sm:$0xff] 0.0
          %353 = vst [vmem:[#allocation2 + $0xf0] sm:$0xff] 0.0
          %354 = vst [vmem:[#allocation2 + $0xf8] sm:$0xff] 0.0
        $region77: #{dgi1_forward.9} parent=68 // pred_fallthru
          _
        %v355 = vld [vmem:[#allocation2] sm:$0xff]
        %v356 = vld [vmem:[#allocation2 + $0x8] sm:$0xff]
        %v357 = vld [vmem:[#allocation2 + $0x10] sm:$0xff]
        %v358 = vld [vmem:[#allocation2 + $0x18] sm:$0xff]
        %v359 = vld [vmem:[#allocation2 + $0x20] sm:$0xff]
        %v360 = vld [vmem:[#allocation2 + $0x28] sm:$0xff]
        %v361 = vld [vmem:[#allocation2 + $0x30] sm:$0xff]
        %v362 = vld [vmem:[#allocation2 + $0x38] sm:$0xff]
        %v363 = vld [vmem:[#allocation2 + $0x40] sm:$0xff]
        %v364 = vld [vmem:[#allocation2 + $0x48] sm:$0xff]
        %v365 = vld [vmem:[#allocation2 + $0x50] sm:$0xff]
        %v366 = vld [vmem:[#allocation2 + $0x58] sm:$0xff]
        %v367 = vld [vmem:[#allocation2 + $0x60] sm:$0xff]
        %v368 = vld [vmem:[#allocation2 + $0x68] sm:$0xff]
        %v369 = vld [vmem:[#allocation2 + $0x70] sm:$0xff]
        %v370 = vld [vmem:[#allocation2 + $0x78] sm:$0xff]
        %v371 = vld [vmem:[#allocation2 + $0x80] sm:$0xff]
        %v372 = vld [vmem:[#allocation2 + $0x88] sm:$0xff]
        %v373 = vld [vmem:[#allocation2 + $0x90] sm:$0xff]
        %v374 = vld [vmem:[#allocation2 + $0x98] sm:$0xff]
        %v375 = vld [vmem:[#allocation2 + $0xa0] sm:$0xff]
        %v376 = vld [vmem:[#allocation2 + $0xa8] sm:$0xff]
        %v377 = vld [vmem:[#allocation2 + $0xb0] sm:$0xff]
        %v378 = vld [vmem:[#allocation2 + $0xb8] sm:$0xff]
        %v379 = vld [vmem:[#allocation2 + $0xc0] sm:$0xff]
        %v380 = vld [vmem:[#allocation2 + $0xc8] sm:$0xff]
        %v381 = vld [vmem:[#allocation2 + $0xd0] sm:$0xff]
        %v382 = vld [vmem:[#allocation2 + $0xd8] sm:$0xff]
        %v383 = vld [vmem:[#allocation2 + $0xe0] sm:$0xff]
        %v384 = vld [vmem:[#allocation2 + $0xe8] sm:$0xff]
        %v385 = vld [vmem:[#allocation2 + $0xf0] sm:$0xff]
        %v386 = vld [vmem:[#allocation2 + $0xf8] sm:$0xff]
        %v387 = vld [vmem:[%s275] sm:$0xf]
        %v388 = vld [vmem:[%s275 + $0x4] sm:$0xf]
        %v389 = vld [vmem:[%s275 + $0x8] sm:$0xf]
        %v390 = vld [vmem:[%s275 + $0xc] sm:$0xf]
        %v391 = vld [vmem:[%s275 + $0x10] sm:$0xf]
        %v392 = vld [vmem:[%s275 + $0x14] sm:$0xf]
        %v393 = vld [vmem:[%s275 + $0x18] sm:$0xf]
        %v394 = vld [vmem:[%s275 + $0x1c] sm:$0xf]
        %v395 = vld [vmem:[%s275 + $0x20] sm:$0xf]
        %v396 = vld [vmem:[%s275 + $0x24] sm:$0xf]
        %v397 = vld [vmem:[%s275 + $0x28] sm:$0xf]
        %v398 = vld [vmem:[%s275 + $0x2c] sm:$0xf]
        %v399 = vld [vmem:[%s275 + $0x30] sm:$0xf]
        %v400 = vld [vmem:[%s275 + $0x34] sm:$0xf]
        %v401 = vld [vmem:[%s275 + $0x38] sm:$0xf]
        %v402 = vld [vmem:[%s275 + $0x3c] sm:$0xf]
        %v403 = vld [vmem:[%s309] sm:$0xff]
        %v404 = vld [vmem:[%s309 + $0x8] sm:$0xff]
        %v405 = vld [vmem:[%s309 + $0x10] sm:$0xff]
        %v406 = vld [vmem:[%s309 + $0x18] sm:$0xff]
        %v407 = vld [vmem:[%s309 + $0x20] sm:$0xff]
        %v408 = vld [vmem:[%s309 + $0x28] sm:$0xff]
        %v409 = vld [vmem:[%s309 + $0x30] sm:$0xff]
        %v410 = vld [vmem:[%s309 + $0x38] sm:$0xff]
        %v411 = vld [vmem:[%s309 + $0x40] sm:$0xff]
        %v412 = vld [vmem:[%s309 + $0x48] sm:$0xff]
        %v413 = vld [vmem:[%s309 + $0x50] sm:$0xff]
        %v414 = vld [vmem:[%s309 + $0x58] sm:$0xff]
        %v415 = vld [vmem:[%s309 + $0x60] sm:$0xff]
        %v416 = vld [vmem:[%s309 + $0x68] sm:$0xff]
        %v417 = vld [vmem:[%s309 + $0x70] sm:$0xff]
        %v418 = vld [vmem:[%s309 + $0x78] sm:$0xff]
        %v435 = vunpack.c.l.b16 %v387
        %v436 = vunpack.c.l.b16 %v388
        %v437 = vunpack.c.l.b16 %v389
        %v438 = vunpack.c.l.b16 %v390
        %v439 = vunpack.c.l.b16 %v391
        %v440 = vunpack.c.l.b16 %v392
        %v441 = vunpack.c.l.b16 %v393
        %v442 = vunpack.c.l.b16 %v394
        %v443 = vunpack.c.l.b16 %v395
        %v444 = vunpack.c.l.b16 %v396
        %v445 = vunpack.c.l.b16 %v397
        %v446 = vunpack.c.l.b16 %v398
        %v447 = vunpack.c.l.b16 %v399
        %v448 = vunpack.c.l.b16 %v400
        %v449 = vunpack.c.l.b16 %v401
        %v450 = vunpack.c.l.b16 %v402
        %v451 = vpack.c.b16 %v436, %v435
        %v452 = vpack.c.b16 %v438, %v437
        %v453 = vpack.c.b16 %v440, %v439
        %v454 = vpack.c.b16 %v442, %v441
        %v455 = vpack.c.b16 %v444, %v443
        %v456 = vpack.c.b16 %v446, %v445
        %v457 = vpack.c.b16 %v448, %v447
        %v458 = vpack.c.b16 %v450, %v449
        %v483 = vunpack.c.l.b16 %v403
        %v484 = vunpack.c.h.b16 %v403
        %v485 = vunpack.c.l.b16 %v404
        %v486 = vunpack.c.h.b16 %v404
        %v487 = vunpack.c.l.b16 %v405
        %v488 = vunpack.c.h.b16 %v405
        %v489 = vunpack.c.l.b16 %v406
        %v490 = vunpack.c.h.b16 %v406
        %v491 = vunpack.c.l.b16 %v407
        %v492 = vunpack.c.h.b16 %v407
        %v493 = vunpack.c.l.b16 %v408
        %v494 = vunpack.c.h.b16 %v408
        %v495 = vunpack.c.l.b16 %v409
        %v496 = vunpack.c.h.b16 %v409
        %v497 = vunpack.c.l.b16 %v410
        %v498 = vunpack.c.h.b16 %v410
        %v499 = vunpack.c.l.b16 %v411
        %v500 = vunpack.c.h.b16 %v411
        %v501 = vunpack.c.l.b16 %v412
        %v502 = vunpack.c.h.b16 %v412
        %v503 = vunpack.c.l.b16 %v413
        %v504 = vunpack.c.h.b16 %v413
        %v505 = vunpack.c.l.b16 %v414
        %v506 = vunpack.c.h.b16 %v414
        %v507 = vunpack.c.l.b16 %v415
        %v508 = vunpack.c.h.b16 %v415
        %v509 = vunpack.c.l.b16 %v416
        %v510 = vunpack.c.h.b16 %v416
        %v511 = vunpack.c.l.b16 %v417
        %v512 = vunpack.c.h.b16 %v417
        %v513 = vunpack.c.l.b16 %v418
        %v514 = vunpack.c.h.b16 %v418
        %v515 = vpack.c.b16 %v485, %v483
        %v516 = vpack.c.b16 %v486, %v484
        %v517 = vpack.c.b16 %v489, %v487
        %v518 = vpack.c.b16 %v490, %v488
        %v519 = vpack.c.b16 %v493, %v491
        %v520 = vpack.c.b16 %v494, %v492
        %v521 = vpack.c.b16 %v497, %v495
        %v522 = vpack.c.b16 %v498, %v496
        %v523 = vpack.c.b16 %v501, %v499
        %v524 = vpack.c.b16 %v502, %v500
        %v525 = vpack.c.b16 %v505, %v503
        %v526 = vpack.c.b16 %v506, %v504
        %v527 = vpack.c.b16 %v509, %v507
        %v528 = vpack.c.b16 %v510, %v508
        %v529 = vpack.c.b16 %v513, %v511
        %v530 = vpack.c.b16 %v514, %v512
        %547 = vmatprep.subr.bf16.mxu0 %v516
        %548 = vmatpush1.bf16.msra.mxu0 %v515
        %549 = vmatprep.subr.bf16.mxu0 %v518
        %550 = vmatpush1.bf16.msra.mxu0 %v517
        %551 = vmatprep.subr.bf16.mxu0 %v520
        %552 = vmatpush1.bf16.msra.mxu0 %v519
        %553 = vmatprep.subr.bf16.mxu0 %v522
        %554 = vmatpush1.bf16.msra.mxu0 %v521
        %555 = vmatprep.subr.bf16.mxu0 %v524
        %556 = vmatpush1.bf16.msra.mxu0 %v523
        %557 = vmatprep.subr.bf16.mxu0 %v526
        %558 = vmatpush1.bf16.msra.mxu0 %v525
        %559 = vmatprep.subr.bf16.mxu0 %v528
        %560 = vmatpush1.bf16.msra.mxu0 %v527
        %561 = vmatprep.subr.bf16.mxu0 %v530
        %562 = vmatpush1.bf16.msra.mxu0 %v529
        %563 = vmatprep.subr.bf16.mxu0 0
        %564 = vmatpush1.bf16.msra.mxu0 0
        %565 = vmatprep.subr.bf16.mxu0 0
        %566 = vmatpush1.bf16.msra.mxu0 0
        %567 = vmatprep.subr.bf16.mxu0 0
        %568 = vmatpush1.bf16.msra.mxu0 0
        %569 = vmatprep.subr.bf16.mxu0 0
        %570 = vmatpush1.bf16.msra.mxu0 0
        %571 = vmatprep.subr.bf16.mxu0 0
        %572 = vmatpush1.bf16.msra.mxu0 0
        %573 = vmatprep.subr.bf16.mxu0 0
        %574 = vmatpush1.bf16.msra.mxu0 0
        %575 = vmatprep.subr.bf16.mxu0 0
        %576 = vmatpush1.bf16.msra.mxu0 0
        %577 = vmatprep.subr.bf16.mxu0 0
        %578 = vmatpush1.bf16.msra.mxu0 0
        %579 = vmatprep.mubr.bf16.mxu0 0
        %580 = vmatmul.mubr.bf16.gmra.mrb[0].mxu0 %v451
        %v581 = vpop.f32.mrb[0].mxu0
        %v582 = vadd.f32 0.0, %v581
        %v583 = vpop.f32.mrb[0].mxu0
        %v584 = vadd.f32 0.0, %v583
        %v585 = vpop.f32.mrb[0].mxu0
        %v586 = vadd.f32 0.0, %v585
        %v587 = vpop.f32.mrb[0].mxu0
        %v588 = vadd.f32 0.0, %v587
        %589 = vmatprep.mubr.bf16.mxu0 0
        %590 = vmatmul.mubr.bf16.gmra.mrb[0].mxu0 %v452
        %v591 = vpop.f32.mrb[0].mxu0
        %v592 = vadd.f32 0.0, %v591
        %v593 = vpop.f32.mrb[0].mxu0
        %v594 = vadd.f32 0.0, %v593
        %v595 = vpop.f32.mrb[0].mxu0
        %v596 = vadd.f32 0.0, %v595
        %v597 = vpop.f32.mrb[0].mxu0
        %v598 = vadd.f32 0.0, %v597
        %599 = vmatprep.mubr.bf16.mxu0 0
        %600 = vmatmul.mubr.bf16.gmra.mrb[0].mxu0 %v453
        %v601 = vpop.f32.mrb[0].mxu0
        %v602 = vadd.f32 0.0, %v601
        %v603 = vpop.f32.mrb[0].mxu0
        %v604 = vadd.f32 0.0, %v603
        %v605 = vpop.f32.mrb[0].mxu0
        %v606 = vadd.f32 0.0, %v605
        %v607 = vpop.f32.mrb[0].mxu0
        %v608 = vadd.f32 0.0, %v607
        %609 = vmatprep.mubr.bf16.mxu0 0
        %610 = vmatmul.mubr.bf16.gmra.mrb[0].mxu0 %v454
        %v611 = vpop.f32.mrb[0].mxu0
        %v612 = vadd.f32 0.0, %v611
        %v613 = vpop.f32.mrb[0].mxu0
        %v614 = vadd.f32 0.0, %v613
        %v615 = vpop.f32.mrb[0].mxu0
        %v616 = vadd.f32 0.0, %v615
        %v617 = vpop.f32.mrb[0].mxu0
        %v618 = vadd.f32 0.0, %v617
        %619 = vmatprep.mubr.bf16.mxu0 0
        %620 = vmatmul.mubr.bf16.gmra.mrb[0].mxu0 %v455
        %v621 = vpop.f32.mrb[0].mxu0
        %v622 = vadd.f32 0.0, %v621
        %v623 = vpop.f32.mrb[0].mxu0
        %v624 = vadd.f32 0.0, %v623
        %v625 = vpop.f32.mrb[0].mxu0
        %v626 = vadd.f32 0.0, %v625
        %v627 = vpop.f32.mrb[0].mxu0
        %v628 = vadd.f32 0.0, %v627
        %629 = vmatprep.mubr.bf16.mxu0 0
        %630 = vmatmul.mubr.bf16.gmra.mrb[0].mxu0 %v456
        %v631 = vpop.f32.mrb[0].mxu0
        %v632 = vadd.f32 0.0, %v631
        %v633 = vpop.f32.mrb[0].mxu0
        %v634 = vadd.f32 0.0, %v633
        %v635 = vpop.f32.mrb[0].mxu0
        %v636 = vadd.f32 0.0, %v635
        %v637 = vpop.f32.mrb[0].mxu0
        %v638 = vadd.f32 0.0, %v637
        %639 = vmatprep.mubr.bf16.mxu0 0
        %640 = vmatmul.mubr.bf16.gmra.mrb[0].mxu0 %v457
        %v641 = vpop.f32.mrb[0].mxu0
        %v642 = vadd.f32 0.0, %v641
        %v643 = vpop.f32.mrb[0].mxu0
        %v644 = vadd.f32 0.0, %v643
        %v645 = vpop.f32.mrb[0].mxu0
        %v646 = vadd.f32 0.0, %v645
        %v647 = vpop.f32.mrb[0].mxu0
        %v648 = vadd.f32 0.0, %v647
        %649 = vmatprep.mubr.bf16.mxu0 0
        %650 = vmatmul.mubr.bf16.gmra.mrb[0].mxu0 %v458
        %v651 = vpop.f32.mrb[0].mxu0
        %v652 = vadd.f32 0.0, %v651
        %v653 = vpop.f32.mrb[0].mxu0
        %v654 = vadd.f32 0.0, %v653
        %v655 = vpop.f32.mrb[0].mxu0
        %v656 = vadd.f32 0.0, %v655
        %v657 = vpop.f32.mrb[0].mxu0
        %v658 = vadd.f32 0.0, %v657
        %659 = vdwg.mxu0
        %v660 = vadd.f32 %v355, %v582
        %v661 = vadd.f32 %v356, %v584
        %v662 = vadd.f32 %v357, %v586
        %v663 = vadd.f32 %v358, %v588
        %v664 = vadd.f32 %v359, %v592
        %v665 = vadd.f32 %v360, %v594
        %v666 = vadd.f32 %v361, %v596
        %v667 = vadd.f32 %v362, %v598
        %v668 = vadd.f32 %v363, %v602
        %v669 = vadd.f32 %v364, %v604
        %v670 = vadd.f32 %v365, %v606
        %v671 = vadd.f32 %v366, %v608
        %v672 = vadd.f32 %v367, %v612
        %v673 = vadd.f32 %v368, %v614
        %v674 = vadd.f32 %v369, %v616
        %v675 = vadd.f32 %v370, %v618
        %v676 = vadd.f32 %v371, %v622
        %v677 = vadd.f32 %v372, %v624
        %v678 = vadd.f32 %v373, %v626
        %v679 = vadd.f32 %v374, %v628
        %v680 = vadd.f32 %v375, %v632
        %v681 = vadd.f32 %v376, %v634
        %v682 = vadd.f32 %v377, %v636
        %v683 = vadd.f32 %v378, %v638
        %v684 = vadd.f32 %v379, %v642
        %v685 = vadd.f32 %v380, %v644
        %v686 = vadd.f32 %v381, %v646
        %v687 = vadd.f32 %v382, %v648
        %v688 = vadd.f32 %v383, %v652
        %v689 = vadd.f32 %v384, %v654
        %v690 = vadd.f32 %v385, %v656
        %v691 = vadd.f32 %v386, %v658
        %692 = vst [vmem:[#allocation2] sm:$0xff] %v660
        %693 = vst [vmem:[#allocation2 + $0x8] sm:$0xff] %v661
        %694 = vst [vmem:[#allocation2 + $0x10] sm:$0xff] %v662
        %695 = vst [vmem:[#allocation2 + $0x18] sm:$0xff] %v663
        %696 = vst [vmem:[#allocation2 + $0x20] sm:$0xff] %v664
        %697 = vst [vmem:[#allocation2 + $0x28] sm:$0xff] %v665
        %698 = vst [vmem:[#allocation2 + $0x30] sm:$0xff] %v666
        %699 = vst [vmem:[#allocation2 + $0x38] sm:$0xff] %v667
        %700 = vst [vmem:[#allocation2 + $0x40] sm:$0xff] %v668
        %701 = vst [vmem:[#allocation2 + $0x48] sm:$0xff] %v669
        %702 = vst [vmem:[#allocation2 + $0x50] sm:$0xff] %v670
        %703 = vst [vmem:[#allocation2 + $0x58] sm:$0xff] %v671
        %704 = vst [vmem:[#allocation2 + $0x60] sm:$0xff] %v672
        %705 = vst [vmem:[#allocation2 + $0x68] sm:$0xff] %v673
        %706 = vst [vmem:[#allocation2 + $0x70] sm:$0xff] %v674
        %707 = vst [vmem:[#allocation2 + $0x78] sm:$0xff] %v675
        %708 = vst [vmem:[#allocation2 + $0x80] sm:$0xff] %v676
        %709 = vst [vmem:[#allocation2 + $0x88] sm:$0xff] %v677
        %710 = vst [vmem:[#allocation2 + $0x90] sm:$0xff] %v678
        %711 = vst [vmem:[#allocation2 + $0x98] sm:$0xff] %v679
        %712 = vst [vmem:[#allocation2 + $0xa0] sm:$0xff] %v680
        %713 = vst [vmem:[#allocation2 + $0xa8] sm:$0xff] %v681
        %714 = vst [vmem:[#allocation2 + $0xb0] sm:$0xff] %v682
        %715 = vst [vmem:[#allocation2 + $0xb8] sm:$0xff] %v683
        %716 = vst [vmem:[#allocation2 + $0xc0] sm:$0xff] %v684
        %717 = vst [vmem:[#allocation2 + $0xc8] sm:$0xff] %v685
        %718 = vst [vmem:[#allocation2 + $0xd0] sm:$0xff] %v686
        %719 = vst [vmem:[#allocation2 + $0xd8] sm:$0xff] %v687
        %720 = vst [vmem:[#allocation2 + $0xe0] sm:$0xff] %v688
        %721 = vst [vmem:[#allocation2 + $0xe8] sm:$0xff] %v689
        %722 = vst [vmem:[#allocation2 + $0xf0] sm:$0xff] %v690
        %723 = vst [vmem:[#allocation2 + $0xf8] sm:$0xff] %v691
        %p724 = scmp.eq.s32.totalorder %s19, 1
        // Predicated region
        $region78: #{dgi1_forward.9} parent=68 // pred_check
          %p725 = pneg %p724
        $region79: #{dgi1_forward.9} parent=68 // pred_check_branch
          %727 = sbr.rel (%p725) target = $region81
        $region80: #{dgi1_forward.9} parent=68 // pred_region
          %v728 = vld [vmem:[#allocation2] sm:$0xff]
          %v729 = vld [vmem:[#allocation2 + $0x8] sm:$0xff]
          %v730 = vld [vmem:[#allocation2 + $0x10] sm:$0xff]
          %v731 = vld [vmem:[#allocation2 + $0x18] sm:$0xff]
          %v732 = vld [vmem:[#allocation2 + $0x20] sm:$0xff]
          %v733 = vld [vmem:[#allocation2 + $0x28] sm:$0xff]
          %v734 = vld [vmem:[#allocation2 + $0x30] sm:$0xff]
          %v735 = vld [vmem:[#allocation2 + $0x38] sm:$0xff]
          %v736 = vld [vmem:[#allocation2 + $0x40] sm:$0xff]
          %v737 = vld [vmem:[#allocation2 + $0x48] sm:$0xff]
          %v738 = vld [vmem:[#allocation2 + $0x50] sm:$0xff]
          %v739 = vld [vmem:[#allocation2 + $0x58] sm:$0xff]
          %v740 = vld [vmem:[#allocation2 + $0x60] sm:$0xff]
          %v741 = vld [vmem:[#allocation2 + $0x68] sm:$0xff]
          %v742 = vld [vmem:[#allocation2 + $0x70] sm:$0xff]
          %v743 = vld [vmem:[#allocation2 + $0x78] sm:$0xff]
          %v744 = vld [vmem:[#allocation2 + $0x80] sm:$0xff]
          %v745 = vld [vmem:[#allocation2 + $0x88] sm:$0xff]
          %v746 = vld [vmem:[#allocation2 + $0x90] sm:$0xff]
          %v747 = vld [vmem:[#allocation2 + $0x98] sm:$0xff]
          %v748 = vld [vmem:[#allocation2 + $0xa0] sm:$0xff]
          %v749 = vld [vmem:[#allocation2 + $0xa8] sm:$0xff]
          %v750 = vld [vmem:[#allocation2 + $0xb0] sm:$0xff]
          %v751 = vld [vmem:[#allocation2 + $0xb8] sm:$0xff]
          %v752 = vld [vmem:[#allocation2 + $0xc0] sm:$0xff]
          %v753 = vld [vmem:[#allocation2 + $0xc8] sm:$0xff]
          %v754 = vld [vmem:[#allocation2 + $0xd0] sm:$0xff]
          %v755 = vld [vmem:[#allocation2 + $0xd8] sm:$0xff]
          %v756 = vld [vmem:[#allocation2 + $0xe0] sm:$0xff]
          %v757 = vld [vmem:[#allocation2 + $0xe8] sm:$0xff]
          %v758 = vld [vmem:[#allocation2 + $0xf0] sm:$0xff]
          %v759 = vld [vmem:[#allocation2 + $0xf8] sm:$0xff]
          %v760 = vld [vmem:[%s2] sm:$0x3]
          %v762 = vlaneseq
          %v763 = vshrl.u32 %v762, 7
          %v764 = vsub.s32 0, %v763
          %v765 = vrot.slane %v760, %v764
          %v766 = vlaneseq
          %v767 = vshrl.u32 %v766, 7
          %v768 = vsub.s32 1, %v767
          %v769 = vrot.slane %v760, %v768
          %v772 = vadd.f32 %v728, %v765
          %v773 = vadd.f32 %v729, %v769
          %v774 = vadd.f32 %v730, %v765
          %v775 = vadd.f32 %v731, %v769
          %v776 = vadd.f32 %v732, %v765
          %v777 = vadd.f32 %v733, %v769
          %v778 = vadd.f32 %v734, %v765
          %v779 = vadd.f32 %v735, %v769
          %v780 = vadd.f32 %v736, %v765
          %v781 = vadd.f32 %v737, %v769
          %v782 = vadd.f32 %v738, %v765
          %v783 = vadd.f32 %v739, %v769
          %v784 = vadd.f32 %v740, %v765
          %v785 = vadd.f32 %v741, %v769
          %v786 = vadd.f32 %v742, %v765
          %v787 = vadd.f32 %v743, %v769
          %v788 = vadd.f32 %v744, %v765
          %v789 = vadd.f32 %v745, %v769
          %v790 = vadd.f32 %v746, %v765
          %v791 = vadd.f32 %v747, %v769
          %v792 = vadd.f32 %v748, %v765
          %v793 = vadd.f32 %v749, %v769
          %v794 = vadd.f32 %v750, %v765
          %v795 = vadd.f32 %v751, %v769
          %v796 = vadd.f32 %v752, %v765
          %v797 = vadd.f32 %v753, %v769
          %v798 = vadd.f32 %v754, %v765
          %v799 = vadd.f32 %v755, %v769
          %v800 = vadd.f32 %v756, %v765
          %v801 = vadd.f32 %v757, %v769
          %v802 = vadd.f32 %v758, %v765
          %v803 = vadd.f32 %v759, %v769
          %804 = vst [vmem:[%s316] sm:$0xff] %v772
          %805 = vst [vmem:[%s316 + $0x8] sm:$0xff] %v773
          %806 = vst [vmem:[%s316 + $0x10] sm:$0xff] %v774
          %807 = vst [vmem:[%s316 + $0x18] sm:$0xff] %v775
          %808 = vst [vmem:[%s316 + $0x20] sm:$0xff] %v776
          %809 = vst [vmem:[%s316 + $0x28] sm:$0xff] %v777
          %810 = vst [vmem:[%s316 + $0x30] sm:$0xff] %v778
          %811 = vst [vmem:[%s316 + $0x38] sm:$0xff] %v779
          %812 = vst [vmem:[%s316 + $0x40] sm:$0xff] %v780
          %813 = vst [vmem:[%s316 + $0x48] sm:$0xff] %v781
          %814 = vst [vmem:[%s316 + $0x50] sm:$0xff] %v782
          %815 = vst [vmem:[%s316 + $0x58] sm:$0xff] %v783
          %816 = vst [vmem:[%s316 + $0x60] sm:$0xff] %v784
          %817 = vst [vmem:[%s316 + $0x68] sm:$0xff] %v785
          %818 = vst [vmem:[%s316 + $0x70] sm:$0xff] %v786
          %819 = vst [vmem:[%s316 + $0x78] sm:$0xff] %v787
          %820 = vst [vmem:[%s316 + $0x80] sm:$0xff] %v788
          %821 = vst [vmem:[%s316 + $0x88] sm:$0xff] %v789
          %822 = vst [vmem:[%s316 + $0x90] sm:$0xff] %v790
          %823 = vst [vmem:[%s316 + $0x98] sm:$0xff] %v791
          %824 = vst [vmem:[%s316 + $0xa0] sm:$0xff] %v792
          %825 = vst [vmem:[%s316 + $0xa8] sm:$0xff] %v793
          %826 = vst [vmem:[%s316 + $0xb0] sm:$0xff] %v794
          %827 = vst [vmem:[%s316 + $0xb8] sm:$0xff] %v795
          %828 = vst [vmem:[%s316 + $0xc0] sm:$0xff] %v796
          %829 = vst [vmem:[%s316 + $0xc8] sm:$0xff] %v797
          %830 = vst [vmem:[%s316 + $0xd0] sm:$0xff] %v798
          %831 = vst [vmem:[%s316 + $0xd8] sm:$0xff] %v799
          %832 = vst [vmem:[%s316 + $0xe0] sm:$0xff] %v800
          %833 = vst [vmem:[%s316 + $0xe8] sm:$0xff] %v801
          %834 = vst [vmem:[%s316 + $0xf0] sm:$0xff] %v802
          %835 = vst [vmem:[%s316 + $0xf8] sm:$0xff] %v803
        $region81: #{dgi1_forward.9} parent=68 // pred_fallthru
          _
        %s836 = smul.u32 16, %s18
        %p837 = scmp.lt.s32.totalorder %s836, 31
        %s838 = scalar_select %p837, %s836, 31
        %s839 = smul.addr %s838, 2
        %s840 = smul.addr %s839, 8
        %s841 = scalar_lea.vmem %s3, %s840
        // Predicated region
        $region82: #{dgi1_forward.9} parent=68 // pred_check
          %p842 = pneg %p119
        $region83: #{dgi1_forward.9} parent=68 // pred_check_branch
          %844 = sbr.rel (%p842) target = $region85
        $region84: #{dgi1_forward.9} parent=68 // pred_region
          %s845 = smul.u32 16, %s18
        $region85: #{dgi1_forward.9} parent=68 // pred_fallthru
          _
      $region69: #{dgi1_forward.9} parent=5 // pred_fallthru
        _
      %p846 = scmp.le.s32.totalorder 2, %s9
      // Predicated region
      $region86: #{dgi1_forward.9} parent=5 // pred_check
        %p847 = pneg %p846
      $region87: #{dgi1_forward.9} parent=5 // pred_check_branch
        %849 = sbr.rel (%p847) target = $region89
      $region88: #{dgi1_forward.9} parent=5 // pred_region
        %s850 = ssub.s32 %s9, 2
        // Predicated region
        $region90: #{dgi1_forward.9} parent=88 // pred_check
          %p851 = pneg %p125
        $region91: #{dgi1_forward.9} parent=88 // pred_check_branch
          %853 = sbr.rel (%p851) target = $region93
        $region92: #{dgi1_forward.9} parent=88 // pred_region
          %s854 = smul.u32 16, %s20
          %p855 = scmp.lt.s32.totalorder %s854, 31
          %s856 = scalar_select %p855, %s854, 31
          %s857 = smul.addr %s856, 2
          %s858 = smul.addr %s857, 8
          %s859 = scalar_lea.vmem %s3, %s858
        $region93: #{dgi1_forward.9} parent=88 // pred_fallthru
          _
      $region89: #{dgi1_forward.9} parent=5 // pred_fallthru
        _
    $region6: #{dgi1_forward.9} parent=1 // loop_footer
      %s13 = sadd.s32 1, %s9
    $region7: #{dgi1_forward.9} parent=1 // loop_footer_branch
      %8 = sbr.rel target = $region3
    $region8: #{dgi1_forward.9} parent=1 // loop_exit
      _

// kernel: dgi1_forward.7
$region0: #{dgi1_forward.7}
  #allocation0 [shape = 'u32[]', space=smem, size = 0x4, offset = 0x4, fixed_abs, tag = 'smem constant byte address 0x4 - core index']
  #allocation1 [shape = 'u32[144,128]{1,0:T(1,128)}', space=vmem, size = 0x12000, scoped, tag = 'internal scratch']
  #allocation2 [shape = 'f32[128,256]{1,0:T(8,128)}', space=vmem, size = 0x20000, scoped, tag = 'scratch operand']
  %s0 = inlined_call_operand.vmem [shape: bf16[256,256], index: 0, kind: input, shape index: {}]
  %s1 = inlined_call_operand.vmem [shape: bf16[256,256], index: 1, kind: input, shape index: {}]
  %s2 = inlined_call_operand.vmem [shape: f32[1,256], index: 2, kind: input, shape index: {}]
  %s3 = inlined_call_operand.vmem [shape: f32[256,256], index: 3, kind: output, shape index: {}]
  %s4 = sld [smem:[#allocation0]]
  $region94: #{dgi1_forward.7} parent=0
    _
  %s6 = ssub.s32 1, %s4
  %s7 = scalar_select 0, %s6, %s4
  $region1: #{dgi1_forward.7} parent=0
    #allocation3 [shape = 'u8[65536]{0}', space=vmem, size = 0x10000, scoped, tag = 'input window, operand 0']
    loop: start=0, step=1, limit=6
    $region2: #{dgi1_forward.7} parent=1 // loop_pre_header
      _
    $region3: #{dgi1_forward.7} parent=1 // loop_header
      %s9 = sphi 0, %s13
      %p10 = scmp.ge.s32.totalorder %s9, 6
      %s16 = sphi 0, %s28
      %s17 = sphi 0, %s24
      %s18 = sphi 0, %s16
      %s19 = sphi 0, %s17
      %s20 = sphi 0, %s18
      %s21 = sphi 0, %s19
      %s33 = sphi 0, %s35
      %s36 = sphi 0, %s33
      %s37 = sphi 0, %s36
      %s53 = sphi 0, %s37
      %s59 = sphi 0, %s61
      %s62 = sphi 0, %s59
      %s63 = sphi 0, %s62
      %s79 = sphi 0, %s63
      %s83 = sphi 0, %s83
      %s85 = sphi 0, %s83
      %s86 = sphi 0, %s85
      %s100 = sphi 0, %s86
      %s106 = sphi 0, %s108
      %s109 = sphi 0, %s106
      %s110 = sphi 0, %s109
      %s126 = sphi 0, %s110
    $region4: #{dgi1_forward.7} parent=1 // loop_header_branch
      %12 = sbr.rel (%p10) target = $region8
    $region5: #{dgi1_forward.7} parent=1 // loop_body
      %s14 = ssub.s32 %s9, 1
      %s15 = ssub.s32 %s9, 2
      %s22 = sadd.s32 1, %s17
      %p23 = scmp.ge.s32.totalorder %s22, 2
      %s24 = scalar_select %p23, 0, %s22
      %s25 = sadd.s32 1, %s16
      %s26 = scalar_select %p23, %s25, %s16
      %p27 = scmp.ge.s32.totalorder %s26, 2
      %s28 = scalar_select %p27, 0, %s26
      %s29 = ssub.s32 %s16, %s28
      %s30 = ssub.s32 %s17, %s24
      %s31 = sor.u32 %s29, %s30
      %p32 = scmp.eq.s32.totalorder %s31, 0
      %s34 = sadd.s32 %s33, 1
      %s35 = scalar_select %p32, %s33, %s34
      %p38 = pneg %p32
      %p39 = scmp.eq.s32.totalorder %s9, 3
      %p40 = por %p38, %p39
      %p41 = scmp.ne.s32.totalorder %s33, %s36
      %p42 = scmp.eq.s32.totalorder %s9, 0
      %p43 = por %p41, %p42
      %p44 = scmp.ne.s32.totalorder %s33, %s36
      %p45 = scmp.eq.s32.totalorder %s14, 3
      %p46 = por %p44, %p45
      %p47 = scmp.ne.s32.totalorder %s36, %s37
      %p48 = scmp.eq.s32.totalorder %s14, 0
      %p49 = por %p47, %p48
      %p50 = scmp.ne.s32.totalorder %s36, %s37
      %p51 = scmp.eq.s32.totalorder %s15, 3
      %p52 = por %p50, %p51
      %p54 = scmp.ne.s32.totalorder %s37, %s53
      %p55 = scmp.eq.s32.totalorder %s15, 0
      %p56 = por %p54, %p55
      %s57 = ssub.s32 %s17, %s24
      %p58 = scmp.eq.s32.totalorder %s57, 0
      %s60 = sadd.s32 %s59, 1
      %s61 = scalar_select %p58, %s59, %s60
      %p64 = pneg %p58
      %p65 = scmp.eq.s32.totalorder %s9, 3
      %p66 = por %p64, %p65
      %p67 = scmp.ne.s32.totalorder %s59, %s62
      %p68 = scmp.eq.s32.totalorder %s9, 0
      %p69 = por %p67, %p68
      %p70 = scmp.ne.s32.totalorder %s59, %s62
      %p71 = scmp.eq.s32.totalorder %s14, 3
      %p72 = por %p70, %p71
      %p73 = scmp.ne.s32.totalorder %s62, %s63
      %p74 = scmp.eq.s32.totalorder %s14, 0
      %p75 = por %p73, %p74
      %p76 = scmp.ne.s32.totalorder %s62, %s63
      %p77 = scmp.eq.s32.totalorder %s15, 3
      %p78 = por %p76, %p77
      %p80 = scmp.ne.s32.totalorder %s63, %s79
      %p81 = scmp.eq.s32.totalorder %s15, 0
      %p82 = por %p80, %p81
      %s84 = sadd.s32 %s83, 1
      %p87 = scmp.eq.s32.totalorder %s9, 3
      %p88 = scmp.ne.s32.totalorder %s83, %s85
      %p89 = scmp.eq.s32.totalorder %s9, 0
      %p90 = por %p88, %p89
      %p91 = scmp.ne.s32.totalorder %s83, %s85
      %p92 = scmp.eq.s32.totalorder %s14, 3
      %p93 = por %p91, %p92
      %p94 = scmp.ne.s32.totalorder %s85, %s86
      %p95 = scmp.eq.s32.totalorder %s14, 0
      %p96 = por %p94, %p95
      %p97 = scmp.ne.s32.totalorder %s85, %s86
      %p98 = scmp.eq.s32.totalorder %s15, 3
      %p99 = por %p97, %p98
      %p101 = scmp.ne.s32.totalorder %s86, %s100
      %p102 = scmp.eq.s32.totalorder %s15, 0
      %p103 = por %p101, %p102
      %s104 = ssub.s32 %s16, %s28
      %p105 = scmp.eq.s32.totalorder %s104, 0
      %s107 = sadd.s32 %s106, 1
      %s108 = scalar_select %p105, %s106, %s107
      %p111 = pneg %p105
      %p112 = scmp.eq.s32.totalorder %s9, 3
      %p113 = por %p111, %p112
      %p114 = scmp.ne.s32.totalorder %s106, %s109
      %p115 = scmp.eq.s32.totalorder %s9, 0
      %p116 = por %p114, %p115
      %p117 = scmp.ne.s32.totalorder %s106, %s109
      %p118 = scmp.eq.s32.totalorder %s14, 3
      %p119 = por %p117, %p118
      %p120 = scmp.ne.s32.totalorder %s109, %s110
      %p121 = scmp.eq.s32.totalorder %s14, 0
      %p122 = por %p120, %p121
      %p123 = scmp.ne.s32.totalorder %s109, %s110
      %p124 = scmp.eq.s32.totalorder %s15, 3
      %p125 = por %p123, %p124
      %p127 = scmp.ne.s32.totalorder %s110, %s126
      %p128 = scmp.eq.s32.totalorder %s15, 0
      %p129 = por %p127, %p128
      %p130 = scmp.le.s32.totalorder 1, %s9
      %p131 = scmp.lt.s32.totalorder %s9, 5
      %p132 = pnand %p130, %p131
      %p133 = pneg %p132
      // Predicated region
      $region9: #{dgi1_forward.7} parent=5 // pred_check
        _
      $region10: #{dgi1_forward.7} parent=5 // pred_check_branch
        %135 = sbr.rel (%p132) target = $region12
      $region11: #{dgi1_forward.7} parent=5 // pred_region
        %s136 = ssub.s32 %s9, 1
        // Predicated region
        $region13: #{dgi1_forward.7} parent=11 // pred_check
          %p137 = pneg %p96
        $region14: #{dgi1_forward.7} parent=11 // pred_check_branch
          %139 = sbr.rel (%p137) target = $region16
        $region15: #{dgi1_forward.7} parent=11 // pred_region
          _
        $region16: #{dgi1_forward.7} parent=11 // pred_fallthru
          _
      $region12: #{dgi1_forward.7} parent=5 // pred_fallthru
        _
      %p140 = scmp.lt.s32.totalorder %s9, 4
      // Predicated region
      $region17: #{dgi1_forward.7} parent=5 // pred_check
        %p141 = pneg %p140
      $region18: #{dgi1_forward.7} parent=5 // pred_check_branch
        %143 = sbr.rel (%p141) target = $region20
      $region19: #{dgi1_forward.7} parent=5 // pred_region
        // Predicated region
        $region21: #{dgi1_forward.7} parent=19 // pred_check
          %p144 = pneg %p43
        $region22: #{dgi1_forward.7} parent=19 // pred_check_branch
          %146 = sbr.rel (%p144) target = $region24
        $region23: #{dgi1_forward.7} parent=19 // pred_region
          %s147 = sand.u32 %s33, 1
          %s148 = sand.u32 %s33, 1
          %s149 = smul.addr %s148, 64
          %s150 = scalar_lea.vmem [#allocation3], %s149
          %s151 = smul.u32 16, %s16
          %s152 = smul.addr %s151, 2
          %s153 = sadd.s32 %s17, %s152
          %s154 = smul.addr %s153, 4
          %s155 = scalar_lea.vmem %s0, %s154
          // Predicated region
          $region25: #{dgi1_forward.7} parent=23 // pred_check
            _
          $region26: #{dgi1_forward.7} parent=23 // pred_check_branch
            %157 = sbr.rel (0) target = $region28
          $region27: #{dgi1_forward.7} parent=23 // pred_region
            // Predicated region
            $region29: #{dgi1_forward.7} parent=27 // pred_check
              _
            $region30: #{dgi1_forward.7} parent=27 // pred_check_branch
              %159 = sbr.rel target = $region32
            $region31: #{dgi1_forward.7} parent=27 // pred_region
              // Predicated region
              $region44: #{dgi1_forward.7} parent=31 // pred_check
                _
              $region45: #{dgi1_forward.7} parent=31 // pred_check_branch
                %204 = sbr.rel (0) target = $region47
              $region46: #{dgi1_forward.7} parent=31 // pred_region
                loop: start=0, step=1, limit=1
                $region48: #{dgi1_forward.7} parent=46 // loop_pre_header
                  _
                $region49: #{dgi1_forward.7} parent=46 // loop_header
                  %s206 = sphi 0, %s210
                  %p207 = scmp.ge.s32.totalorder %s206, 1
                  %s211 = sphi %s155, %s155
                  %s212 = sphi %s150, %s150
                $region50: #{dgi1_forward.7} parent=46 // loop_header_branch
                  %209 = sbr.rel (%p207) target = $region54
                $region51: #{dgi1_forward.7} parent=46 // loop_body
                  _
                $region52: #{dgi1_forward.7} parent=46 // loop_footer
                  %s210 = sadd.s32 1, %s206
                $region53: #{dgi1_forward.7} parent=46 // loop_footer_branch
                  %205 = sbr.rel target = $region49
                $region54: #{dgi1_forward.7} parent=46 // loop_exit
                  _
                loop: start=0, step=1, limit=1
                $region55: #{dgi1_forward.7} parent=46 // loop_pre_header
                  _
                $region56: #{dgi1_forward.7} parent=46 // loop_header
                  %s215 = sphi 0, %s219
                  %p216 = scmp.ge.s32.totalorder %s215, 1
                  %s220 = sphi %s155, %s155
                  %s221 = sphi %s150, %s150
                $region57: #{dgi1_forward.7} parent=46 // loop_header_branch
                  %218 = sbr.rel (%p216) target = $region61
                $region58: #{dgi1_forward.7} parent=46 // loop_body
                  %v222 = vld [vmem:[%s220] sm:$0xf]
                  %223 = vst [vmem:[%s221] sm:$0xf] %v222
                  %v224 = vld [vmem:[%s220 + $0x8] sm:$0xf]
                  %225 = vst [vmem:[%s221 + $0x4] sm:$0xf] %v224
                  %v226 = vld [vmem:[%s220 + $0x10] sm:$0xf]
                  %227 = vst [vmem:[%s221 + $0x8] sm:$0xf] %v226
                  %v228 = vld [vmem:[%s220 + $0x18] sm:$0xf]
                  %229 = vst [vmem:[%s221 + $0xc] sm:$0xf] %v228
                  %v230 = vld [vmem:[%s220 + $0x20] sm:$0xf]
                  %231 = vst [vmem:[%s221 + $0x10] sm:$0xf] %v230
                  %v232 = vld [vmem:[%s220 + $0x28] sm:$0xf]
                  %233 = vst [vmem:[%s221 + $0x14] sm:$0xf] %v232
                  %v234 = vld [vmem:[%s220 + $0x30] sm:$0xf]
                  %235 = vst [vmem:[%s221 + $0x18] sm:$0xf] %v234
                  %v236 = vld [vmem:[%s220 + $0x38] sm:$0xf]
                  %237 = vst [vmem:[%s221 + $0x1c] sm:$0xf] %v236
                  %v238 = vld [vmem:[%s220 + $0x40] sm:$0xf]
                  %239 = vst [vmem:[%s221 + $0x20] sm:$0xf] %v238
                  %v240 = vld [vmem:[%s220 + $0x48] sm:$0xf]
                  %241 = vst [vmem:[%s221 + $0x24] sm:$0xf] %v240
                  %v242 = vld [vmem:[%s220 + $0x50] sm:$0xf]
                  %243 = vst [vmem:[%s221 + $0x28] sm:$0xf] %v242
                  %v244 = vld [vmem:[%s220 + $0x58] sm:$0xf]
                  %245 = vst [vmem:[%s221 + $0x2c] sm:$0xf] %v244
                  %v246 = vld [vmem:[%s220 + $0x60] sm:$0xf]
                  %247 = vst [vmem:[%s221 + $0x30] sm:$0xf] %v246
                  %v248 = vld [vmem:[%s220 + $0x68] sm:$0xf]
                  %249 = vst [vmem:[%s221 + $0x34] sm:$0xf] %v248
                  %v250 = vld [vmem:[%s220 + $0x70] sm:$0xf]
                  %251 = vst [vmem:[%s221 + $0x38] sm:$0xf] %v250
                  %v252 = vld [vmem:[%s220 + $0x78] sm:$0xf]
                  %253 = vst [vmem:[%s221 + $0x3c] sm:$0xf] %v252
                $region59: #{dgi1_forward.7} parent=46 // loop_footer
                  %s219 = sadd.s32 1, %s215
                $region60: #{dgi1_forward.7} parent=46 // loop_footer_branch
                  %214 = sbr.rel target = $region56
                $region61: #{dgi1_forward.7} parent=46 // loop_exit
                  _
              $region47: #{dgi1_forward.7} parent=31 // pred_fallthru
                _
            $region32: #{dgi1_forward.7} parent=27 // pred_fallthru
              _
            // Predicated region
            $region33: #{dgi1_forward.7} parent=27 // pred_check
              _
            $region34: #{dgi1_forward.7} parent=27 // pred_check_branch
              %161 = sbr.rel (0) target = $region36
            $region35: #{dgi1_forward.7} parent=27 // pred_region
              loop: start=0, step=1, limit=1
              $region37: #{dgi1_forward.7} parent=35 // loop_pre_header
                _
              $region38: #{dgi1_forward.7} parent=35 // loop_header
                %s164 = sphi 0, %s168
                %p165 = scmp.ge.s32.totalorder %s164, 1
                %s169 = sphi %s155, %s155
                %s170 = sphi %s150, %s150
              $region39: #{dgi1_forward.7} parent=35 // loop_header_branch
                %167 = sbr.rel (%p165) target = $region43
              $region40: #{dgi1_forward.7} parent=35 // loop_body
                %v171 = vld [vmem:[%s169] sm:$0xf]
                %172 = vst [vmem:[%s170] sm:$0xf] %v171
                %v173 = vld [vmem:[%s169 + $0x8] sm:$0xf]
                %174 = vst [vmem:[%s170 + $0x4] sm:$0xf] %v173
                %v175 = vld [vmem:[%s169 + $0x10] sm:$0xf]
                %176 = vst [vmem:[%s170 + $0x8] sm:$0xf] %v175
                %v177 = vld [vmem:[%s169 + $0x18] sm:$0xf]
                %178 = vst [vmem:[%s170 + $0xc] sm:$0xf] %v177
                %v179 = vld [vmem:[%s169 + $0x20] sm:$0xf]
                %180 = vst [vmem:[%s170 + $0x10] sm:$0xf] %v179
                %v181 = vld [vmem:[%s169 + $0x28] sm:$0xf]
                %182 = vst [vmem:[%s170 + $0x14] sm:$0xf] %v181
                %v183 = vld [vmem:[%s169 + $0x30] sm:$0xf]
                %184 = vst [vmem:[%s170 + $0x18] sm:$0xf] %v183
                %v185 = vld [vmem:[%s169 + $0x38] sm:$0xf]
                %186 = vst [vmem:[%s170 + $0x1c] sm:$0xf] %v185
                %v187 = vld [vmem:[%s169 + $0x40] sm:$0xf]
                %188 = vst [vmem:[%s170 + $0x20] sm:$0xf] %v187
                %v189 = vld [vmem:[%s169 + $0x48] sm:$0xf]
                %190 = vst [vmem:[%s170 + $0x24] sm:$0xf] %v189
                %v191 = vld [vmem:[%s169 + $0x50] sm:$0xf]
                %192 = vst [vmem:[%s170 + $0x28] sm:$0xf] %v191
                %v193 = vld [vmem:[%s169 + $0x58] sm:$0xf]
                %194 = vst [vmem:[%s170 + $0x2c] sm:$0xf] %v193
                %v195 = vld [vmem:[%s169 + $0x60] sm:$0xf]
                %196 = vst [vmem:[%s170 + $0x30] sm:$0xf] %v195
                %v197 = vld [vmem:[%s169 + $0x68] sm:$0xf]
                %198 = vst [vmem:[%s170 + $0x34] sm:$0xf] %v197
                %v199 = vld [vmem:[%s169 + $0x70] sm:$0xf]
                %200 = vst [vmem:[%s170 + $0x38] sm:$0xf] %v199
                %v201 = vld [vmem:[%s169 + $0x78] sm:$0xf]
                %202 = vst [vmem:[%s170 + $0x3c] sm:$0xf] %v201
              $region41: #{dgi1_forward.7} parent=35 // loop_footer
                %s168 = sadd.s32 1, %s164
              $region42: #{dgi1_forward.7} parent=35 // loop_footer_branch
                %163 = sbr.rel target = $region38
              $region43: #{dgi1_forward.7} parent=35 // loop_exit
                _
            $region36: #{dgi1_forward.7} parent=27 // pred_fallthru
              _
          $region28: #{dgi1_forward.7} parent=23 // pred_fallthru
            _
          %254 = vnop
        $region24: #{dgi1_forward.7} parent=19 // pred_fallthru
          _
        // Predicated region
        $region62: #{dgi1_forward.7} parent=19 // pred_check
          %p255 = pneg %p69
        $region63: #{dgi1_forward.7} parent=19 // pred_check_branch
          %257 = sbr.rel (%p255) target = $region65
        $region64: #{dgi1_forward.7} parent=19 // pred_region
          %s258 = smul.u32 16, %s17
          %p259 = scmp.lt.s32.totalorder %s258, 31
          %s260 = scalar_select %p259, %s258, 31
          %s261 = smul.addr %s260, 2
          %s262 = smul.addr %s261, 4
          %s263 = scalar_lea.vmem %s1, %s262
          %s264 = smul.u32 16, %s17
        $region65: #{dgi1_forward.7} parent=19 // pred_fallthru
          _
      $region20: #{dgi1_forward.7} parent=5 // pred_fallthru
        _
      %p265 = scmp.le.s32.totalorder 1, %s9
      %p266 = scmp.lt.s32.totalorder %s9, 5
      %p267 = pnand %p265, %p266
      %p268 = pneg %p267
      // Predicated region
      $region66: #{dgi1_forward.7} parent=5 // pred_check
        _
      $region67: #{dgi1_forward.7} parent=5 // pred_check_branch
        %270 = sbr.rel (%p267) target = $region69
      $region68: #{dgi1_forward.7} parent=5 // pred_region
        %s271 = ssub.s32 %s9, 1
        %s272 = sand.u32 %s36, 1
        %s273 = sand.u32 %s36, 1
        %s274 = smul.addr %s273, 64
        %s275 = scalar_lea.vmem [#allocation3], %s274
        // Predicated region
        $region70: #{dgi1_forward.7} parent=68 // pred_check
          %p276 = pneg %p49
        $region71: #{dgi1_forward.7} parent=68 // pred_check_branch
          %278 = sbr.rel (%p276) target = $region73
        $region72: #{dgi1_forward.7} parent=68 // pred_region
          _
        $region73: #{dgi1_forward.7} parent=68 // pred_fallthru
          _
        %s279 = sand.u32 %s36, 1
        %s280 = sand.u32 %s36, 1
        %s281 = smul.addr %s280, 64
        %s282 = scalar_lea.vmem [#allocation3], %s281
        %p283 = pneg %p49
        %p284 = pneg %p46
        %s285 = smul.u32 16, %s19
        %p286 = scmp.lt.s32.totalorder %s285, 31
        %s287 = scalar_select %p286, %s285, 31
        %s288 = smul.addr %s287, 2
        %s289 = smul.addr %s288, 4
        %s290 = scalar_lea.vmem %s1, %s289
        %p291 = pneg %p75
        %p292 = pneg %p72
        %p293 = pneg %p96
        %p294 = pneg %p93
        %p295 = pneg %p122
        %p296 = pneg %p119
        %s297 = smul.u32 16, %s18
        %p298 = scmp.lt.s32.totalorder %s297, 31
        %s299 = scalar_select %p298, %s297, 31
        %s300 = smul.addr %s299, 2
        %s301 = smul.addr %s300, 8
        %s302 = scalar_lea.vmem %s3, %s301
        %s303 = smul.u32 16, %s18
        %s304 = smul.u32 16, %s19
        %p305 = scmp.lt.s32.totalorder %s304, 31
        %s306 = scalar_select %p305, %s304, 31
        %s307 = smul.addr %s306, 2
        %s308 = smul.addr %s307, 4
        %s309 = scalar_lea.vmem %s1, %s308
        %s310 = smul.u32 16, %s19
        %s311 = smul.u32 16, %s18
        %p312 = scmp.lt.s32.totalorder %s311, 31
        %s313 = scalar_select %p312, %s311, 31
        %s314 = smul.addr %s313, 2
        %s315 = smul.addr %s314, 8
        %s316 = scalar_lea.vmem %s3, %s315
        %s317 = smul.u32 16, %s18
        %p319 = scmp.eq.s32.totalorder %s19, 0
        // Predicated region
        $region74: #{dgi1_forward.7} parent=68 // pred_check
          %p320 = pneg %p319
        $region75: #{dgi1_forward.7} parent=68 // pred_check_branch
          %322 = sbr.rel (%p320) target = $region77
        $region76: #{dgi1_forward.7} parent=68 // pred_region
          %323 = vst [vmem:[#allocation2] sm:$0xff] 0.0
          %324 = vst [vmem:[#allocation2 + $0x8] sm:$0xff] 0.0
          %325 = vst [vmem:[#allocation2 + $0x10] sm:$0xff] 0.0
          %326 = vst [vmem:[#allocation2 + $0x18] sm:$0xff] 0.0
          %327 = vst [vmem:[#allocation2 + $0x20] sm:$0xff] 0.0
          %328 = vst [vmem:[#allocation2 + $0x28] sm:$0xff] 0.0
          %329 = vst [vmem:[#allocation2 + $0x30] sm:$0xff] 0.0
          %330 = vst [vmem:[#allocation2 + $0x38] sm:$0xff] 0.0
          %331 = vst [vmem:[#allocation2 + $0x40] sm:$0xff] 0.0
          %332 = vst [vmem:[#allocation2 + $0x48] sm:$0xff] 0.0
          %333 = vst [vmem:[#allocation2 + $0x50] sm:$0xff] 0.0
          %334 = vst [vmem:[#allocation2 + $0x58] sm:$0xff] 0.0
          %335 = vst [vmem:[#allocation2 + $0x60] sm:$0xff] 0.0
          %336 = vst [vmem:[#allocation2 + $0x68] sm:$0xff] 0.0
          %337 = vst [vmem:[#allocation2 + $0x70] sm:$0xff] 0.0
          %338 = vst [vmem:[#allocation2 + $0x78] sm:$0xff] 0.0
          %339 = vst [vmem:[#allocation2 + $0x80] sm:$0xff] 0.0
          %340 = vst [vmem:[#allocation2 + $0x88] sm:$0xff] 0.0
          %341 = vst [vmem:[#allocation2 + $0x90] sm:$0xff] 0.0
          %342 = vst [vmem:[#allocation2 + $0x98] sm:$0xff] 0.0
          %343 = vst [vmem:[#allocation2 + $0xa0] sm:$0xff] 0.0
          %344 = vst [vmem:[#allocation2 + $0xa8] sm:$0xff] 0.0
          %345 = vst [vmem:[#allocation2 + $0xb0] sm:$0xff] 0.0
          %346 = vst [vmem:[#allocation2 + $0xb8] sm:$0xff] 0.0
          %347 = vst [vmem:[#allocation2 + $0xc0] sm:$0xff] 0.0
          %348 = vst [vmem:[#allocation2 + $0xc8] sm:$0xff] 0.0
          %349 = vst [vmem:[#allocation2 + $0xd0] sm:$0xff] 0.0
          %350 = vst [vmem:[#allocation2 + $0xd8] sm:$0xff] 0.0
          %351 = vst [vmem:[#allocation2 + $0xe0] sm:$0xff] 0.0
          %352 = vst [vmem:[#allocation2 + $0xe8] sm:$0xff] 0.0
          %353 = vst [vmem:[#allocation2 + $0xf0] sm:$0xff] 0.0
          %354 = vst [vmem:[#allocation2 + $0xf8] sm:$0xff] 0.0
        $region77: #{dgi1_forward.7} parent=68 // pred_fallthru
          _
        %v355 = vld [vmem:[#allocation2] sm:$0xff]
        %v356 = vld [vmem:[#allocation2 + $0x8] sm:$0xff]
        %v357 = vld [vmem:[#allocation2 + $0x10] sm:$0xff]
        %v358 = vld [vmem:[#allocation2 + $0x18] sm:$0xff]
        %v359 = vld [vmem:[#allocation2 + $0x20] sm:$0xff]
        %v360 = vld [vmem:[#allocation2 + $0x28] sm:$0xff]
        %v361 = vld [vmem:[#allocation2 + $0x30] sm:$0xff]
        %v362 = vld [vmem:[#allocation2 + $0x38] sm:$0xff]
        %v363 = vld [vmem:[#allocation2 + $0x40] sm:$0xff]
        %v364 = vld [vmem:[#allocation2 + $0x48] sm:$0xff]
        %v365 = vld [vmem:[#allocation2 + $0x50] sm:$0xff]
        %v366 = vld [vmem:[#allocation2 + $0x58] sm:$0xff]
        %v367 = vld [vmem:[#allocation2 + $0x60] sm:$0xff]
        %v368 = vld [vmem:[#allocation2 + $0x68] sm:$0xff]
        %v369 = vld [vmem:[#allocation2 + $0x70] sm:$0xff]
        %v370 = vld [vmem:[#allocation2 + $0x78] sm:$0xff]
        %v371 = vld [vmem:[#allocation2 + $0x80] sm:$0xff]
        %v372 = vld [vmem:[#allocation2 + $0x88] sm:$0xff]
        %v373 = vld [vmem:[#allocation2 + $0x90] sm:$0xff]
        %v374 = vld [vmem:[#allocation2 + $0x98] sm:$0xff]
        %v375 = vld [vmem:[#allocation2 + $0xa0] sm:$0xff]
        %v376 = vld [vmem:[#allocation2 + $0xa8] sm:$0xff]
        %v377 = vld [vmem:[#allocation2 + $0xb0] sm:$0xff]
        %v378 = vld [vmem:[#allocation2 + $0xb8] sm:$0xff]
        %v379 = vld [vmem:[#allocation2 + $0xc0] sm:$0xff]
        %v380 = vld [vmem:[#allocation2 + $0xc8] sm:$0xff]
        %v381 = vld [vmem:[#allocation2 + $0xd0] sm:$0xff]
        %v382 = vld [vmem:[#allocation2 + $0xd8] sm:$0xff]
        %v383 = vld [vmem:[#allocation2 + $0xe0] sm:$0xff]
        %v384 = vld [vmem:[#allocation2 + $0xe8] sm:$0xff]
        %v385 = vld [vmem:[#allocation2 + $0xf0] sm:$0xff]
        %v386 = vld [vmem:[#allocation2 + $0xf8] sm:$0xff]
        %v387 = vld [vmem:[%s275] sm:$0xf]
        %v388 = vld [vmem:[%s275 + $0x4] sm:$0xf]
        %v389 = vld [vmem:[%s275 + $0x8] sm:$0xf]
        %v390 = vld [vmem:[%s275 + $0xc] sm:$0xf]
        %v391 = vld [vmem:[%s275 + $0x10] sm:$0xf]
        %v392 = vld [vmem:[%s275 + $0x14] sm:$0xf]
        %v393 = vld [vmem:[%s275 + $0x18] sm:$0xf]
        %v394 = vld [vmem:[%s275 + $0x1c] sm:$0xf]
        %v395 = vld [vmem:[%s275 + $0x20] sm:$0xf]
        %v396 = vld [vmem:[%s275 + $0x24] sm:$0xf]
        %v397 = vld [vmem:[%s275 + $0x28] sm:$0xf]
        %v398 = vld [vmem:[%s275 + $0x2c] sm:$0xf]
        %v399 = vld [vmem:[%s275 + $0x30] sm:$0xf]
        %v400 = vld [vmem:[%s275 + $0x34] sm:$0xf]
        %v401 = vld [vmem:[%s275 + $0x38] sm:$0xf]
        %v402 = vld [vmem:[%s275 + $0x3c] sm:$0xf]
        %v403 = vld [vmem:[%s309] sm:$0xff]
        %v404 = vld [vmem:[%s309 + $0x8] sm:$0xff]
        %v405 = vld [vmem:[%s309 + $0x10] sm:$0xff]
        %v406 = vld [vmem:[%s309 + $0x18] sm:$0xff]
        %v407 = vld [vmem:[%s309 + $0x20] sm:$0xff]
        %v408 = vld [vmem:[%s309 + $0x28] sm:$0xff]
        %v409 = vld [vmem:[%s309 + $0x30] sm:$0xff]
        %v410 = vld [vmem:[%s309 + $0x38] sm:$0xff]
        %v411 = vld [vmem:[%s309 + $0x40] sm:$0xff]
        %v412 = vld [vmem:[%s309 + $0x48] sm:$0xff]
        %v413 = vld [vmem:[%s309 + $0x50] sm:$0xff]
        %v414 = vld [vmem:[%s309 + $0x58] sm:$0xff]
        %v415 = vld [vmem:[%s309 + $0x60] sm:$0xff]
        %v416 = vld [vmem:[%s309 + $0x68] sm:$0xff]
        %v417 = vld [vmem:[%s309 + $0x70] sm:$0xff]
        %v418 = vld [vmem:[%s309 + $0x78] sm:$0xff]
        %v435 = vunpack.c.l.b16 %v387
        %v436 = vunpack.c.l.b16 %v388
        %v437 = vunpack.c.l.b16 %v389
        %v438 = vunpack.c.l.b16 %v390
        %v439 = vunpack.c.l.b16 %v391
        %v440 = vunpack.c.l.b16 %v392
        %v441 = vunpack.c.l.b16 %v393
        %v442 = vunpack.c.l.b16 %v394
        %v443 = vunpack.c.l.b16 %v395
        %v444 = vunpack.c.l.b16 %v396
        %v445 = vunpack.c.l.b16 %v397
        %v446 = vunpack.c.l.b16 %v398
        %v447 = vunpack.c.l.b16 %v399
        %v448 = vunpack.c.l.b16 %v400
        %v449 = vunpack.c.l.b16 %v401
        %v450 = vunpack.c.l.b16 %v402
        %v451 = vpack.c.b16 %v436, %v435
        %v452 = vpack.c.b16 %v438, %v437
        %v453 = vpack.c.b16 %v440, %v439
        %v454 = vpack.c.b16 %v442, %v441
        %v455 = vpack.c.b16 %v444, %v443
        %v456 = vpack.c.b16 %v446, %v445
        %v457 = vpack.c.b16 %v448, %v447
        %v458 = vpack.c.b16 %v450, %v449
        %v483 = vunpack.c.l.b16 %v403
        %v484 = vunpack.c.h.b16 %v403
        %v485 = vunpack.c.l.b16 %v404
        %v486 = vunpack.c.h.b16 %v404
        %v487 = vunpack.c.l.b16 %v405
        %v488 = vunpack.c.h.b16 %v405
        %v489 = vunpack.c.l.b16 %v406
        %v490 = vunpack.c.h.b16 %v406
        %v491 = vunpack.c.l.b16 %v407
        %v492 = vunpack.c.h.b16 %v407
        %v493 = vunpack.c.l.b16 %v408
        %v494 = vunpack.c.h.b16 %v408
        %v495 = vunpack.c.l.b16 %v409
        %v496 = vunpack.c.h.b16 %v409
        %v497 = vunpack.c.l.b16 %v410
        %v498 = vunpack.c.h.b16 %v410
        %v499 = vunpack.c.l.b16 %v411
        %v500 = vunpack.c.h.b16 %v411
        %v501 = vunpack.c.l.b16 %v412
        %v502 = vunpack.c.h.b16 %v412
        %v503 = vunpack.c.l.b16 %v413
        %v504 = vunpack.c.h.b16 %v413
        %v505 = vunpack.c.l.b16 %v414
        %v506 = vunpack.c.h.b16 %v414
        %v507 = vunpack.c.l.b16 %v415
        %v508 = vunpack.c.h.b16 %v415
        %v509 = vunpack.c.l.b16 %v416
        %v510 = vunpack.c.h.b16 %v416
        %v511 = vunpack.c.l.b16 %v417
        %v512 = vunpack.c.h.b16 %v417
        %v513 = vunpack.c.l.b16 %v418
        %v514 = vunpack.c.h.b16 %v418
        %v515 = vpack.c.b16 %v485, %v483
        %v516 = vpack.c.b16 %v486, %v484
        %v517 = vpack.c.b16 %v489, %v487
        %v518 = vpack.c.b16 %v490, %v488
        %v519 = vpack.c.b16 %v493, %v491
        %v520 = vpack.c.b16 %v494, %v492
        %v521 = vpack.c.b16 %v497, %v495
        %v522 = vpack.c.b16 %v498, %v496
        %v523 = vpack.c.b16 %v501, %v499
        %v524 = vpack.c.b16 %v502, %v500
        %v525 = vpack.c.b16 %v505, %v503
        %v526 = vpack.c.b16 %v506, %v504
        %v527 = vpack.c.b16 %v509, %v507
        %v528 = vpack.c.b16 %v510, %v508
        %v529 = vpack.c.b16 %v513, %v511
        %v530 = vpack.c.b16 %v514, %v512
        %547 = vmatprep.subr.bf16.mxu0 %v516
        %548 = vmatpush1.bf16.msra.mxu0 %v515
        %549 = vmatprep.subr.bf16.mxu0 %v518
        %550 = vmatpush1.bf16.msra.mxu0 %v517
        %551 = vmatprep.subr.bf16.mxu0 %v520
        %552 = vmatpush1.bf16.msra.mxu0 %v519
        %553 = vmatprep.subr.bf16.mxu0 %v522
        %554 = vmatpush1.bf16.msra.mxu0 %v521
        %555 = vmatprep.subr.bf16.mxu0 %v524
        %556 = vmatpush1.bf16.msra.mxu0 %v523
        %557 = vmatprep.subr.bf16.mxu0 %v526
        %558 = vmatpush1.bf16.msra.mxu0 %v525
        %559 = vmatprep.subr.bf16.mxu0 %v528
        %560 = vmatpush1.bf16.msra.mxu0 %v527
        %561 = vmatprep.subr.bf16.mxu0 %v530
        %562 = vmatpush1.bf16.msra.mxu0 %v529
        %563 = vmatprep.subr.bf16.mxu0 0
        %564 = vmatpush1.bf16.msra.mxu0 0
        %565 = vmatprep.subr.bf16.mxu0 0
        %566 = vmatpush1.bf16.msra.mxu0 0
        %567 = vmatprep.subr.bf16.mxu0 0
        %568 = vmatpush1.bf16.msra.mxu0 0
        %569 = vmatprep.subr.bf16.mxu0 0
        %570 = vmatpush1.bf16.msra.mxu0 0
        %571 = vmatprep.subr.bf16.mxu0 0
        %572 = vmatpush1.bf16.msra.mxu0 0
        %573 = vmatprep.subr.bf16.mxu0 0
        %574 = vmatpush1.bf16.msra.mxu0 0
        %575 = vmatprep.subr.bf16.mxu0 0
        %576 = vmatpush1.bf16.msra.mxu0 0
        %577 = vmatprep.subr.bf16.mxu0 0
        %578 = vmatpush1.bf16.msra.mxu0 0
        %579 = vmatprep.mubr.bf16.mxu0 0
        %580 = vmatmul.mubr.bf16.gmra.mrb[0].mxu0 %v451
        %v581 = vpop.f32.mrb[0].mxu0
        %v582 = vadd.f32 0.0, %v581
        %v583 = vpop.f32.mrb[0].mxu0
        %v584 = vadd.f32 0.0, %v583
        %v585 = vpop.f32.mrb[0].mxu0
        %v586 = vadd.f32 0.0, %v585
        %v587 = vpop.f32.mrb[0].mxu0
        %v588 = vadd.f32 0.0, %v587
        %589 = vmatprep.mubr.bf16.mxu0 0
        %590 = vmatmul.mubr.bf16.gmra.mrb[0].mxu0 %v452
        %v591 = vpop.f32.mrb[0].mxu0
        %v592 = vadd.f32 0.0, %v591
        %v593 = vpop.f32.mrb[0].mxu0
        %v594 = vadd.f32 0.0, %v593
        %v595 = vpop.f32.mrb[0].mxu0
        %v596 = vadd.f32 0.0, %v595
        %v597 = vpop.f32.mrb[0].mxu0
        %v598 = vadd.f32 0.0, %v597
        %599 = vmatprep.mubr.bf16.mxu0 0
        %600 = vmatmul.mubr.bf16.gmra.mrb[0].mxu0 %v453
        %v601 = vpop.f32.mrb[0].mxu0
        %v602 = vadd.f32 0.0, %v601
        %v603 = vpop.f32.mrb[0].mxu0
        %v604 = vadd.f32 0.0, %v603
        %v605 = vpop.f32.mrb[0].mxu0
        %v606 = vadd.f32 0.0, %v605
        %v607 = vpop.f32.mrb[0].mxu0
        %v608 = vadd.f32 0.0, %v607
        %609 = vmatprep.mubr.bf16.mxu0 0
        %610 = vmatmul.mubr.bf16.gmra.mrb[0].mxu0 %v454
        %v611 = vpop.f32.mrb[0].mxu0
        %v612 = vadd.f32 0.0, %v611
        %v613 = vpop.f32.mrb[0].mxu0
        %v614 = vadd.f32 0.0, %v613
        %v615 = vpop.f32.mrb[0].mxu0
        %v616 = vadd.f32 0.0, %v615
        %v617 = vpop.f32.mrb[0].mxu0
        %v618 = vadd.f32 0.0, %v617
        %619 = vmatprep.mubr.bf16.mxu0 0
        %620 = vmatmul.mubr.bf16.gmra.mrb[0].mxu0 %v455
        %v621 = vpop.f32.mrb[0].mxu0
        %v622 = vadd.f32 0.0, %v621
        %v623 = vpop.f32.mrb[0].mxu0
        %v624 = vadd.f32 0.0, %v623
        %v625 = vpop.f32.mrb[0].mxu0
        %v626 = vadd.f32 0.0, %v625
        %v627 = vpop.f32.mrb[0].mxu0
        %v628 = vadd.f32 0.0, %v627
        %629 = vmatprep.mubr.bf16.mxu0 0
        %630 = vmatmul.mubr.bf16.gmra.mrb[0].mxu0 %v456
        %v631 = vpop.f32.mrb[0].mxu0
        %v632 = vadd.f32 0.0, %v631
        %v633 = vpop.f32.mrb[0].mxu0
        %v634 = vadd.f32 0.0, %v633
        %v635 = vpop.f32.mrb[0].mxu0
        %v636 = vadd.f32 0.0, %v635
        %v637 = vpop.f32.mrb[0].mxu0
        %v638 = vadd.f32 0.0, %v637
        %639 = vmatprep.mubr.bf16.mxu0 0
        %640 = vmatmul.mubr.bf16.gmra.mrb[0].mxu0 %v457
        %v641 = vpop.f32.mrb[0].mxu0
        %v642 = vadd.f32 0.0, %v641
        %v643 = vpop.f32.mrb[0].mxu0
        %v644 = vadd.f32 0.0, %v643
        %v645 = vpop.f32.mrb[0].mxu0
        %v646 = vadd.f32 0.0, %v645
        %v647 = vpop.f32.mrb[0].mxu0
        %v648 = vadd.f32 0.0, %v647
        %649 = vmatprep.mubr.bf16.mxu0 0
        %650 = vmatmul.mubr.bf16.gmra.mrb[0].mxu0 %v458
        %v651 = vpop.f32.mrb[0].mxu0
        %v652 = vadd.f32 0.0, %v651
        %v653 = vpop.f32.mrb[0].mxu0
        %v654 = vadd.f32 0.0, %v653
        %v655 = vpop.f32.mrb[0].mxu0
        %v656 = vadd.f32 0.0, %v655
        %v657 = vpop.f32.mrb[0].mxu0
        %v658 = vadd.f32 0.0, %v657
        %659 = vdwg.mxu0
        %v660 = vadd.f32 %v355, %v582
        %v661 = vadd.f32 %v356, %v584
        %v662 = vadd.f32 %v357, %v586
        %v663 = vadd.f32 %v358, %v588
        %v664 = vadd.f32 %v359, %v592
        %v665 = vadd.f32 %v360, %v594
        %v666 = vadd.f32 %v361, %v596
        %v667 = vadd.f32 %v362, %v598
        %v668 = vadd.f32 %v363, %v602
        %v669 = vadd.f32 %v364, %v604
        %v670 = vadd.f32 %v365, %v606
        %v671 = vadd.f32 %v366, %v608
        %v672 = vadd.f32 %v367, %v612
        %v673 = vadd.f32 %v368, %v614
        %v674 = vadd.f32 %v369, %v616
        %v675 = vadd.f32 %v370, %v618
        %v676 = vadd.f32 %v371, %v622
        %v677 = vadd.f32 %v372, %v624
        %v678 = vadd.f32 %v373, %v626
        %v679 = vadd.f32 %v374, %v628
        %v680 = vadd.f32 %v375, %v632
        %v681 = vadd.f32 %v376, %v634
        %v682 = vadd.f32 %v377, %v636
        %v683 = vadd.f32 %v378, %v638
        %v684 = vadd.f32 %v379, %v642
        %v685 = vadd.f32 %v380, %v644
        %v686 = vadd.f32 %v381, %v646
        %v687 = vadd.f32 %v382, %v648
        %v688 = vadd.f32 %v383, %v652
        %v689 = vadd.f32 %v384, %v654
        %v690 = vadd.f32 %v385, %v656
        %v691 = vadd.f32 %v386, %v658
        %692 = vst [vmem:[#allocation2] sm:$0xff] %v660
        %693 = vst [vmem:[#allocation2 + $0x8] sm:$0xff] %v661
        %694 = vst [vmem:[#allocation2 + $0x10] sm:$0xff] %v662
        %695 = vst [vmem:[#allocation2 + $0x18] sm:$0xff] %v663
        %696 = vst [vmem:[#allocation2 + $0x20] sm:$0xff] %v664
        %697 = vst [vmem:[#allocation2 + $0x28] sm:$0xff] %v665
        %698 = vst [vmem:[#allocation2 + $0x30] sm:$0xff] %v666
        %699 = vst [vmem:[#allocation2 + $0x38] sm:$0xff] %v667
        %700 = vst [vmem:[#allocation2 + $0x40] sm:$0xff] %v668
        %701 = vst [vmem:[#allocation2 + $0x48] sm:$0xff] %v669
        %702 = vst [vmem:[#allocation2 + $0x50] sm:$0xff] %v670
        %703 = vst [vmem:[#allocation2 + $0x58] sm:$0xff] %v671
        %704 = vst [vmem:[#allocation2 + $0x60] sm:$0xff] %v672
        %705 = vst [vmem:[#allocation2 + $0x68] sm:$0xff] %v673
        %706 = vst [vmem:[#allocation2 + $0x70] sm:$0xff] %v674
        %707 = vst [vmem:[#allocation2 + $0x78] sm:$0xff] %v675
        %708 = vst [vmem:[#allocation2 + $0x80] sm:$0xff] %v676
        %709 = vst [vmem:[#allocation2 + $0x88] sm:$0xff] %v677
        %710 = vst [vmem:[#allocation2 + $0x90] sm:$0xff] %v678
        %711 = vst [vmem:[#allocation2 + $0x98] sm:$0xff] %v679
        %712 = vst [vmem:[#allocation2 + $0xa0] sm:$0xff] %v680
        %713 = vst [vmem:[#allocation2 + $0xa8] sm:$0xff] %v681
        %714 = vst [vmem:[#allocation2 + $0xb0] sm:$0xff] %v682
        %715 = vst [vmem:[#allocation2 + $0xb8] sm:$0xff] %v683
        %716 = vst [vmem:[#allocation2 + $0xc0] sm:$0xff] %v684
        %717 = vst [vmem:[#allocation2 + $0xc8] sm:$0xff] %v685
        %718 = vst [vmem:[#allocation2 + $0xd0] sm:$0xff] %v686
        %719 = vst [vmem:[#allocation2 + $0xd8] sm:$0xff] %v687
        %720 = vst [vmem:[#allocation2 + $0xe0] sm:$0xff] %v688
        %721 = vst [vmem:[#allocation2 + $0xe8] sm:$0xff] %v689
        %722 = vst [vmem:[#allocation2 + $0xf0] sm:$0xff] %v690
        %723 = vst [vmem:[#allocation2 + $0xf8] sm:$0xff] %v691
        %p724 = scmp.eq.s32.totalorder %s19, 1
        // Predicated region
        $region78: #{dgi1_forward.7} parent=68 // pred_check
          %p725 = pneg %p724
        $region79: #{dgi1_forward.7} parent=68 // pred_check_branch
          %727 = sbr.rel (%p725) target = $region81
        $region80: #{dgi1_forward.7} parent=68 // pred_region
          %v728 = vld [vmem:[#allocation2] sm:$0xff]
          %v729 = vld [vmem:[#allocation2 + $0x8] sm:$0xff]
          %v730 = vld [vmem:[#allocation2 + $0x10] sm:$0xff]
          %v731 = vld [vmem:[#allocation2 + $0x18] sm:$0xff]
          %v732 = vld [vmem:[#allocation2 + $0x20] sm:$0xff]
          %v733 = vld [vmem:[#allocation2 + $0x28] sm:$0xff]
          %v734 = vld [vmem:[#allocation2 + $0x30] sm:$0xff]
          %v735 = vld [vmem:[#allocation2 + $0x38] sm:$0xff]
          %v736 = vld [vmem:[#allocation2 + $0x40] sm:$0xff]
          %v737 = vld [vmem:[#allocation2 + $0x48] sm:$0xff]
          %v738 = vld [vmem:[#allocation2 + $0x50] sm:$0xff]
          %v739 = vld [vmem:[#allocation2 + $0x58] sm:$0xff]
          %v740 = vld [vmem:[#allocation2 + $0x60] sm:$0xff]
          %v741 = vld [vmem:[#allocation2 + $0x68] sm:$0xff]
          %v742 = vld [vmem:[#allocation2 + $0x70] sm:$0xff]
          %v743 = vld [vmem:[#allocation2 + $0x78] sm:$0xff]
          %v744 = vld [vmem:[#allocation2 + $0x80] sm:$0xff]
          %v745 = vld [vmem:[#allocation2 + $0x88] sm:$0xff]
          %v746 = vld [vmem:[#allocation2 + $0x90] sm:$0xff]
          %v747 = vld [vmem:[#allocation2 + $0x98] sm:$0xff]
          %v748 = vld [vmem:[#allocation2 + $0xa0] sm:$0xff]
          %v749 = vld [vmem:[#allocation2 + $0xa8] sm:$0xff]
          %v750 = vld [vmem:[#allocation2 + $0xb0] sm:$0xff]
          %v751 = vld [vmem:[#allocation2 + $0xb8] sm:$0xff]
          %v752 = vld [vmem:[#allocation2 + $0xc0] sm:$0xff]
          %v753 = vld [vmem:[#allocation2 + $0xc8] sm:$0xff]
          %v754 = vld [vmem:[#allocation2 + $0xd0] sm:$0xff]
          %v755 = vld [vmem:[#allocation2 + $0xd8] sm:$0xff]
          %v756 = vld [vmem:[#allocation2 + $0xe0] sm:$0xff]
          %v757 = vld [vmem:[#allocation2 + $0xe8] sm:$0xff]
          %v758 = vld [vmem:[#allocation2 + $0xf0] sm:$0xff]
          %v759 = vld [vmem:[#allocation2 + $0xf8] sm:$0xff]
          %v760 = vld [vmem:[%s2] sm:$0x3]
          %v762 = vlaneseq
          %v763 = vshrl.u32 %v762, 7
          %v764 = vsub.s32 0, %v763
          %v765 = vrot.slane %v760, %v764
          %v766 = vlaneseq
          %v767 = vshrl.u32 %v766, 7
          %v768 = vsub.s32 1, %v767
          %v769 = vrot.slane %v760, %v768
          %v772 = vadd.f32 %v728, %v765
          %v773 = vadd.f32 %v729, %v769
          %v774 = vadd.f32 %v730, %v765
          %v775 = vadd.f32 %v731, %v769
          %v776 = vadd.f32 %v732, %v765
          %v777 = vadd.f32 %v733, %v769
          %v778 = vadd.f32 %v734, %v765
          %v779 = vadd.f32 %v735, %v769
          %v780 = vadd.f32 %v736, %v765
          %v781 = vadd.f32 %v737, %v769
          %v782 = vadd.f32 %v738, %v765
          %v783 = vadd.f32 %v739, %v769
          %v784 = vadd.f32 %v740, %v765
          %v785 = vadd.f32 %v741, %v769
          %v786 = vadd.f32 %v742, %v765
          %v787 = vadd.f32 %v743, %v769
          %v788 = vadd.f32 %v744, %v765
          %v789 = vadd.f32 %v745, %v769
          %v790 = vadd.f32 %v746, %v765
          %v791 = vadd.f32 %v747, %v769
          %v792 = vadd.f32 %v748, %v765
          %v793 = vadd.f32 %v749, %v769
          %v794 = vadd.f32 %v750, %v765
          %v795 = vadd.f32 %v751, %v769
          %v796 = vadd.f32 %v752, %v765
          %v797 = vadd.f32 %v753, %v769
          %v798 = vadd.f32 %v754, %v765
          %v799 = vadd.f32 %v755, %v769
          %v800 = vadd.f32 %v756, %v765
          %v801 = vadd.f32 %v757, %v769
          %v802 = vadd.f32 %v758, %v765
          %v803 = vadd.f32 %v759, %v769
          %v804 = vmax.f32 %v772, 0.0
          %v805 = vmax.f32 %v773, 0.0
          %v806 = vmax.f32 %v774, 0.0
          %v807 = vmax.f32 %v775, 0.0
          %v808 = vmax.f32 %v776, 0.0
          %v809 = vmax.f32 %v777, 0.0
          %v810 = vmax.f32 %v778, 0.0
          %v811 = vmax.f32 %v779, 0.0
          %v812 = vmax.f32 %v780, 0.0
          %v813 = vmax.f32 %v781, 0.0
          %v814 = vmax.f32 %v782, 0.0
          %v815 = vmax.f32 %v783, 0.0
          %v816 = vmax.f32 %v784, 0.0
          %v817 = vmax.f32 %v785, 0.0
          %v818 = vmax.f32 %v786, 0.0
          %v819 = vmax.f32 %v787, 0.0
          %v820 = vmax.f32 %v788, 0.0
          %v821 = vmax.f32 %v789, 0.0
          %v822 = vmax.f32 %v790, 0.0
          %v823 = vmax.f32 %v791, 0.0
          %v824 = vmax.f32 %v792, 0.0
          %v825 = vmax.f32 %v793, 0.0
          %v826 = vmax.f32 %v794, 0.0
          %v827 = vmax.f32 %v795, 0.0
          %v828 = vmax.f32 %v796, 0.0
          %v829 = vmax.f32 %v797, 0.0
          %v830 = vmax.f32 %v798, 0.0
          %v831 = vmax.f32 %v799, 0.0
          %v832 = vmax.f32 %v800, 0.0
          %v833 = vmax.f32 %v801, 0.0
          %v834 = vmax.f32 %v802, 0.0
          %v835 = vmax.f32 %v803, 0.0
          %836 = vst [vmem:[%s316] sm:$0xff] %v804
          %837 = vst [vmem:[%s316 + $0x8] sm:$0xff] %v805
          %838 = vst [vmem:[%s316 + $0x10] sm:$0xff] %v806
          %839 = vst [vmem:[%s316 + $0x18] sm:$0xff] %v807
          %840 = vst [vmem:[%s316 + $0x20] sm:$0xff] %v808
          %841 = vst [vmem:[%s316 + $0x28] sm:$0xff] %v809
          %842 = vst [vmem:[%s316 + $0x30] sm:$0xff] %v810
          %843 = vst [vmem:[%s316 + $0x38] sm:$0xff] %v811
          %844 = vst [vmem:[%s316 + $0x40] sm:$0xff] %v812
          %845 = vst [vmem:[%s316 + $0x48] sm:$0xff] %v813
          %846 = vst [vmem:[%s316 + $0x50] sm:$0xff] %v814
          %847 = vst [vmem:[%s316 + $0x58] sm:$0xff] %v815
          %848 = vst [vmem:[%s316 + $0x60] sm:$0xff] %v816
          %849 = vst [vmem:[%s316 + $0x68] sm:$0xff] %v817
          %850 = vst [vmem:[%s316 + $0x70] sm:$0xff] %v818
          %851 = vst [vmem:[%s316 + $0x78] sm:$0xff] %v819
          %852 = vst [vmem:[%s316 + $0x80] sm:$0xff] %v820
          %853 = vst [vmem:[%s316 + $0x88] sm:$0xff] %v821
          %854 = vst [vmem:[%s316 + $0x90] sm:$0xff] %v822
          %855 = vst [vmem:[%s316 + $0x98] sm:$0xff] %v823
          %856 = vst [vmem:[%s316 + $0xa0] sm:$0xff] %v824
          %857 = vst [vmem:[%s316 + $0xa8] sm:$0xff] %v825
          %858 = vst [vmem:[%s316 + $0xb0] sm:$0xff] %v826
          %859 = vst [vmem:[%s316 + $0xb8] sm:$0xff] %v827
          %860 = vst [vmem:[%s316 + $0xc0] sm:$0xff] %v828
          %861 = vst [vmem:[%s316 + $0xc8] sm:$0xff] %v829
          %862 = vst [vmem:[%s316 + $0xd0] sm:$0xff] %v830
          %863 = vst [vmem:[%s316 + $0xd8] sm:$0xff] %v831
          %864 = vst [vmem:[%s316 + $0xe0] sm:$0xff] %v832
          %865 = vst [vmem:[%s316 + $0xe8] sm:$0xff] %v833
          %866 = vst [vmem:[%s316 + $0xf0] sm:$0xff] %v834
          %867 = vst [vmem:[%s316 + $0xf8] sm:$0xff] %v835
        $region81: #{dgi1_forward.7} parent=68 // pred_fallthru
          _
        %s868 = smul.u32 16, %s18
        %p869 = scmp.lt.s32.totalorder %s868, 31
        %s870 = scalar_select %p869, %s868, 31
        %s871 = smul.addr %s870, 2
        %s872 = smul.addr %s871, 8
        %s873 = scalar_lea.vmem %s3, %s872
        // Predicated region
        $region82: #{dgi1_forward.7} parent=68 // pred_check
          %p874 = pneg %p119
        $region83: #{dgi1_forward.7} parent=68 // pred_check_branch
          %876 = sbr.rel (%p874) target = $region85
        $region84: #{dgi1_forward.7} parent=68 // pred_region
          %s877 = smul.u32 16, %s18
        $region85: #{dgi1_forward.7} parent=68 // pred_fallthru
          _
      $region69: #{dgi1_forward.7} parent=5 // pred_fallthru
        _
      %p878 = scmp.le.s32.totalorder 2, %s9
      // Predicated region
      $region86: #{dgi1_forward.7} parent=5 // pred_check
        %p879 = pneg %p878
      $region87: #{dgi1_forward.7} parent=5 // pred_check_branch
        %881 = sbr.rel (%p879) target = $region89
      $region88: #{dgi1_forward.7} parent=5 // pred_region
        %s882 = ssub.s32 %s9, 2
        // Predicated region
        $region90: #{dgi1_forward.7} parent=88 // pred_check
          %p883 = pneg %p125
        $region91: #{dgi1_forward.7} parent=88 // pred_check_branch
          %885 = sbr.rel (%p883) target = $region93
        $region92: #{dgi1_forward.7} parent=88 // pred_region
          %s886 = smul.u32 16, %s20
          %p887 = scmp.lt.s32.totalorder %s886, 31
          %s888 = scalar_select %p887, %s886, 31
          %s889 = smul.addr %s888, 2
          %s890 = smul.addr %s889, 8
          %s891 = scalar_lea.vmem %s3, %s890
        $region93: #{dgi1_forward.7} parent=88 // pred_fallthru
          _
      $region89: #{dgi1_forward.7} parent=5 // pred_fallthru
        _
    $region6: #{dgi1_forward.7} parent=1 // loop_footer
      %s13 = sadd.s32 1, %s9
    $region7: #{dgi1_forward.7} parent=1 // loop_footer_branch
      %8 = sbr.rel target = $region3
    $region8: #{dgi1_forward.7} parent=1 // loop_exit
      _

// kernel: dgi1_forward.10
$region0: #{dgi1_forward.10}
  #allocation0 [shape = 'u32[]', space=smem, size = 0x4, offset = 0x4, fixed_abs, tag = 'smem constant byte address 0x4 - core index']
  #allocation1 [shape = 'u32[144,128]{1,0:T(1,128)}', space=vmem, size = 0x12000, scoped, tag = 'internal scratch']
  #allocation2 [shape = 'f32[1,128]{1,0:T(1,128)}', space=vmem, size = 0x200, scoped, tag = 'scratch operand']
  %s0 = inlined_call_operand.vmem [shape: f32[256,256], index: 0, kind: input, shape index: {}]
  %s1 = inlined_call_operand.vmem [shape: f32[128,128], index: 1, kind: input, shape index: {}]
  %s2 = inlined_call_operand.vmem [shape: f32[1,128], index: 2, kind: output, shape index: {}]
  %s3 = sld [smem:[#allocation0]]
  $region87: #{dgi1_forward.10} parent=0
    _
  %s5 = ssub.s32 1, %s3
  %s6 = scalar_select 0, %s5, %s3
  $region1: #{dgi1_forward.10} parent=0
    #allocation3 [shape = 'u8[131072]{0}', space=vmem, size = 0x20000, scoped, tag = 'input window, operand 0']
    loop: start=0, step=1, limit=4
    $region2: #{dgi1_forward.10} parent=1 // loop_pre_header
      _
    $region3: #{dgi1_forward.10} parent=1 // loop_header
      %s8 = sphi 0, %s12
      %p9 = scmp.ge.s32.totalorder %s8, 4
      %s18 = sphi 0, %s20
      %s21 = sphi 0, %s18
      %s22 = sphi 0, %s21
      %s38 = sphi 0, %s22
      %s42 = sphi 0, %s42
      %s44 = sphi 0, %s42
      %s45 = sphi 0, %s44
      %s59 = sphi 0, %s45
      %s63 = sphi 0, %s63
      %s65 = sphi 0, %s63
      %s66 = sphi 0, %s65
      %s80 = sphi 0, %s66
    $region4: #{dgi1_forward.10} parent=1 // loop_header_branch
      %11 = sbr.rel (%p9) target = $region8
    $region5: #{dgi1_forward.10} parent=1 // loop_body
      %s13 = ssub.s32 %s8, 1
      %s14 = ssub.s32 %s8, 2
      %s15 = sadd.s32 %s8, 1
      %s16 = ssub.s32 %s8, %s15
      %p17 = scmp.eq.s32.totalorder %s16, 0
      %s19 = sadd.s32 %s18, 1
      %s20 = scalar_select %p17, %s18, %s19
      %p23 = pneg %p17
      %p24 = scmp.eq.s32.totalorder %s8, 1
      %p25 = por %p23, %p24
      %p26 = scmp.ne.s32.totalorder %s18, %s21
      %p27 = scmp.eq.s32.totalorder %s8, 0
      %p28 = por %p26, %p27
      %p29 = scmp.ne.s32.totalorder %s18, %s21
      %p30 = scmp.eq.s32.totalorder %s13, 1
      %p31 = por %p29, %p30
      %p32 = scmp.ne.s32.totalorder %s21, %s22
      %p33 = scmp.eq.s32.totalorder %s13, 0
      %p34 = por %p32, %p33
      %p35 = scmp.ne.s32.totalorder %s21, %s22
      %p36 = scmp.eq.s32.totalorder %s14, 1
      %p37 = por %p35, %p36
      %p39 = scmp.ne.s32.totalorder %s22, %s38
      %p40 = scmp.eq.s32.totalorder %s14, 0
      %p41 = por %p39, %p40
      %s43 = sadd.s32 %s42, 1
      %p46 = scmp.eq.s32.totalorder %s8, 1
      %p47 = scmp.ne.s32.totalorder %s42, %s44
      %p48 = scmp.eq.s32.totalorder %s8, 0
      %p49 = por %p47, %p48
      %p50 = scmp.ne.s32.totalorder %s42, %s44
      %p51 = scmp.eq.s32.totalorder %s13, 1
      %p52 = por %p50, %p51
      %p53 = scmp.ne.s32.totalorder %s44, %s45
      %p54 = scmp.eq.s32.totalorder %s13, 0
      %p55 = por %p53, %p54
      %p56 = scmp.ne.s32.totalorder %s44, %s45
      %p57 = scmp.eq.s32.totalorder %s14, 1
      %p58 = por %p56, %p57
      %p60 = scmp.ne.s32.totalorder %s45, %s59
      %p61 = scmp.eq.s32.totalorder %s14, 0
      %p62 = por %p60, %p61
      %s64 = sadd.s32 %s63, 1
      %p67 = scmp.eq.s32.totalorder %s8, 1
      %p68 = scmp.ne.s32.totalorder %s63, %s65
      %p69 = scmp.eq.s32.totalorder %s8, 0
      %p70 = por %p68, %p69
      %p71 = scmp.ne.s32.totalorder %s63, %s65
      %p72 = scmp.eq.s32.totalorder %s13, 1
      %p73 = por %p71, %p72
      %p74 = scmp.ne.s32.totalorder %s65, %s66
      %p75 = scmp.eq.s32.totalorder %s13, 0
      %p76 = por %p74, %p75
      %p77 = scmp.ne.s32.totalorder %s65, %s66
      %p78 = scmp.eq.s32.totalorder %s14, 1
      %p79 = por %p77, %p78
      %p81 = scmp.ne.s32.totalorder %s66, %s80
      %p82 = scmp.eq.s32.totalorder %s14, 0
      %p83 = por %p81, %p82
      %p84 = scmp.le.s32.totalorder 1, %s8
      %p85 = scmp.lt.s32.totalorder %s8, 3
      %p86 = pnand %p84, %p85
      %p87 = pneg %p86
      // Predicated region
      $region9: #{dgi1_forward.10} parent=5 // pred_check
        _
      $region10: #{dgi1_forward.10} parent=5 // pred_check_branch
        %89 = sbr.rel (%p86) target = $region12
      $region11: #{dgi1_forward.10} parent=5 // pred_region
        %s90 = ssub.s32 %s8, 1
        // Predicated region
        $region13: #{dgi1_forward.10} parent=11 // pred_check
          %p91 = pneg %p55
        $region14: #{dgi1_forward.10} parent=11 // pred_check_branch
          %93 = sbr.rel (%p91) target = $region16
        $region15: #{dgi1_forward.10} parent=11 // pred_region
          _
        $region16: #{dgi1_forward.10} parent=11 // pred_fallthru
          _
      $region12: #{dgi1_forward.10} parent=5 // pred_fallthru
        _
      %p94 = scmp.lt.s32.totalorder %s8, 2
      // Predicated region
      $region17: #{dgi1_forward.10} parent=5 // pred_check
        %p95 = pneg %p94
      $region18: #{dgi1_forward.10} parent=5 // pred_check_branch
        %97 = sbr.rel (%p95) target = $region20
      $region19: #{dgi1_forward.10} parent=5 // pred_region
        // Predicated region
        $region21: #{dgi1_forward.10} parent=19 // pred_check
          %p98 = pneg %p28
        $region22: #{dgi1_forward.10} parent=19 // pred_check_branch
          %100 = sbr.rel (%p98) target = $region24
        $region23: #{dgi1_forward.10} parent=19 // pred_region
          %s101 = sand.u32 %s18, 1
          %s102 = sand.u32 %s18, 1
          %s103 = smul.addr %s102, 128
          %s104 = scalar_lea.vmem [#allocation3], %s103
          %s105 = smul.u32 16, %s8
          %s106 = smul.addr %s105, 2
          %s107 = smul.addr %s106, 8
          %s108 = scalar_lea.vmem %s0, %s107
          // Predicated region
          $region25: #{dgi1_forward.10} parent=23 // pred_check
            _
          $region26: #{dgi1_forward.10} parent=23 // pred_check_branch
            %110 = sbr.rel (0) target = $region28
          $region27: #{dgi1_forward.10} parent=23 // pred_region
            // Predicated region
            $region29: #{dgi1_forward.10} parent=27 // pred_check
              _
            $region30: #{dgi1_forward.10} parent=27 // pred_check_branch
              %112 = sbr.rel (0) target = $region32
            $region31: #{dgi1_forward.10} parent=27 // pred_region
              // Predicated region
              $region44: #{dgi1_forward.10} parent=31 // pred_check
                _
              $region45: #{dgi1_forward.10} parent=31 // pred_check_branch
                %157 = sbr.rel (0) target = $region47
              $region46: #{dgi1_forward.10} parent=31 // pred_region
                loop: start=0, step=1, limit=1
                $region48: #{dgi1_forward.10} parent=46 // loop_pre_header
                  _
                $region49: #{dgi1_forward.10} parent=46 // loop_header
                  %s159 = sphi 0, %s163
                  %p160 = scmp.ge.s32.totalorder %s159, 1
                  %s164 = sphi %s108, %s108
                  %s165 = sphi %s104, %s104
                $region50: #{dgi1_forward.10} parent=46 // loop_header_branch
                  %162 = sbr.rel (%p160) target = $region54
                $region51: #{dgi1_forward.10} parent=46 // loop_body
                  %v166 = vld [vmem:[%s164] sm:$0xff]
                  %167 = vst [vmem:[%s165] sm:$0xff] %v166
                  %v168 = vld [vmem:[%s164 + $0x10] sm:$0xff]
                  %169 = vst [vmem:[%s165 + $0x8] sm:$0xff] %v168
                  %v170 = vld [vmem:[%s164 + $0x20] sm:$0xff]
                  %171 = vst [vmem:[%s165 + $0x10] sm:$0xff] %v170
                  %v172 = vld [vmem:[%s164 + $0x30] sm:$0xff]
                  %173 = vst [vmem:[%s165 + $0x18] sm:$0xff] %v172
                  %v174 = vld [vmem:[%s164 + $0x40] sm:$0xff]
                  %175 = vst [vmem:[%s165 + $0x20] sm:$0xff] %v174
                  %v176 = vld [vmem:[%s164 + $0x50] sm:$0xff]
                  %177 = vst [vmem:[%s165 + $0x28] sm:$0xff] %v176
                  %v178 = vld [vmem:[%s164 + $0x60] sm:$0xff]
                  %179 = vst [vmem:[%s165 + $0x30] sm:$0xff] %v178
                  %v180 = vld [vmem:[%s164 + $0x70] sm:$0xff]
                  %181 = vst [vmem:[%s165 + $0x38] sm:$0xff] %v180
                  %v182 = vld [vmem:[%s164 + $0x80] sm:$0xff]
                  %183 = vst [vmem:[%s165 + $0x40] sm:$0xff] %v182
                  %v184 = vld [vmem:[%s164 + $0x90] sm:$0xff]
                  %185 = vst [vmem:[%s165 + $0x48] sm:$0xff] %v184
                  %v186 = vld [vmem:[%s164 + $0xa0] sm:$0xff]
                  %187 = vst [vmem:[%s165 + $0x50] sm:$0xff] %v186
                  %v188 = vld [vmem:[%s164 + $0xb0] sm:$0xff]
                  %189 = vst [vmem:[%s165 + $0x58] sm:$0xff] %v188
                  %v190 = vld [vmem:[%s164 + $0xc0] sm:$0xff]
                  %191 = vst [vmem:[%s165 + $0x60] sm:$0xff] %v190
                  %v192 = vld [vmem:[%s164 + $0xd0] sm:$0xff]
                  %193 = vst [vmem:[%s165 + $0x68] sm:$0xff] %v192
                  %v194 = vld [vmem:[%s164 + $0xe0] sm:$0xff]
                  %195 = vst [vmem:[%s165 + $0x70] sm:$0xff] %v194
                  %v196 = vld [vmem:[%s164 + $0xf0] sm:$0xff]
                  %197 = vst [vmem:[%s165 + $0x78] sm:$0xff] %v196
                $region52: #{dgi1_forward.10} parent=46 // loop_footer
                  %s163 = sadd.s32 1, %s159
                $region53: #{dgi1_forward.10} parent=46 // loop_footer_branch
                  %158 = sbr.rel target = $region49
                $region54: #{dgi1_forward.10} parent=46 // loop_exit
                  _
              $region47: #{dgi1_forward.10} parent=31 // pred_fallthru
                _
              // Predicated region
              $region55: #{dgi1_forward.10} parent=31 // pred_check
                _
              $region56: #{dgi1_forward.10} parent=31 // pred_check_branch
                %199 = sbr.rel target = $region58
              $region57: #{dgi1_forward.10} parent=31 // pred_region
                _
              $region58: #{dgi1_forward.10} parent=31 // pred_fallthru
                _
            $region32: #{dgi1_forward.10} parent=27 // pred_fallthru
              _
            // Predicated region
            $region33: #{dgi1_forward.10} parent=27 // pred_check
              _
            $region34: #{dgi1_forward.10} parent=27 // pred_check_branch
              %114 = sbr.rel target = $region36
            $region35: #{dgi1_forward.10} parent=27 // pred_region
              loop: start=0, step=1, limit=1
              $region37: #{dgi1_forward.10} parent=35 // loop_pre_header
                _
              $region38: #{dgi1_forward.10} parent=35 // loop_header
                %s117 = sphi 0, %s121
                %p118 = scmp.ge.s32.totalorder %s117, 1
                %s122 = sphi %s108, %s108
                %s123 = sphi %s104, %s104
              $region39: #{dgi1_forward.10} parent=35 // loop_header_branch
                %120 = sbr.rel (%p118) target = $region43
              $region40: #{dgi1_forward.10} parent=35 // loop_body
                %v124 = vld [vmem:[%s122] sm:$0xff]
                %125 = vst [vmem:[%s123] sm:$0xff] %v124
                %v126 = vld [vmem:[%s122 + $0x10] sm:$0xff]
                %127 = vst [vmem:[%s123 + $0x8] sm:$0xff] %v126
                %v128 = vld [vmem:[%s122 + $0x20] sm:$0xff]
                %129 = vst [vmem:[%s123 + $0x10] sm:$0xff] %v128
                %v130 = vld [vmem:[%s122 + $0x30] sm:$0xff]
                %131 = vst [vmem:[%s123 + $0x18] sm:$0xff] %v130
                %v132 = vld [vmem:[%s122 + $0x40] sm:$0xff]
                %133 = vst [vmem:[%s123 + $0x20] sm:$0xff] %v132
                %v134 = vld [vmem:[%s122 + $0x50] sm:$0xff]
                %135 = vst [vmem:[%s123 + $0x28] sm:$0xff] %v134
                %v136 = vld [vmem:[%s122 + $0x60] sm:$0xff]
                %137 = vst [vmem:[%s123 + $0x30] sm:$0xff] %v136
                %v138 = vld [vmem:[%s122 + $0x70] sm:$0xff]
                %139 = vst [vmem:[%s123 + $0x38] sm:$0xff] %v138
                %v140 = vld [vmem:[%s122 + $0x80] sm:$0xff]
                %141 = vst [vmem:[%s123 + $0x40] sm:$0xff] %v140
                %v142 = vld [vmem:[%s122 + $0x90] sm:$0xff]
                %143 = vst [vmem:[%s123 + $0x48] sm:$0xff] %v142
                %v144 = vld [vmem:[%s122 + $0xa0] sm:$0xff]
                %145 = vst [vmem:[%s123 + $0x50] sm:$0xff] %v144
                %v146 = vld [vmem:[%s122 + $0xb0] sm:$0xff]
                %147 = vst [vmem:[%s123 + $0x58] sm:$0xff] %v146
                %v148 = vld [vmem:[%s122 + $0xc0] sm:$0xff]
                %149 = vst [vmem:[%s123 + $0x60] sm:$0xff] %v148
                %v150 = vld [vmem:[%s122 + $0xd0] sm:$0xff]
                %151 = vst [vmem:[%s123 + $0x68] sm:$0xff] %v150
                %v152 = vld [vmem:[%s122 + $0xe0] sm:$0xff]
                %153 = vst [vmem:[%s123 + $0x70] sm:$0xff] %v152
                %v154 = vld [vmem:[%s122 + $0xf0] sm:$0xff]
                %155 = vst [vmem:[%s123 + $0x78] sm:$0xff] %v154
              $region41: #{dgi1_forward.10} parent=35 // loop_footer
                %s121 = sadd.s32 1, %s117
              $region42: #{dgi1_forward.10} parent=35 // loop_footer_branch
                %116 = sbr.rel target = $region38
              $region43: #{dgi1_forward.10} parent=35 // loop_exit
                _
            $region36: #{dgi1_forward.10} parent=27 // pred_fallthru
              _
          $region28: #{dgi1_forward.10} parent=23 // pred_fallthru
            _
          %200 = vnop
        $region24: #{dgi1_forward.10} parent=19 // pred_fallthru
          _
      $region20: #{dgi1_forward.10} parent=5 // pred_fallthru
        _
      %p201 = scmp.le.s32.totalorder 1, %s8
      %p202 = scmp.lt.s32.totalorder %s8, 3
      %p203 = pnand %p201, %p202
      %p204 = pneg %p203
      // Predicated region
      $region59: #{dgi1_forward.10} parent=5 // pred_check
        _
      $region60: #{dgi1_forward.10} parent=5 // pred_check_branch
        %206 = sbr.rel (%p203) target = $region62
      $region61: #{dgi1_forward.10} parent=5 // pred_region
        %s207 = ssub.s32 %s8, 1
        %s208 = sand.u32 %s21, 1
        %s209 = sand.u32 %s21, 1
        %s210 = smul.addr %s209, 128
        %s211 = scalar_lea.vmem [#allocation3], %s210
        // Predicated region
        $region63: #{dgi1_forward.10} parent=61 // pred_check
          %p212 = pneg %p34
        $region64: #{dgi1_forward.10} parent=61 // pred_check_branch
          %214 = sbr.rel (%p212) target = $region66
        $region65: #{dgi1_forward.10} parent=61 // pred_region
          _
        $region66: #{dgi1_forward.10} parent=61 // pred_fallthru
          _
        %s215 = sand.u32 %s21, 1
        %s216 = sand.u32 %s21, 1
        %s217 = smul.addr %s216, 128
        %s218 = scalar_lea.vmem [#allocation3], %s217
        %p219 = pneg %p34
        %p220 = pneg %p31
        %p221 = pneg %p55
        %p222 = pneg %p52
        %p223 = pneg %p76
        %p224 = pneg %p73
        %s225 = smul.u32 16, %s13
        %p226 = scmp.eq.s32.totalorder %s13, 0
        // Predicated region
        $region67: #{dgi1_forward.10} parent=61 // pred_check
          %p227 = pneg %p226
        $region68: #{dgi1_forward.10} parent=61 // pred_check_branch
          %229 = sbr.rel (%p227) target = $region70
        $region69: #{dgi1_forward.10} parent=61 // pred_region
          %230 = vst [vmem:[#allocation2] sm:$0x1] 0.0
        $region70: #{dgi1_forward.10} parent=61 // pred_fallthru
          _
        %v231 = vld [vmem:[#allocation2] sm:$0x1]
        %v232 = vld [vmem:[%s211] sm:$0xff]
        %v233 = vld [vmem:[%s211 + $0x8] sm:$0xff]
        %v234 = vld [vmem:[%s211 + $0x10] sm:$0xff]
        %v235 = vld [vmem:[%s211 + $0x18] sm:$0xff]
        %v236 = vld [vmem:[%s211 + $0x20] sm:$0xff]
        %v237 = vld [vmem:[%s211 + $0x28] sm:$0xff]
        %v238 = vld [vmem:[%s211 + $0x30] sm:$0xff]
        %v239 = vld [vmem:[%s211 + $0x38] sm:$0xff]
        %v240 = vld [vmem:[%s211 + $0x40] sm:$0xff]
        %v241 = vld [vmem:[%s211 + $0x48] sm:$0xff]
        %v242 = vld [vmem:[%s211 + $0x50] sm:$0xff]
        %v243 = vld [vmem:[%s211 + $0x58] sm:$0xff]
        %v244 = vld [vmem:[%s211 + $0x60] sm:$0xff]
        %v245 = vld [vmem:[%s211 + $0x68] sm:$0xff]
        %v246 = vld [vmem:[%s211 + $0x70] sm:$0xff]
        %v247 = vld [vmem:[%s211 + $0x78] sm:$0xff]
        %v248 = vadd.f32 %v232, %v233
        %v249 = vadd.f32 %v248, %v234
        %v250 = vadd.f32 %v249, %v235
        %v251 = vadd.f32 %v250, %v236
        %v252 = vadd.f32 %v251, %v237
        %v253 = vadd.f32 %v252, %v238
        %v254 = vadd.f32 %v253, %v239
        %v255 = vadd.f32 %v254, %v240
        %v256 = vadd.f32 %v255, %v241
        %v257 = vadd.f32 %v256, %v242
        %v258 = vadd.f32 %v257, %v243
        %v259 = vadd.f32 %v258, %v244
        %v260 = vadd.f32 %v259, %v245
        %v261 = vadd.f32 %v260, %v246
        %v262 = vadd.f32 %v261, %v247
        %v263 = vrot.slane %v262, 4
        %v264 = vadd.f32 %v262, %v263
        %v265 = vrot.slane %v264, 2
        %v266 = vadd.f32 %v264, %v265
        %v267 = vrot.slane %v266, 1
        %v268 = vadd.f32 %v266, %v267
        %v269 = vadd.f32 %v231, %v268
        %270 = vst [vmem:[#allocation2] sm:$0x1] %v269
        %p271 = scmp.eq.s32.totalorder %s13, 1
        // Predicated region
        $region71: #{dgi1_forward.10} parent=61 // pred_check
          %p272 = pneg %p271
        $region72: #{dgi1_forward.10} parent=61 // pred_check_branch
          %274 = sbr.rel (%p272) target = $region74
        $region73: #{dgi1_forward.10} parent=61 // pred_region
          %v275 = vld [vmem:[#allocation2] sm:$0x1]
          %v276 = vmul.f32 %v275, 0.00390625
          %v277 = vxor.u32 %v276, 2147483648
          %v278 = vmul.f32 %v277, 1.442695
          %v279 = vpow.pop %v278
          %v280 = vadd.f32 %v279, 1.0
          %v281 = vrcp.pop %v280
          %v282 = vmul.f32 1.0, %v281
          %v283 = vld [vmem:[%s1] sm:$0xff]
          %v284 = vld [vmem:[%s1 + $0x8] sm:$0xff]
          %v285 = vld [vmem:[%s1 + $0x10] sm:$0xff]
          %v286 = vld [vmem:[%s1 + $0x18] sm:$0xff]
          %v287 = vld [vmem:[%s1 + $0x20] sm:$0xff]
          %v288 = vld [vmem:[%s1 + $0x28] sm:$0xff]
          %v289 = vld [vmem:[%s1 + $0x30] sm:$0xff]
          %v290 = vld [vmem:[%s1 + $0x38] sm:$0xff]
          %v291 = vld [vmem:[%s1 + $0x40] sm:$0xff]
          %v292 = vld [vmem:[%s1 + $0x48] sm:$0xff]
          %v293 = vld [vmem:[%s1 + $0x50] sm:$0xff]
          %v294 = vld [vmem:[%s1 + $0x58] sm:$0xff]
          %v295 = vld [vmem:[%s1 + $0x60] sm:$0xff]
          %v296 = vld [vmem:[%s1 + $0x68] sm:$0xff]
          %v297 = vld [vmem:[%s1 + $0x70] sm:$0xff]
          %v298 = vld [vmem:[%s1 + $0x78] sm:$0xff]
          %299 = vmatprep.subr.mxu0 0.0
          %300 = vmatpush1.msra.mxu0 %v283
          %301 = vmatprep.subr.mxu0 0.0
          %302 = vmatpush1.msra.mxu0 %v284
          %303 = vmatprep.subr.mxu0 0.0
          %304 = vmatpush1.msra.mxu0 %v285
          %305 = vmatprep.subr.mxu0 0.0
          %306 = vmatpush1.msra.mxu0 %v286
          %307 = vmatprep.subr.mxu0 0.0
          %308 = vmatpush1.msra.mxu0 %v287
          %309 = vmatprep.subr.mxu0 0.0
          %310 = vmatpush1.msra.mxu0 %v288
          %311 = vmatprep.subr.mxu0 0.0
          %312 = vmatpush1.msra.mxu0 %v289
          %313 = vmatprep.subr.mxu0 0.0
          %314 = vmatpush1.msra.mxu0 %v290
          %315 = vmatprep.subr.mxu0 0.0
          %316 = vmatpush1.msra.mxu0 %v291
          %317 = vmatprep.subr.mxu0 0.0
          %318 = vmatpush1.msra.mxu0 %v292
          %319 = vmatprep.subr.mxu0 0.0
          %320 = vmatpush1.msra.mxu0 %v293
          %321 = vmatprep.subr.mxu0 0.0
          %322 = vmatpush1.msra.mxu0 %v294
          %323 = vmatprep.subr.mxu0 0.0
          %324 = vmatpush1.msra.mxu0 %v295
          %325 = vmatprep.subr.mxu0 0.0
          %326 = vmatpush1.msra.mxu0 %v296
          %327 = vmatprep.subr.mxu0 0.0
          %328 = vmatpush1.msra.mxu0 %v297
          %329 = vmatprep.subr.mxu0 0.0
          %330 = vmatpush1.msra.mxu0 %v298
          %331 = vmatprep.subr.mxu0 0.0
          %332 = vmatpush1.msra.mxu0 0.0
          %333 = vmatprep.subr.mxu0 0.0
          %334 = vmatpush1.msra.mxu0 0.0
          %335 = vmatprep.subr.mxu0 0.0
          %336 = vmatpush1.msra.mxu0 0.0
          %337 = vmatprep.subr.mxu0 0.0
          %338 = vmatpush1.msra.mxu0 0.0
          %339 = vmatprep.subr.mxu0 0.0
          %340 = vmatpush1.msra.mxu0 0.0
          %341 = vmatprep.subr.mxu0 0.0
          %342 = vmatpush1.msra.mxu0 0.0
          %343 = vmatprep.subr.mxu0 0.0
          %344 = vmatpush1.msra.mxu0 0.0
          %345 = vmatprep.subr.mxu0 0.0
          %346 = vmatpush1.msra.mxu0 0.0
          %347 = vmatprep.subr.mxu0 0.0
          %348 = vmatpush1.msra.mxu0 0.0
          %349 = vmatprep.subr.mxu0 0.0
          %350 = vmatpush1.msra.mxu0 0.0
          %351 = vmatprep.subr.mxu0 0.0
          %352 = vmatpush1.msra.mxu0 0.0
          %353 = vmatprep.subr.mxu0 0.0
          %354 = vmatpush1.msra.mxu0 0.0
          %355 = vmatprep.subr.mxu0 0.0
          %356 = vmatpush1.msra.mxu0 0.0
          %357 = vmatprep.subr.mxu0 0.0
          %358 = vmatpush1.msra.mxu0 0.0
          %359 = vmatprep.subr.mxu0 0.0
          %360 = vmatpush1.msra.mxu0 0.0
          %361 = vmatprep.subr.mxu0 0.0
          %362 = vmatpush1.msra.mxu0 0.0
          %363 = vmatprep.mubr.f32.mxu0 0.0
          %364 = vmatmul.mubr.f32.gmra.mrb[0].mxu0 %v282
          %v365 = vpop.f32.mrb[0].mxu0
          %v366 = vadd.f32 0.0, %v365
          %v367 = vpop.f32.mrb[0].mxu0
          %368 = vdwg.mxu0
          %369 = vst [vmem:[%s2] sm:$0x1] %v366
        $region74: #{dgi1_forward.10} parent=61 // pred_fallthru
          _
        // Predicated region
        $region75: #{dgi1_forward.10} parent=61 // pred_check
          %p370 = pneg %p73
        $region76: #{dgi1_forward.10} parent=61 // pred_check_branch
          %372 = sbr.rel (%p370) target = $region78
        $region77: #{dgi1_forward.10} parent=61 // pred_region
          _
        $region78: #{dgi1_forward.10} parent=61 // pred_fallthru
          _
        // Predicated region
        $region79: #{dgi1_forward.10} parent=61 // pred_check
          %p373 = pneg %p73
        $region80: #{dgi1_forward.10} parent=61 // pred_check_branch
          %375 = sbr.rel (%p373) target = $region82
        $region81: #{dgi1_forward.10} parent=61 // pred_region
          _
        $region82: #{dgi1_forward.10} parent=61 // pred_fallthru
          _
      $region62: #{dgi1_forward.10} parent=5 // pred_fallthru
        _
      %p376 = scmp.le.s32.totalorder 2, %s8
      // Predicated region
      $region83: #{dgi1_forward.10} parent=5 // pred_check
        %p377 = pneg %p376
      $region84: #{dgi1_forward.10} parent=5 // pred_check_branch
        %379 = sbr.rel (%p377) target = $region86
      $region85: #{dgi1_forward.10} parent=5 // pred_region
        %s380 = ssub.s32 %s8, 2
      $region86: #{dgi1_forward.10} parent=5 // pred_fallthru
        _
    $region6: #{dgi1_forward.10} parent=1 // loop_footer
      %s12 = sadd.s32 1, %s8
    $region7: #{dgi1_forward.10} parent=1 // loop_footer_branch
      %7 = sbr.rel target = $region3
    $region8: #{dgi1_forward.10} parent=1 // loop_exit
      _

// kernel: dgi1_forward.11
$region0: #{dgi1_forward.11}
  #allocation0 [shape = 'u32[]', space=smem, size = 0x4, offset = 0x4, fixed_abs, tag = 'smem constant byte address 0x4 - core index']
  #allocation1 [shape = 'u32[144,128]{1,0:T(1,128)}', space=vmem, size = 0x12000, scoped, tag = 'internal scratch']
  #allocation2 [shape = 'f32[1,1]{1,0:T(1,128)}', space=vmem, size = 0x200, scoped, tag = 'scratch operand']
  #allocation3 [shape = 'f32[1,1]{1,0:T(1,128)}', space=vmem, size = 0x200, scoped, tag = 'scratch operand']
  %s0 = inlined_call_operand.vmem [shape: f32[256,256], index: 0, kind: input, shape index: {}]
  %s1 = inlined_call_operand.vmem [shape: f32[1,128], index: 1, kind: input, shape index: {}]
  %s2 = inlined_call_operand.hbm [shape: f32[1,1], index: 2, kind: output, shape index: {}]
  %s3 = sld [smem:[#allocation0]]
  $region49: #{dgi1_forward.11} parent=0
    _
  %s5 = ssub.s32 1, %s3
  %s6 = scalar_select 0, %s5, %s3
  $region1: #{dgi1_forward.11} parent=0
    #allocation4 [shape = 'u8[512]{0}', space=vmem, size = 0x400, scoped, tag = 'output window, operand 0, single buffered']
    #allocation5 [shape = 's32[2]{0}', space=sflag, size = 0x8, scoped, tag = 'scoped memory for dgi1_forward.11']
    %7 = vsyncpa [#allocation5], 0
    loop: start=0, step=1, limit=4
    $region2: #{dgi1_forward.11} parent=1 // loop_pre_header
      _
    $region3: #{dgi1_forward.11} parent=1 // loop_header
      %s9 = sphi 0, %s13
      %p10 = scmp.ge.s32.totalorder %s9, 4
      %s19 = sphi 0, %s21
      %s22 = sphi 0, %s19
      %s23 = sphi 0, %s22
      %s39 = sphi 0, %s23
      %s43 = sphi 0, %s43
      %s45 = sphi 0, %s43
      %s46 = sphi 0, %s45
      %s60 = sphi 0, %s46
      %s64 = sphi 0, %s64
      %s66 = sphi 0, %s64
      %s67 = sphi 0, %s66
      %s81 = sphi 0, %s67
    $region4: #{dgi1_forward.11} parent=1 // loop_header_branch
      %12 = sbr.rel (%p10) target = $region8
    $region5: #{dgi1_forward.11} parent=1 // loop_body
      %s14 = ssub.s32 %s9, 1
      %s15 = ssub.s32 %s9, 2
      %s16 = sadd.s32 %s9, 1
      %s17 = ssub.s32 %s9, %s16
      %p18 = scmp.eq.s32.totalorder %s17, 0
      %s20 = sadd.s32 %s19, 1
      %s21 = scalar_select %p18, %s19, %s20
      %p24 = pneg %p18
      %p25 = scmp.eq.s32.totalorder %s9, 1
      %p26 = por %p24, %p25
      %p27 = scmp.ne.s32.totalorder %s19, %s22
      %p28 = scmp.eq.s32.totalorder %s9, 0
      %p29 = por %p27, %p28
      %p30 = scmp.ne.s32.totalorder %s19, %s22
      %p31 = scmp.eq.s32.totalorder %s14, 1
      %p32 = por %p30, %p31
      %p33 = scmp.ne.s32.totalorder %s22, %s23
      %p34 = scmp.eq.s32.totalorder %s14, 0
      %p35 = por %p33, %p34
      %p36 = scmp.ne.s32.totalorder %s22, %s23
      %p37 = scmp.eq.s32.totalorder %s15, 1
      %p38 = por %p36, %p37
      %p40 = scmp.ne.s32.totalorder %s23, %s39
      %p41 = scmp.eq.s32.totalorder %s15, 0
      %p42 = por %p40, %p41
      %s44 = sadd.s32 %s43, 1
      %p47 = scmp.eq.s32.totalorder %s9, 1
      %p48 = scmp.ne.s32.totalorder %s43, %s45
      %p49 = scmp.eq.s32.totalorder %s9, 0
      %p50 = por %p48, %p49
      %p51 = scmp.ne.s32.totalorder %s43, %s45
      %p52 = scmp.eq.s32.totalorder %s14, 1
      %p53 = por %p51, %p52
      %p54 = scmp.ne.s32.totalorder %s45, %s46
      %p55 = scmp.eq.s32.totalorder %s14, 0
      %p56 = por %p54, %p55
      %p57 = scmp.ne.s32.totalorder %s45, %s46
      %p58 = scmp.eq.s32.totalorder %s15, 1
      %p59 = por %p57, %p58
      %p61 = scmp.ne.s32.totalorder %s46, %s60
      %p62 = scmp.eq.s32.totalorder %s15, 0
      %p63 = por %p61, %p62
      %s65 = sadd.s32 %s64, 1
      %p68 = scmp.eq.s32.totalorder %s9, 1
      %p69 = scmp.ne.s32.totalorder %s64, %s66
      %p70 = scmp.eq.s32.totalorder %s9, 0
      %p71 = por %p69, %p70
      %p72 = scmp.ne.s32.totalorder %s64, %s66
      %p73 = scmp.eq.s32.totalorder %s14, 1
      %p74 = por %p72, %p73
      %p75 = scmp.ne.s32.totalorder %s66, %s67
      %p76 = scmp.eq.s32.totalorder %s14, 0
      %p77 = por %p75, %p76
      %p78 = scmp.ne.s32.totalorder %s66, %s67
      %p79 = scmp.eq.s32.totalorder %s15, 1
      %p80 = por %p78, %p79
      %p82 = scmp.ne.s32.totalorder %s67, %s81
      %p83 = scmp.eq.s32.totalorder %s15, 0
      %p84 = por %p82, %p83
      %p85 = scmp.le.s32.totalorder 1, %s9
      %p86 = scmp.lt.s32.totalorder %s9, 3
      %p87 = pnand %p85, %p86
      %p88 = pneg %p87
      // Predicated region
      $region9: #{dgi1_forward.11} parent=5 // pred_check
        _
      $region10: #{dgi1_forward.11} parent=5 // pred_check_branch
        %90 = sbr.rel (%p87) target = $region12
      $region11: #{dgi1_forward.11} parent=5 // pred_region
        %s91 = ssub.s32 %s9, 1
        // Predicated region
        $region13: #{dgi1_forward.11} parent=11 // pred_check
          %p92 = pneg %p56
        $region14: #{dgi1_forward.11} parent=11 // pred_check_branch
          %94 = sbr.rel (%p92) target = $region16
        $region15: #{dgi1_forward.11} parent=11 // pred_region
          _
        $region16: #{dgi1_forward.11} parent=11 // pred_fallthru
          _
      $region12: #{dgi1_forward.11} parent=5 // pred_fallthru
        _
      %p95 = scmp.lt.s32.totalorder %s9, 2
      // Predicated region
      $region17: #{dgi1_forward.11} parent=5 // pred_check
        %p96 = pneg %p95
      $region18: #{dgi1_forward.11} parent=5 // pred_check_branch
        %98 = sbr.rel (%p96) target = $region20
      $region19: #{dgi1_forward.11} parent=5 // pred_region
        // Predicated region
        $region21: #{dgi1_forward.11} parent=19 // pred_check
          %p99 = pneg %p29
        $region22: #{dgi1_forward.11} parent=19 // pred_check_branch
          %101 = sbr.rel (%p99) target = $region24
        $region23: #{dgi1_forward.11} parent=19 // pred_region
          %s102 = smul.u32 16, %s9
          %p103 = scmp.lt.s32.totalorder %s102, 31
          %s104 = scalar_select %p103, %s102, 31
          %s105 = smul.addr %s104, 2
          %s106 = smul.addr %s105, 8
          %s107 = scalar_lea.vmem %s0, %s106
          %s108 = smul.u32 16, %s9
        $region24: #{dgi1_forward.11} parent=19 // pred_fallthru
          _
      $region20: #{dgi1_forward.11} parent=5 // pred_fallthru
        _
      %p109 = scmp.le.s32.totalorder 1, %s9
      %p110 = scmp.lt.s32.totalorder %s9, 3
      %p111 = pnand %p109, %p110
      %p112 = pneg %p111
      // Predicated region
      $region25: #{dgi1_forward.11} parent=5 // pred_check
        _
      $region26: #{dgi1_forward.11} parent=5 // pred_check_branch
        %114 = sbr.rel (%p111) target = $region28
      $region27: #{dgi1_forward.11} parent=5 // pred_region
        %s115 = ssub.s32 %s9, 1
        %s116 = smul.u32 16, %s14
        %p117 = scmp.lt.s32.totalorder %s116, 31
        %s118 = scalar_select %p117, %s116, 31
        %s119 = smul.addr %s118, 2
        %s120 = smul.addr %s119, 8
        %s121 = scalar_lea.vmem %s0, %s120
        %p122 = pneg %p35
        %p123 = pneg %p32
        %p124 = pneg %p56
        %p125 = pneg %p53
        %p126 = pneg %p77
        %p127 = pneg %p74
        %s128 = smul.u32 16, %s14
        %p129 = scmp.lt.s32.totalorder %s128, 31
        %s130 = scalar_select %p129, %s128, 31
        %s131 = smul.addr %s130, 2
        %s132 = smul.addr %s131, 8
        %s133 = scalar_lea.vmem %s0, %s132
        %s134 = smul.u32 16, %s14
        %p135 = scmp.eq.s32.totalorder %s14, 0
        // Predicated region
        $region29: #{dgi1_forward.11} parent=27 // pred_check
          %p136 = pneg %p135
        $region30: #{dgi1_forward.11} parent=27 // pred_check_branch
          %138 = sbr.rel (%p136) target = $region32
        $region31: #{dgi1_forward.11} parent=27 // pred_region
          %vm139 = vcmask 0
          %140 = vst.msk [vmem:[#allocation2] sm:$0x1] %vm139, 0.0
          %141 = vst.msk [vmem:[#allocation3] sm:$0x1] %vm139, 0.0
        $region32: #{dgi1_forward.11} parent=27 // pred_fallthru
          _
        %v142 = vld [vmem:[%s133] sm:$0xff]
        %v143 = vld [vmem:[%s133 + $0x8] sm:$0xff]
        %v144 = vld [vmem:[%s133 + $0x10] sm:$0xff]
        %v145 = vld [vmem:[%s133 + $0x18] sm:$0xff]
        %v146 = vld [vmem:[%s133 + $0x20] sm:$0xff]
        %v147 = vld [vmem:[%s133 + $0x28] sm:$0xff]
        %v148 = vld [vmem:[%s133 + $0x30] sm:$0xff]
        %v149 = vld [vmem:[%s133 + $0x38] sm:$0xff]
        %v150 = vld [vmem:[%s133 + $0x40] sm:$0xff]
        %v151 = vld [vmem:[%s133 + $0x48] sm:$0xff]
        %v152 = vld [vmem:[%s133 + $0x50] sm:$0xff]
        %v153 = vld [vmem:[%s133 + $0x58] sm:$0xff]
        %v154 = vld [vmem:[%s133 + $0x60] sm:$0xff]
        %v155 = vld [vmem:[%s133 + $0x68] sm:$0xff]
        %v156 = vld [vmem:[%s133 + $0x70] sm:$0xff]
        %v157 = vld [vmem:[%s133 + $0x78] sm:$0xff]
        %v158 = vld [vmem:[%s133 + $0x80] sm:$0xff]
        %v159 = vld [vmem:[%s133 + $0x88] sm:$0xff]
        %v160 = vld [vmem:[%s133 + $0x90] sm:$0xff]
        %v161 = vld [vmem:[%s133 + $0x98] sm:$0xff]
        %v162 = vld [vmem:[%s133 + $0xa0] sm:$0xff]
        %v163 = vld [vmem:[%s133 + $0xa8] sm:$0xff]
        %v164 = vld [vmem:[%s133 + $0xb0] sm:$0xff]
        %v165 = vld [vmem:[%s133 + $0xb8] sm:$0xff]
        %v166 = vld [vmem:[%s133 + $0xc0] sm:$0xff]
        %v167 = vld [vmem:[%s133 + $0xc8] sm:$0xff]
        %v168 = vld [vmem:[%s133 + $0xd0] sm:$0xff]
        %v169 = vld [vmem:[%s133 + $0xd8] sm:$0xff]
        %v170 = vld [vmem:[%s133 + $0xe0] sm:$0xff]
        %v171 = vld [vmem:[%s133 + $0xe8] sm:$0xff]
        %v172 = vld [vmem:[%s133 + $0xf0] sm:$0xff]
        %v173 = vld [vmem:[%s133 + $0xf8] sm:$0xff]
        %v174 = vld [vmem:[%s1] sm:$0x1]
        %v176 = vlaneseq
        %v177 = vshrl.u32 %v176, 7
        %v178 = vsub.s32 0, %v177
        %v179 = vrot.slane %v174, %v178
        %v181 = vmul.f32 %v142, %v179
        %v182 = vmul.f32 %v144, %v179
        %v183 = vmul.f32 %v146, %v179
        %v184 = vmul.f32 %v148, %v179
        %v185 = vmul.f32 %v150, %v179
        %v186 = vmul.f32 %v152, %v179
        %v187 = vmul.f32 %v154, %v179
        %v188 = vmul.f32 %v156, %v179
        %v189 = vmul.f32 %v158, %v179
        %v190 = vmul.f32 %v160, %v179
        %v191 = vmul.f32 %v162, %v179
        %v192 = vmul.f32 %v164, %v179
        %v193 = vmul.f32 %v166, %v179
        %v194 = vmul.f32 %v168, %v179
        %v195 = vmul.f32 %v170, %v179
        %v196 = vmul.f32 %v172, %v179
        %197 = vadd.xlane.f32.xlu0 %v181
        %v198 = vpop.xlane.xlu0 %197
        %199 = vadd.xlane.f32.xlu0 %v182
        %v200 = vpop.xlane.xlu0 %199
        %201 = vadd.xlane.f32.xlu0 %v183
        %v202 = vpop.xlane.xlu0 %201
        %203 = vadd.xlane.f32.xlu0 %v184
        %v204 = vpop.xlane.xlu0 %203
        %205 = vadd.xlane.f32.xlu0 %v185
        %v206 = vpop.xlane.xlu0 %205
        %207 = vadd.xlane.f32.xlu0 %v186
        %v208 = vpop.xlane.xlu0 %207
        %209 = vadd.xlane.f32.xlu0 %v187
        %v210 = vpop.xlane.xlu0 %209
        %211 = vadd.xlane.f32.xlu0 %v188
        %v212 = vpop.xlane.xlu0 %211
        %213 = vadd.xlane.f32.xlu0 %v189
        %v214 = vpop.xlane.xlu0 %213
        %215 = vadd.xlane.f32.xlu0 %v190
        %v216 = vpop.xlane.xlu0 %215
        %217 = vadd.xlane.f32.xlu0 %v191
        %v218 = vpop.xlane.xlu0 %217
        %219 = vadd.xlane.f32.xlu0 %v192
        %v220 = vpop.xlane.xlu0 %219
        %221 = vadd.xlane.f32.xlu0 %v193
        %v222 = vpop.xlane.xlu0 %221
        %223 = vadd.xlane.f32.xlu0 %v194
        %v224 = vpop.xlane.xlu0 %223
        %225 = vadd.xlane.f32.xlu0 %v195
        %v226 = vpop.xlane.xlu0 %225
        %227 = vadd.xlane.f32.xlu0 %v196
        %v228 = vpop.xlane.xlu0 %227
        %v229 = vmul.f32 %v143, %v179
        %v230 = vmul.f32 %v145, %v179
        %v231 = vmul.f32 %v147, %v179
        %v232 = vmul.f32 %v149, %v179
        %v233 = vmul.f32 %v151, %v179
        %v234 = vmul.f32 %v153, %v179
        %v235 = vmul.f32 %v155, %v179
        %v236 = vmul.f32 %v157, %v179
        %v237 = vmul.f32 %v159, %v179
        %v238 = vmul.f32 %v161, %v179
        %v239 = vmul.f32 %v163, %v179
        %v240 = vmul.f32 %v165, %v179
        %v241 = vmul.f32 %v167, %v179
        %v242 = vmul.f32 %v169, %v179
        %v243 = vmul.f32 %v171, %v179
        %v244 = vmul.f32 %v173, %v179
        %245 = vadd.xlane.f32.xlu0 %v229
        %v246 = vpop.xlane.xlu0 %245
        %247 = vadd.xlane.f32.xlu0 %v230
        %v248 = vpop.xlane.xlu0 %247
        %249 = vadd.xlane.f32.xlu0 %v231
        %v250 = vpop.xlane.xlu0 %249
        %251 = vadd.xlane.f32.xlu0 %v232
        %v252 = vpop.xlane.xlu0 %251
        %253 = vadd.xlane.f32.xlu0 %v233
        %v254 = vpop.xlane.xlu0 %253
        %255 = vadd.xlane.f32.xlu0 %v234
        %v256 = vpop.xlane.xlu0 %255
        %257 = vadd.xlane.f32.xlu0 %v235
        %v258 = vpop.xlane.xlu0 %257
        %259 = vadd.xlane.f32.xlu0 %v236
        %v260 = vpop.xlane.xlu0 %259
        %261 = vadd.xlane.f32.xlu0 %v237
        %v262 = vpop.xlane.xlu0 %261
        %263 = vadd.xlane.f32.xlu0 %v238
        %v264 = vpop.xlane.xlu0 %263
        %265 = vadd.xlane.f32.xlu0 %v239
        %v266 = vpop.xlane.xlu0 %265
        %267 = vadd.xlane.f32.xlu0 %v240
        %v268 = vpop.xlane.xlu0 %267
        %269 = vadd.xlane.f32.xlu0 %v241
        %v270 = vpop.xlane.xlu0 %269
        %271 = vadd.xlane.f32.xlu0 %v242
        %v272 = vpop.xlane.xlu0 %271
        %273 = vadd.xlane.f32.xlu0 %v243
        %v274 = vpop.xlane.xlu0 %273
        %275 = vadd.xlane.f32.xlu0 %v244
        %v276 = vpop.xlane.xlu0 %275
        %v277 = vld [vmem:[#allocation2] sm:$0x1]
        %v278 = vsub.f32 0.0, %v198
        %v279 = vsub.f32 0.0, %v200
        %v280 = vsub.f32 0.0, %v202
        %v281 = vsub.f32 0.0, %v204
        %v282 = vsub.f32 0.0, %v206
        %v283 = vsub.f32 0.0, %v208
        %v284 = vsub.f32 0.0, %v210
        %v285 = vsub.f32 0.0, %v212
        %v286 = vsub.f32 0.0, %v214
        %v287 = vsub.f32 0.0, %v216
        %v288 = vsub.f32 0.0, %v218
        %v289 = vsub.f32 0.0, %v220
        %v290 = vsub.f32 0.0, %v222
        %v291 = vsub.f32 0.0, %v224
        %v292 = vsub.f32 0.0, %v226
        %v293 = vsub.f32 0.0, %v228
        %v294 = vmax.f32 %v278, 0.0
        %v295 = vmax.f32 %v279, 0.0
        %v296 = vmax.f32 %v280, 0.0
        %v297 = vmax.f32 %v281, 0.0
        %v298 = vmax.f32 %v282, 0.0
        %v299 = vmax.f32 %v283, 0.0
        %v300 = vmax.f32 %v284, 0.0
        %v301 = vmax.f32 %v285, 0.0
        %v302 = vmax.f32 %v286, 0.0
        %v303 = vmax.f32 %v287, 0.0
        %v304 = vmax.f32 %v288, 0.0
        %v305 = vmax.f32 %v289, 0.0
        %v306 = vmax.f32 %v290, 0.0
        %v307 = vmax.f32 %v291, 0.0
        %v308 = vmax.f32 %v292, 0.0
        %v309 = vmax.f32 %v293, 0.0
        %v310 = vand.u32 2147483647, %v278
        %v311 = vand.u32 2147483647, %v279
        %v312 = vand.u32 2147483647, %v280
        %v313 = vand.u32 2147483647, %v281
        %v314 = vand.u32 2147483647, %v282
        %v315 = vand.u32 2147483647, %v283
        %v316 = vand.u32 2147483647, %v284
        %v317 = vand.u32 2147483647, %v285
        %v318 = vand.u32 2147483647, %v286
        %v319 = vand.u32 2147483647, %v287
        %v320 = vand.u32 2147483647, %v288
        %v321 = vand.u32 2147483647, %v289
        %v322 = vand.u32 2147483647, %v290
        %v323 = vand.u32 2147483647, %v291
        %v324 = vand.u32 2147483647, %v292
        %v325 = vand.u32 2147483647, %v293
        %v326 = vsub.f32 0.0, %v310
        %v327 = vsub.f32 0.0, %v311
        %v328 = vsub.f32 0.0, %v312
        %v329 = vsub.f32 0.0, %v313
        %v330 = vsub.f32 0.0, %v314
        %v331 = vsub.f32 0.0, %v315
        %v332 = vsub.f32 0.0, %v316
        %v333 = vsub.f32 0.0, %v317
        %v334 = vsub.f32 0.0, %v318
        %v335 = vsub.f32 0.0, %v319
        %v336 = vsub.f32 0.0, %v320
        %v337 = vsub.f32 0.0, %v321
        %v338 = vsub.f32 0.0, %v322
        %v339 = vsub.f32 0.0, %v323
        %v340 = vsub.f32 0.0, %v324
        %v341 = vsub.f32 0.0, %v325
        %v342 = vmul.f32 %v326, 1.442695
        %v343 = vpow.pop %v342
        %v344 = vmul.f32 %v327, 1.442695
        %v345 = vpow.pop %v344
        %v346 = vmul.f32 %v328, 1.442695
        %v347 = vpow.pop %v346
        %v348 = vmul.f32 %v329, 1.442695
        %v349 = vpow.pop %v348
        %v350 = vmul.f32 %v330, 1.442695
        %v351 = vpow.pop %v350
        %v352 = vmul.f32 %v331, 1.442695
        %v353 = vpow.pop %v352
        %v354 = vmul.f32 %v332, 1.442695
        %v355 = vpow.pop %v354
        %v356 = vmul.f32 %v333, 1.442695
        %v357 = vpow.pop %v356
        %v358 = vmul.f32 %v334, 1.442695
        %v359 = vpow.pop %v358
        %v360 = vmul.f32 %v335, 1.442695
        %v361 = vpow.pop %v360
        %v362 = vmul.f32 %v336, 1.442695
        %v363 = vpow.pop %v362
        %v364 = vmul.f32 %v337, 1.442695
        %v365 = vpow.pop %v364
        %v366 = vmul.f32 %v338, 1.442695
        %v367 = vpow.pop %v366
        %v368 = vmul.f32 %v339, 1.442695
        %v369 = vpow.pop %v368
        %v370 = vmul.f32 %v340, 1.442695
        %v371 = vpow.pop %v370
        %v372 = vmul.f32 %v341, 1.442695
        %v373 = vpow.pop %v372
        %v374 = vadd.f32 %v343, 1.0
        %v375 = vlog2.pop %v374
        %v376 = vmul.f32 %v375, 0.6931472
        %v377 = vmul.f32 -0.5, %v343
        %v378 = vadd.f32 %v377, 1.0
        %v379 = vmul.f32 %v378, %v343
        %v380 = vand.u32 2147483647, %v343
        %vm381 = vcmp.lt.f32.partialorder %v380, 0.0004427343
        %v382 = vsel %vm381, %v379, %v376
        %v383 = vadd.f32 %v345, 1.0
        %v384 = vlog2.pop %v383
        %v385 = vmul.f32 %v384, 0.6931472
        %v386 = vmul.f32 -0.5, %v345
        %v387 = vadd.f32 %v386, 1.0
        %v388 = vmul.f32 %v387, %v345
        %v389 = vand.u32 2147483647, %v345
        %vm390 = vcmp.lt.f32.partialorder %v389, 0.0004427343
        %v391 = vsel %vm390, %v388, %v385
        %v392 = vadd.f32 %v347, 1.0
        %v393 = vlog2.pop %v392
        %v394 = vmul.f32 %v393, 0.6931472
        %v395 = vmul.f32 -0.5, %v347
        %v396 = vadd.f32 %v395, 1.0
        %v397 = vmul.f32 %v396, %v347
        %v398 = vand.u32 2147483647, %v347
        %vm399 = vcmp.lt.f32.partialorder %v398, 0.0004427343
        %v400 = vsel %vm399, %v397, %v394
        %v401 = vadd.f32 %v349, 1.0
        %v402 = vlog2.pop %v401
        %v403 = vmul.f32 %v402, 0.6931472
        %v404 = vmul.f32 -0.5, %v349
        %v405 = vadd.f32 %v404, 1.0
        %v406 = vmul.f32 %v405, %v349
        %v407 = vand.u32 2147483647, %v349
        %vm408 = vcmp.lt.f32.partialorder %v407, 0.0004427343
        %v409 = vsel %vm408, %v406, %v403
        %v410 = vadd.f32 %v351, 1.0
        %v411 = vlog2.pop %v410
        %v412 = vmul.f32 %v411, 0.6931472
        %v413 = vmul.f32 -0.5, %v351
        %v414 = vadd.f32 %v413, 1.0
        %v415 = vmul.f32 %v414, %v351
        %v416 = vand.u32 2147483647, %v351
        %vm417 = vcmp.lt.f32.partialorder %v416, 0.0004427343
        %v418 = vsel %vm417, %v415, %v412
        %v419 = vadd.f32 %v353, 1.0
        %v420 = vlog2.pop %v419
        %v421 = vmul.f32 %v420, 0.6931472
        %v422 = vmul.f32 -0.5, %v353
        %v423 = vadd.f32 %v422, 1.0
        %v424 = vmul.f32 %v423, %v353
        %v425 = vand.u32 2147483647, %v353
        %vm426 = vcmp.lt.f32.partialorder %v425, 0.0004427343
        %v427 = vsel %vm426, %v424, %v421
        %v428 = vadd.f32 %v355, 1.0
        %v429 = vlog2.pop %v428
        %v430 = vmul.f32 %v429, 0.6931472
        %v431 = vmul.f32 -0.5, %v355
        %v432 = vadd.f32 %v431, 1.0
        %v433 = vmul.f32 %v432, %v355
        %v434 = vand.u32 2147483647, %v355
        %vm435 = vcmp.lt.f32.partialorder %v434, 0.0004427343
        %v436 = vsel %vm435, %v433, %v430
        %v437 = vadd.f32 %v357, 1.0
        %v438 = vlog2.pop %v437
        %v439 = vmul.f32 %v438, 0.6931472
        %v440 = vmul.f32 -0.5, %v357
        %v441 = vadd.f32 %v440, 1.0
        %v442 = vmul.f32 %v441, %v357
        %v443 = vand.u32 2147483647, %v357
        %vm444 = vcmp.lt.f32.partialorder %v443, 0.0004427343
        %v445 = vsel %vm444, %v442, %v439
        %v446 = vadd.f32 %v359, 1.0
        %v447 = vlog2.pop %v446
        %v448 = vmul.f32 %v447, 0.6931472
        %v449 = vmul.f32 -0.5, %v359
        %v450 = vadd.f32 %v449, 1.0
        %v451 = vmul.f32 %v450, %v359
        %v452 = vand.u32 2147483647, %v359
        %vm453 = vcmp.lt.f32.partialorder %v452, 0.0004427343
        %v454 = vsel %vm453, %v451, %v448
        %v455 = vadd.f32 %v361, 1.0
        %v456 = vlog2.pop %v455
        %v457 = vmul.f32 %v456, 0.6931472
        %v458 = vmul.f32 -0.5, %v361
        %v459 = vadd.f32 %v458, 1.0
        %v460 = vmul.f32 %v459, %v361
        %v461 = vand.u32 2147483647, %v361
        %vm462 = vcmp.lt.f32.partialorder %v461, 0.0004427343
        %v463 = vsel %vm462, %v460, %v457
        %v464 = vadd.f32 %v363, 1.0
        %v465 = vlog2.pop %v464
        %v466 = vmul.f32 %v465, 0.6931472
        %v467 = vmul.f32 -0.5, %v363
        %v468 = vadd.f32 %v467, 1.0
        %v469 = vmul.f32 %v468, %v363
        %v470 = vand.u32 2147483647, %v363
        %vm471 = vcmp.lt.f32.partialorder %v470, 0.0004427343
        %v472 = vsel %vm471, %v469, %v466
        %v473 = vadd.f32 %v365, 1.0
        %v474 = vlog2.pop %v473
        %v475 = vmul.f32 %v474, 0.6931472
        %v476 = vmul.f32 -0.5, %v365
        %v477 = vadd.f32 %v476, 1.0
        %v478 = vmul.f32 %v477, %v365
        %v479 = vand.u32 2147483647, %v365
        %vm480 = vcmp.lt.f32.partialorder %v479, 0.0004427343
        %v481 = vsel %vm480, %v478, %v475
        %v482 = vadd.f32 %v367, 1.0
        %v483 = vlog2.pop %v482
        %v484 = vmul.f32 %v483, 0.6931472
        %v485 = vmul.f32 -0.5, %v367
        %v486 = vadd.f32 %v485, 1.0
        %v487 = vmul.f32 %v486, %v367
        %v488 = vand.u32 2147483647, %v367
        %vm489 = vcmp.lt.f32.partialorder %v488, 0.0004427343
        %v490 = vsel %vm489, %v487, %v484
        %v491 = vadd.f32 %v369, 1.0
        %v492 = vlog2.pop %v491
        %v493 = vmul.f32 %v492, 0.6931472
        %v494 = vmul.f32 -0.5, %v369
        %v495 = vadd.f32 %v494, 1.0
        %v496 = vmul.f32 %v495, %v369
        %v497 = vand.u32 2147483647, %v369
        %vm498 = vcmp.lt.f32.partialorder %v497, 0.0004427343
        %v499 = vsel %vm498, %v496, %v493
        %v500 = vadd.f32 %v371, 1.0
        %v501 = vlog2.pop %v500
        %v502 = vmul.f32 %v501, 0.6931472
        %v503 = vmul.f32 -0.5, %v371
        %v504 = vadd.f32 %v503, 1.0
        %v505 = vmul.f32 %v504, %v371
        %v506 = vand.u32 2147483647, %v371
        %vm507 = vcmp.lt.f32.partialorder %v506, 0.0004427343
        %v508 = vsel %vm507, %v505, %v502
        %v509 = vadd.f32 %v373, 1.0
        %v510 = vlog2.pop %v509
        %v511 = vmul.f32 %v510, 0.6931472
        %v512 = vmul.f32 -0.5, %v373
        %v513 = vadd.f32 %v512, 1.0
        %v514 = vmul.f32 %v513, %v373
        %v515 = vand.u32 2147483647, %v373
        %vm516 = vcmp.lt.f32.partialorder %v515, 0.0004427343
        %v517 = vsel %vm516, %v514, %v511
        %v518 = vadd.f32 %v294, %v382
        %v519 = vadd.f32 %v295, %v391
        %v520 = vadd.f32 %v296, %v400
        %v521 = vadd.f32 %v297, %v409
        %v522 = vadd.f32 %v298, %v418
        %v523 = vadd.f32 %v299, %v427
        %v524 = vadd.f32 %v300, %v436
        %v525 = vadd.f32 %v301, %v445
        %v526 = vadd.f32 %v302, %v454
        %v527 = vadd.f32 %v303, %v463
        %v528 = vadd.f32 %v304, %v472
        %v529 = vadd.f32 %v305, %v481
        %v530 = vadd.f32 %v306, %v490
        %v531 = vadd.f32 %v307, %v499
        %v532 = vadd.f32 %v308, %v508
        %v533 = vadd.f32 %v309, %v517
        %vm534 = vcmask 7168
        %v535 = vsel %vm534, %v518, 0.0
        %v536 = vsel %vm534, %v519, 0.0
        %v537 = vadd.f32 %v535, %v536
        %v538 = vsel %vm534, %v520, 0.0
        %v539 = vadd.f32 %v537, %v538
        %v540 = vsel %vm534, %v521, 0.0
        %v541 = vadd.f32 %v539, %v540
        %v542 = vsel %vm534, %v522, 0.0
        %v543 = vadd.f32 %v541, %v542
        %v544 = vsel %vm534, %v523, 0.0
        %v545 = vadd.f32 %v543, %v544
        %v546 = vsel %vm534, %v524, 0.0
        %v547 = vadd.f32 %v545, %v546
        %v548 = vsel %vm534, %v525, 0.0
        %v549 = vadd.f32 %v547, %v548
        %v550 = vsel %vm534, %v526, 0.0
        %v551 = vadd.f32 %v549, %v550
        %v552 = vsel %vm534, %v527, 0.0
        %v553 = vadd.f32 %v551, %v552
        %v554 = vsel %vm534, %v528, 0.0
        %v555 = vadd.f32 %v553, %v554
        %v556 = vsel %vm534, %v529, 0.0
        %v557 = vadd.f32 %v555, %v556
        %v558 = vsel %vm534, %v530, 0.0
        %v559 = vadd.f32 %v557, %v558
        %v560 = vsel %vm534, %v531, 0.0
        %v561 = vadd.f32 %v559, %v560
        %v562 = vsel %vm534, %v532, 0.0
        %v563 = vadd.f32 %v561, %v562
        %v564 = vsel %vm534, %v533, 0.0
        %v565 = vadd.f32 %v563, %v564
        %566 = vadd.xlane.f32.xlu0 %v565
        %v567 = vpop.xlane.xlu0 %566
        %v568 = vrot.slane %v567, 4
        %v569 = vadd.f32 %v567, %v568
        %v570 = vrot.slane %v569, 2
        %v571 = vadd.f32 %v569, %v570
        %v572 = vrot.slane %v571, 1
        %v573 = vadd.f32 %v571, %v572
        %s574 = vtos %v573
        %v575 = vstv %s574
        %v576 = vadd.f32 %v277, %v575
        %vm577 = vcmask 0
        %578 = vst.msk [vmem:[#allocation2] sm:$0x1] %vm577, %v576
        %v579 = vld [vmem:[#allocation3] sm:$0x1]
        %v580 = vmax.f32 %v246, 0.0
        %v581 = vmax.f32 %v248, 0.0
        %v582 = vmax.f32 %v250, 0.0
        %v583 = vmax.f32 %v252, 0.0
        %v584 = vmax.f32 %v254, 0.0
        %v585 = vmax.f32 %v256, 0.0
        %v586 = vmax.f32 %v258, 0.0
        %v587 = vmax.f32 %v260, 0.0
        %v588 = vmax.f32 %v262, 0.0
        %v589 = vmax.f32 %v264, 0.0
        %v590 = vmax.f32 %v266, 0.0
        %v591 = vmax.f32 %v268, 0.0
        %v592 = vmax.f32 %v270, 0.0
        %v593 = vmax.f32 %v272, 0.0
        %v594 = vmax.f32 %v274, 0.0
        %v595 = vmax.f32 %v276, 0.0
        %v596 = vand.u32 2147483647, %v246
        %v597 = vand.u32 2147483647, %v248
        %v598 = vand.u32 2147483647, %v250
        %v599 = vand.u32 2147483647, %v252
        %v600 = vand.u32 2147483647, %v254
        %v601 = vand.u32 2147483647, %v256
        %v602 = vand.u32 2147483647, %v258
        %v603 = vand.u32 2147483647, %v260
        %v604 = vand.u32 2147483647, %v262
        %v605 = vand.u32 2147483647, %v264
        %v606 = vand.u32 2147483647, %v266
        %v607 = vand.u32 2147483647, %v268
        %v608 = vand.u32 2147483647, %v270
        %v609 = vand.u32 2147483647, %v272
        %v610 = vand.u32 2147483647, %v274
        %v611 = vand.u32 2147483647, %v276
        %v612 = vsub.f32 0.0, %v596
        %v613 = vsub.f32 0.0, %v597
        %v614 = vsub.f32 0.0, %v598
        %v615 = vsub.f32 0.0, %v599
        %v616 = vsub.f32 0.0, %v600
        %v617 = vsub.f32 0.0, %v601
        %v618 = vsub.f32 0.0, %v602
        %v619 = vsub.f32 0.0, %v603
        %v620 = vsub.f32 0.0, %v604
        %v621 = vsub.f32 0.0, %v605
        %v622 = vsub.f32 0.0, %v606
        %v623 = vsub.f32 0.0, %v607
        %v624 = vsub.f32 0.0, %v608
        %v625 = vsub.f32 0.0, %v609
        %v626 = vsub.f32 0.0, %v610
        %v627 = vsub.f32 0.0, %v611
        %v628 = vmul.f32 %v612, 1.442695
        %v629 = vpow.pop %v628
        %v630 = vmul.f32 %v613, 1.442695
        %v631 = vpow.pop %v630
        %v632 = vmul.f32 %v614, 1.442695
        %v633 = vpow.pop %v632
        %v634 = vmul.f32 %v615, 1.442695
        %v635 = vpow.pop %v634
        %v636 = vmul.f32 %v616, 1.442695
        %v637 = vpow.pop %v636
        %v638 = vmul.f32 %v617, 1.442695
        %v639 = vpow.pop %v638
        %v640 = vmul.f32 %v618, 1.442695
        %v641 = vpow.pop %v640
        %v642 = vmul.f32 %v619, 1.442695
        %v643 = vpow.pop %v642
        %v644 = vmul.f32 %v620, 1.442695
        %v645 = vpow.pop %v644
        %v646 = vmul.f32 %v621, 1.442695
        %v647 = vpow.pop %v646
        %v648 = vmul.f32 %v622, 1.442695
        %v649 = vpow.pop %v648
        %v650 = vmul.f32 %v623, 1.442695
        %v651 = vpow.pop %v650
        %v652 = vmul.f32 %v624, 1.442695
        %v653 = vpow.pop %v652
        %v654 = vmul.f32 %v625, 1.442695
        %v655 = vpow.pop %v654
        %v656 = vmul.f32 %v626, 1.442695
        %v657 = vpow.pop %v656
        %v658 = vmul.f32 %v627, 1.442695
        %v659 = vpow.pop %v658
        %v660 = vadd.f32 %v629, 1.0
        %v661 = vlog2.pop %v660
        %v662 = vmul.f32 %v661, 0.6931472
        %v663 = vmul.f32 -0.5, %v629
        %v664 = vadd.f32 %v663, 1.0
        %v665 = vmul.f32 %v664, %v629
        %v666 = vand.u32 2147483647, %v629
        %vm667 = vcmp.lt.f32.partialorder %v666, 0.0004427343
        %v668 = vsel %vm667, %v665, %v662
        %v669 = vadd.f32 %v631, 1.0
        %v670 = vlog2.pop %v669
        %v671 = vmul.f32 %v670, 0.6931472
        %v672 = vmul.f32 -0.5, %v631
        %v673 = vadd.f32 %v672, 1.0
        %v674 = vmul.f32 %v673, %v631
        %v675 = vand.u32 2147483647, %v631
        %vm676 = vcmp.lt.f32.partialorder %v675, 0.0004427343
        %v677 = vsel %vm676, %v674, %v671
        %v678 = vadd.f32 %v633, 1.0
        %v679 = vlog2.pop %v678
        %v680 = vmul.f32 %v679, 0.6931472
        %v681 = vmul.f32 -0.5, %v633
        %v682 = vadd.f32 %v681, 1.0
        %v683 = vmul.f32 %v682, %v633
        %v684 = vand.u32 2147483647, %v633
        %vm685 = vcmp.lt.f32.partialorder %v684, 0.0004427343
        %v686 = vsel %vm685, %v683, %v680
        %v687 = vadd.f32 %v635, 1.0
        %v688 = vlog2.pop %v687
        %v689 = vmul.f32 %v688, 0.6931472
        %v690 = vmul.f32 -0.5, %v635
        %v691 = vadd.f32 %v690, 1.0
        %v692 = vmul.f32 %v691, %v635
        %v693 = vand.u32 2147483647, %v635
        %vm694 = vcmp.lt.f32.partialorder %v693, 0.0004427343
        %v695 = vsel %vm694, %v692, %v689
        %v696 = vadd.f32 %v637, 1.0
        %v697 = vlog2.pop %v696
        %v698 = vmul.f32 %v697, 0.6931472
        %v699 = vmul.f32 -0.5, %v637
        %v700 = vadd.f32 %v699, 1.0
        %v701 = vmul.f32 %v700, %v637
        %v702 = vand.u32 2147483647, %v637
        %vm703 = vcmp.lt.f32.partialorder %v702, 0.0004427343
        %v704 = vsel %vm703, %v701, %v698
        %v705 = vadd.f32 %v639, 1.0
        %v706 = vlog2.pop %v705
        %v707 = vmul.f32 %v706, 0.6931472
        %v708 = vmul.f32 -0.5, %v639
        %v709 = vadd.f32 %v708, 1.0
        %v710 = vmul.f32 %v709, %v639
        %v711 = vand.u32 2147483647, %v639
        %vm712 = vcmp.lt.f32.partialorder %v711, 0.0004427343
        %v713 = vsel %vm712, %v710, %v707
        %v714 = vadd.f32 %v641, 1.0
        %v715 = vlog2.pop %v714
        %v716 = vmul.f32 %v715, 0.6931472
        %v717 = vmul.f32 -0.5, %v641
        %v718 = vadd.f32 %v717, 1.0
        %v719 = vmul.f32 %v718, %v641
        %v720 = vand.u32 2147483647, %v641
        %vm721 = vcmp.lt.f32.partialorder %v720, 0.0004427343
        %v722 = vsel %vm721, %v719, %v716
        %v723 = vadd.f32 %v643, 1.0
        %v724 = vlog2.pop %v723
        %v725 = vmul.f32 %v724, 0.6931472
        %v726 = vmul.f32 -0.5, %v643
        %v727 = vadd.f32 %v726, 1.0
        %v728 = vmul.f32 %v727, %v643
        %v729 = vand.u32 2147483647, %v643
        %vm730 = vcmp.lt.f32.partialorder %v729, 0.0004427343
        %v731 = vsel %vm730, %v728, %v725
        %v732 = vadd.f32 %v645, 1.0
        %v733 = vlog2.pop %v732
        %v734 = vmul.f32 %v733, 0.6931472
        %v735 = vmul.f32 -0.5, %v645
        %v736 = vadd.f32 %v735, 1.0
        %v737 = vmul.f32 %v736, %v645
        %v738 = vand.u32 2147483647, %v645
        %vm739 = vcmp.lt.f32.partialorder %v738, 0.0004427343
        %v740 = vsel %vm739, %v737, %v734
        %v741 = vadd.f32 %v647, 1.0
        %v742 = vlog2.pop %v741
        %v743 = vmul.f32 %v742, 0.6931472
        %v744 = vmul.f32 -0.5, %v647
        %v745 = vadd.f32 %v744, 1.0
        %v746 = vmul.f32 %v745, %v647
        %v747 = vand.u32 2147483647, %v647
        %vm748 = vcmp.lt.f32.partialorder %v747, 0.0004427343
        %v749 = vsel %vm748, %v746, %v743
        %v750 = vadd.f32 %v649, 1.0
        %v751 = vlog2.pop %v750
        %v752 = vmul.f32 %v751, 0.6931472
        %v753 = vmul.f32 -0.5, %v649
        %v754 = vadd.f32 %v753, 1.0
        %v755 = vmul.f32 %v754, %v649
        %v756 = vand.u32 2147483647, %v649
        %vm757 = vcmp.lt.f32.partialorder %v756, 0.0004427343
        %v758 = vsel %vm757, %v755, %v752
        %v759 = vadd.f32 %v651, 1.0
        %v760 = vlog2.pop %v759
        %v761 = vmul.f32 %v760, 0.6931472
        %v762 = vmul.f32 -0.5, %v651
        %v763 = vadd.f32 %v762, 1.0
        %v764 = vmul.f32 %v763, %v651
        %v765 = vand.u32 2147483647, %v651
        %vm766 = vcmp.lt.f32.partialorder %v765, 0.0004427343
        %v767 = vsel %vm766, %v764, %v761
        %v768 = vadd.f32 %v653, 1.0
        %v769 = vlog2.pop %v768
        %v770 = vmul.f32 %v769, 0.6931472
        %v771 = vmul.f32 -0.5, %v653
        %v772 = vadd.f32 %v771, 1.0
        %v773 = vmul.f32 %v772, %v653
        %v774 = vand.u32 2147483647, %v653
        %vm775 = vcmp.lt.f32.partialorder %v774, 0.0004427343
        %v776 = vsel %vm775, %v773, %v770
        %v777 = vadd.f32 %v655, 1.0
        %v778 = vlog2.pop %v777
        %v779 = vmul.f32 %v778, 0.6931472
        %v780 = vmul.f32 -0.5, %v655
        %v781 = vadd.f32 %v780, 1.0
        %v782 = vmul.f32 %v781, %v655
        %v783 = vand.u32 2147483647, %v655
        %vm784 = vcmp.lt.f32.partialorder %v783, 0.0004427343
        %v785 = vsel %vm784, %v782, %v779
        %v786 = vadd.f32 %v657, 1.0
        %v787 = vlog2.pop %v786
        %v788 = vmul.f32 %v787, 0.6931472
        %v789 = vmul.f32 -0.5, %v657
        %v790 = vadd.f32 %v789, 1.0
        %v791 = vmul.f32 %v790, %v657
        %v792 = vand.u32 2147483647, %v657
        %vm793 = vcmp.lt.f32.partialorder %v792, 0.0004427343
        %v794 = vsel %vm793, %v791, %v788
        %v795 = vadd.f32 %v659, 1.0
        %v796 = vlog2.pop %v795
        %v797 = vmul.f32 %v796, 0.6931472
        %v798 = vmul.f32 -0.5, %v659
        %v799 = vadd.f32 %v798, 1.0
        %v800 = vmul.f32 %v799, %v659
        %v801 = vand.u32 2147483647, %v659
        %vm802 = vcmp.lt.f32.partialorder %v801, 0.0004427343
        %v803 = vsel %vm802, %v800, %v797
        %v804 = vadd.f32 %v580, %v668
        %v805 = vadd.f32 %v581, %v677
        %v806 = vadd.f32 %v582, %v686
        %v807 = vadd.f32 %v583, %v695
        %v808 = vadd.f32 %v584, %v704
        %v809 = vadd.f32 %v585, %v713
        %v810 = vadd.f32 %v586, %v722
        %v811 = vadd.f32 %v587, %v731
        %v812 = vadd.f32 %v588, %v740
        %v813 = vadd.f32 %v589, %v749
        %v814 = vadd.f32 %v590, %v758
        %v815 = vadd.f32 %v591, %v767
        %v816 = vadd.f32 %v592, %v776
        %v817 = vadd.f32 %v593, %v785
        %v818 = vadd.f32 %v594, %v794
        %v819 = vadd.f32 %v595, %v803
        %v820 = vsel %vm534, %v804, 0.0
        %v821 = vsel %vm534, %v805, 0.0
        %v822 = vadd.f32 %v820, %v821
        %v823 = vsel %vm534, %v806, 0.0
        %v824 = vadd.f32 %v822, %v823
        %v825 = vsel %vm534, %v807, 0.0
        %v826 = vadd.f32 %v824, %v825
        %v827 = vsel %vm534, %v808, 0.0
        %v828 = vadd.f32 %v826, %v827
        %v829 = vsel %vm534, %v809, 0.0
        %v830 = vadd.f32 %v828, %v829
        %v831 = vsel %vm534, %v810, 0.0
        %v832 = vadd.f32 %v830, %v831
        %v833 = vsel %vm534, %v811, 0.0
        %v834 = vadd.f32 %v832, %v833
        %v835 = vsel %vm534, %v812, 0.0
        %v836 = vadd.f32 %v834, %v835
        %v837 = vsel %vm534, %v813, 0.0
        %v838 = vadd.f32 %v836, %v837
        %v839 = vsel %vm534, %v814, 0.0
        %v840 = vadd.f32 %v838, %v839
        %v841 = vsel %vm534, %v815, 0.0
        %v842 = vadd.f32 %v840, %v841
        %v843 = vsel %vm534, %v816, 0.0
        %v844 = vadd.f32 %v842, %v843
        %v845 = vsel %vm534, %v817, 0.0
        %v846 = vadd.f32 %v844, %v845
        %v847 = vsel %vm534, %v818, 0.0
        %v848 = vadd.f32 %v846, %v847
        %v849 = vsel %vm534, %v819, 0.0
        %v850 = vadd.f32 %v848, %v849
        %851 = vadd.xlane.f32.xlu0 %v850
        %v852 = vpop.xlane.xlu0 %851
        %v853 = vrot.slane %v852, 4
        %v854 = vadd.f32 %v852, %v853
        %v855 = vrot.slane %v854, 2
        %v856 = vadd.f32 %v854, %v855
        %v857 = vrot.slane %v856, 1
        %v858 = vadd.f32 %v856, %v857
        %s859 = vtos %v858
        %v860 = vstv %s859
        %v861 = vadd.f32 %v579, %v860
        %862 = vst.msk [vmem:[#allocation3] sm:$0x1] %vm577, %v861
        %p863 = scmp.eq.s32.totalorder %s14, 1
        // Predicated region
        $region33: #{dgi1_forward.11} parent=27 // pred_check
          %p864 = pneg %p863
        $region34: #{dgi1_forward.11} parent=27 // pred_check_branch
          %866 = sbr.rel (%p864) target = $region36
        $region35: #{dgi1_forward.11} parent=27 // pred_region
          %v867 = vld [vmem:[#allocation2] sm:$0x1]
          %v868 = vld [vmem:[#allocation3] sm:$0x1]
          %v869 = vadd.f32 %v867, %v868
          %v870 = vmul.f32 %v869, 0.00390625
          %871 = vst.msk [vmem:[#allocation4] sm:$0x1] %vm577, %v870
        $region36: #{dgi1_forward.11} parent=27 // pred_fallthru
          _
        // Predicated region
        $region37: #{dgi1_forward.11} parent=27 // pred_check
          %p872 = pneg %p74
        $region38: #{dgi1_forward.11} parent=27 // pred_check_branch
          %874 = sbr.rel (%p872) target = $region40
        $region39: #{dgi1_forward.11} parent=27 // pred_region
          %s876 = ssub.s32 16, 16
          %877 = vsyncadd [#allocation5], %s876
          %s879 = sshll.u32 [#allocation4], 4
          %s880 = int_to_ptr.vmem [resolvable:$true] %s879
          %882 = dma.vmem_to_hbm [thread:$0]  %s880, 16, %s2, [#allocation5]
        $region40: #{dgi1_forward.11} parent=27 // pred_fallthru
          _
        // Predicated region
        $region41: #{dgi1_forward.11} parent=27 // pred_check
          %p883 = pneg %p74
        $region42: #{dgi1_forward.11} parent=27 // pred_check_branch
          %885 = sbr.rel (%p883) target = $region44
        $region43: #{dgi1_forward.11} parent=27 // pred_region
          %886 = dma.done [#allocation5], 16
        $region44: #{dgi1_forward.11} parent=27 // pred_fallthru
          _
      $region28: #{dgi1_forward.11} parent=5 // pred_fallthru
        _
      %p887 = scmp.le.s32.totalorder 2, %s9
      // Predicated region
      $region45: #{dgi1_forward.11} parent=5 // pred_check
        %p888 = pneg %p887
      $region46: #{dgi1_forward.11} parent=5 // pred_check_branch
        %890 = sbr.rel (%p888) target = $region48
      $region47: #{dgi1_forward.11} parent=5 // pred_region
        %s891 = ssub.s32 %s9, 2
      $region48: #{dgi1_forward.11} parent=5 // pred_fallthru
        _
    $region6: #{dgi1_forward.11} parent=1 // loop_footer
      %s13 = sadd.s32 1, %s9
    $region7: #{dgi1_forward.11} parent=1 // loop_footer_branch
      %8 = sbr.rel target = $region3
    $region8: #{dgi1_forward.11} parent=1 // loop_exit
      _
    %892 = vsyncpa [#allocation5], 1
    %s893 = scalar_lea.sflag [#allocation5], 1
    %894 = vsyncpa %s893, 1

</llo_original>
